<compile_context>
chip_gen: v7x
topology: tpu7x:2x2x1
jax: 0.10.0
libtpu: 0.0.40
codegen_flags: <defaults>
</compile_context>

<pallas_src>
import functools

import jax
import jax.numpy as jnp
from jax.experimental import pallas as pl
from jax.experimental.pallas import tpu as pltpu

BN_EPS = 1e-5


def _round_up(v, m):
    return (v + m - 1) // m * m


# ---------------------------------------------------------------------------
# Fused CSP residual block kernel (one batch element per grid step)
# ---------------------------------------------------------------------------
def _csp_block_kernel(x_ref, mask_ref, wts_ref, bts_ref, w3_ref, b3_ref,
                      wpw_ref, bpw_ref, wms_ref, wmt_ref, bm_ref,
                      o_ref, pad_ref, *, Ho, Wo, mid):
    P = Wo + 2                      # padded width of one image row
    M = Ho * P                      # rows processed per step (2 junk cols per row)
    LEN = pad_ref.shape[0]
    bf16 = jnp.bfloat16

    xm = x_ref[...].reshape(M, x_ref.shape[-1])                   # (M, Cin) bf16

    # Fused transition|split 1x1 convs: ONE MXU dot, then a column split.
    ts = jnp.dot(xm, wts_ref[...],
                 preferred_element_type=jnp.float32) + bts_ref[...]
    split = ts[:, :mid]                                           # f32
    trans = ts[:, mid:].astype(bf16)                              # bf16 immediately
                                                                  # (only the merge dot uses it)

    # Flat padded scratch: scratch[s] = zero-padded split pixel (s - 1).
    # The interior rows [P+1, P+1+M) are fully rewritten every step by one
    # contiguous store.  The border rows are re-zeroed EVERY step (cheap,
    # ~2 image rows) so correctness does not depend on program_id(0)==0 ever
    # running on a given core (megacore / parallel grid safety).
    pad_ref[pl.ds(0, P + 1), :] = jnp.zeros((P + 1, mid), bf16)
    tail = LEN - (P + 1 + M)
    pad_ref[pl.ds(P + 1 + M, tail), :] = jnp.zeros((tail, mid), bf16)
    pad_ref[pl.ds(P + 1, M), :] = (split * mask_ref[...]).astype(bf16)

    # 3x3 conv (BN folded into the weights).  Tap (kh, kw) is one CONTIGUOUS
    # window of the flat scratch at static offset kh*P + kw.
    offs = [kh * P + kw for kh in range(3) for kw in range(3)]
    if mid <= 128:
        # im2col neighborhood from 9 adjacent windows -> one deep dot (K = 9*mid).
        neigh = jnp.concatenate([pad_ref[pl.ds(o, M), :] for o in offs], axis=-1)
        acc = jnp.dot(neigh, w3_ref[...], preferred_element_type=jnp.float32)
    else:
        # Large mid already fills the MXU K depth: keep 9 accumulated dots.
        acc = jnp.zeros((M, mid), jnp.float32)
        for t, o in enumerate(offs):
            acc = acc + jnp.dot(pad_ref[pl.ds(o, M), :],
                                w3_ref[t * mid:(t + 1) * mid, :],
                                preferred_element_type=jnp.float32)
    y = acc + b3_ref[...]
    y = jnp.maximum(y, 0.1 * y)                                   # LeakyReLU(0.1)

    # Pointwise 1x1 conv (bias, no activation).
    y = jnp.dot(y.astype(bf16), wpw_ref[...],
                preferred_element_type=jnp.float32) + bpw_ref[...]

    # merge_conv over the *virtual* concat([split_path, transition], channels):
    # two partial dots against the two halves of the merge weight.
    out = (jnp.dot(y.astype(bf16), wms_ref[...],
                   preferred_element_type=jnp.float32)
           + jnp.dot(trans, wmt_ref[...],
                     preferred_element_type=jnp.float32)
           + bm_ref[...])
    o_ref[...] = out.reshape(1, M, out.shape[-1]).astype(o_ref.dtype)


# ---------------------------------------------------------------------------
# Wrapper: weight pre-packing (bf16, BN fold, fused 1x1 weights) + pallas_call
# ---------------------------------------------------------------------------
def csp_residual_block(x_nchw, params, *, stride=1):
    """Forward pass of CSPResidualBlock.  x_nchw: (N, Cin, H, W) float32."""
    x = jnp.transpose(x_nchw, (0, 2, 3, 1))                       # NHWC
    if stride != 1:
        # 1x1 conv with stride == strided subsample of the input.
        x = x[:, ::stride, ::stride, :]
    N, Ho, Wo, cin = x.shape
    P = Wo + 2
    M = Ho * P

    mid = params["split"]["w"].shape[0]
    cout = params["merge"]["w"].shape[0]
    f32, bf16 = jnp.float32, jnp.bfloat16

    # Zero-pad the width by 1 pixel per side so the in-kernel padded-split store
    # is a single contiguous slab.  The two pad columns per row become junk rows
    # that are dropped after the kernel.
    x = jnp.pad(x, ((0, 0), (0, 0), (1, 1), (0, 0)))
    x = x.reshape(N, M, cin).astype(bf16)

    col = jnp.arange(M, dtype=jnp.int32) % P
    mask = ((col >= 1) & (col <= Wo)).astype(f32).reshape(M, 1)   # 1.0 on real pixels

    def mat1x1(w):                                                # (Co,Ci,1,1)->(Ci,Co)
        co, ci = w.shape[:2]
        return w.reshape(co, ci).T

    # transition + split 1x1 convs fused into one (Cin, 2*mid) weight (split first).
    wts = jnp.concatenate([mat1x1(params["split"]["w"]),
                           mat1x1(params["transition"]["w"])], axis=1)
    bts = jnp.concatenate([params["split"]["b"],
                           params["transition"]["b"]]).reshape(1, 2 * mid)

    # Fold BatchNorm (inference-mode running stats) into the 3x3 conv weights.
    # TODO(synk): training-mode batch statistics are not reproduced.
    bn = params["res_cb"]["bn"]
    scale = bn["gamma"] * jax.lax.rsqrt(bn["var"] + BN_EPS)
    w3 = params["res_cb"]["w"] * scale[:, None, None, None]
    b3 = bn["beta"] - bn["mean"] * scale
    w3 = jnp.transpose(w3, (2, 3, 1, 0)).reshape(9 * mid, mid)    # rows = (kh, kw, ci)

    wm = params["merge"]["w"].reshape(cout, 2 * mid)

    LEN = _round_up((Ho + 2) * P + 2, 8)                          # flat scratch rows

    args = [
        x,                                                        # activations bf16
        mask,
        wts.astype(bf16),
        bts.astype(f32),
        w3.astype(bf16),
        b3.reshape(1, mid).astype(f32),
        mat1x1(params["res_pw"]["w"]).astype(bf16),
        params["res_pw"]["b"].reshape(1, mid).astype(f32),
        wm[:, :mid].T.astype(bf16),                               # merge: split half
        wm[:, mid:].T.astype(bf16),                               # merge: transition half
        params["merge"]["b"].reshape(1, cout).astype(f32),
    ]

    in_specs = [
        pl.BlockSpec((1, M, cin), lambda n: (n, 0, 0)),
        pl.BlockSpec((M, 1), lambda n: (0, 0)),
        pl.BlockSpec((cin, 2 * mid), lambda n: (0, 0)),
        pl.BlockSpec((1, 2 * mid), lambda n: (0, 0)),
        pl.BlockSpec((9 * mid, mid), lambda n: (0, 0)),
        pl.BlockSpec((1, mid), lambda n: (0, 0)),
        pl.BlockSpec((mid, mid), lambda n: (0, 0)),
        pl.BlockSpec((1, mid), lambda n: (0, 0)),
        pl.BlockSpec((mid, cout), lambda n: (0, 0)),
        pl.BlockSpec((mid, cout), lambda n: (0, 0)),
        pl.BlockSpec((1, cout), lambda n: (0, 0)),
    ]

    out_pw = pl.pallas_call(
        functools.partial(_csp_block_kernel, Ho=Ho, Wo=Wo, mid=mid),
        out_shape=jax.ShapeDtypeStruct((N, M, cout), bf16),       # bf16 writeback
        grid=(N,),                                                # batch-parallel
        in_specs=in_specs,
        out_specs=pl.BlockSpec((1, M, cout), lambda n: (n, 0, 0)),
        scratch_shapes=[pltpu.VMEM((LEN, mid), bf16)],
        compiler_params=pltpu.CompilerParams(
            dimension_semantics=("parallel",),
            vmem_limit_bytes=64 * 1024 * 1024),
    )(*args)
    # TODO(synk): at real CSPDarknet resolutions on v7x (64 MiB VMEM), add a second
    # "parallel" grid axis over row tiles with a 1-row halo (and pack several batch
    # elements per step when H*W is small) instead of one whole image per step.

    out = out_pw.reshape(N, Ho, P, cout)[:, :, 1:Wo + 1, :]       # drop width-pad cols
    return jnp.transpose(out, (0, 3, 1, 2)).astype(jnp.float32)   # back to NCHW f32


# ---------------------------------------------------------------------------
# Pure-JAX reference (f32, lax.conv) for a tolerance check
# ---------------------------------------------------------------------------
def _reference(x, params, *, stride=1):
    def conv(h, w, b=None, stride=1, padding=0):
        out = jax.lax.conv_general_dilated(
            h, w, window_strides=(stride, stride),
            padding=[(padding, padding), (padding, padding)],
            dimension_numbers=("NCHW", "OIHW", "NCHW"))
        if b is not None:
            out = out + b.reshape(1, -1, 1, 1)
        return out

    t = conv(x, params["transition"]["w"], params["transition"]["b"], stride=stride)
    s = conv(x, params["split"]["w"], params["split"]["b"], stride=stride)
    bn = params["res_cb"]["bn"]
    scale = bn["gamma"] * jax.lax.rsqrt(bn["var"] + BN_EPS)
    h = conv(s, params["res_cb"]["w"], None, stride=1, padding=1)
    h = h * scale.reshape(1, -1, 1, 1) \
        + (bn["beta"] - bn["mean"] * scale).reshape(1, -1, 1, 1)
    h = jnp.where(h >= 0, h, 0.1 * h)
    h = conv(h, params["res_pw"]["w"], params["res_pw"]["b"])
    m = jnp.concatenate([h, t], axis=1)
    return conv(m, params["merge"]["w"], params["merge"]["b"])


# ---------------------------------------------------------------------------
# Deterministic synthetic parameters (shapes mirror the PyTorch module)
# ---------------------------------------------------------------------------
def build_params(key, cin, cout):
    mid = cout // 2
    ks = list(jax.random.split(key, 10))

    def conv_w(k, co, ci, ksz):
        fan_in = ci * ksz * ksz
        return jax.random.normal(k, (co, ci, ksz, ksz), jnp.float32) * fan_in ** -0.5

    def conv_b(k, co):
        return 0.1 * jax.random.normal(k, (co,), jnp.float32)

    kbn = jax.random.split(ks[9], 4)
    return {
        "split": {"w": conv_w(ks[0], mid, cin, 1), "b": conv_b(ks[1], mid)},
        "transition": {"w": conv_w(ks[2], mid, cin, 1), "b": conv_b(ks[3], mid)},
        "res_cb": {
            "w": conv_w(ks[4], mid, mid, 3),
            "bn": {
                "gamma": 1.0 + 0.1 * jax.random.normal(kbn[0], (mid,), jnp.float32),
                "beta": 0.1 * jax.random.normal(kbn[1], (mid,), jnp.float32),
                "mean": 0.1 * jax.random.normal(kbn[2], (mid,), jnp.float32),
                "var": 1.0 + 0.1 * jax.random.uniform(kbn[3], (mid,), jnp.float32),
            },
        },
        "res_pw": {"w": conv_w(ks[5], mid, mid, 1), "b": conv_b(ks[6], mid)},
        "merge": {"w": conv_w(ks[7], cout, 2 * mid, 1), "b": conv_b(ks[8], cout)},
    }


# ---------------------------------------------------------------------------
if __name__ == "__main__":
    IN_C, OUT_C, STRIDE = 4, 32, 1          # small shapes; mid_channels = 16

    key = jax.random.PRNGKey(0)
    k_params, k_input = jax.random.split(key)
    params = build_params(k_params, IN_C, OUT_C)
    x = jax.random.normal(k_input, (2, IN_C, 16, 16), jnp.float32)   # NCHW

    fwd = jax.jit(functools.partial(csp_residual_block, stride=STRIDE))
    out = jax.block_until_ready(fwd(x, params))

    assert out.shape == (2, OUT_C, 16, 16), out.shape
    assert bool(jnp.all(jnp.isfinite(out)))

    # Tolerance check vs. an f32 pure-JAX reference (bf16 MXU operands and bf16
    # kernel output => small, bounded numerical difference).
    ref = _reference(x, params, stride=STRIDE)
    err = float(jnp.max(jnp.abs(out - ref)) / (jnp.max(jnp.abs(ref)) + 1e-6))
    assert err < 5e-2, err

    print("KERNEL_OK")
</pallas_src>

<mosaic_0001>
module attributes {stable_mosaic.version = 11 : i64} {
  func.func @_csp_block_kernel(%arg0: i32, %arg1: memref<1x288x4xbf16, #tpu.memory_space<vmem>>, %arg2: memref<288x1xf32, #tpu.memory_space<vmem>>, %arg3: memref<4x32xbf16, #tpu.memory_space<vmem>>, %arg4: memref<1x32xf32, #tpu.memory_space<vmem>>, %arg5: memref<144x16xbf16, #tpu.memory_space<vmem>>, %arg6: memref<1x16xf32, #tpu.memory_space<vmem>>, %arg7: memref<16x16xbf16, #tpu.memory_space<vmem>>, %arg8: memref<1x16xf32, #tpu.memory_space<vmem>>, %arg9: memref<16x32xbf16, #tpu.memory_space<vmem>>, %arg10: memref<16x32xbf16, #tpu.memory_space<vmem>>, %arg11: memref<1x32xf32, #tpu.memory_space<vmem>>, %arg12: memref<1x288x32xbf16, #tpu.memory_space<vmem>>, %arg13: memref<328x16xbf16, #tpu.memory_space<vmem>>) attributes {dimension_semantics = [#tpu.dimension_semantics<parallel>], iteration_bounds = array<i64: 2>, scalar_prefetch = 0 : i64, scratch_operands = 1 : i64, tpu.core_type = #tpu.core_type<tc>, window_params = [{transform_indices = @transform_0, window_bounds = array<i64: 1, 288, 4>}, {pipeline_mode = #tpu.pipeline_mode<synchronous>, transform_indices = @transform_1, window_bounds = array<i64: 288, 1>}, {pipeline_mode = #tpu.pipeline_mode<synchronous>, transform_indices = @transform_2, window_bounds = array<i64: 4, 32>}, {pipeline_mode = #tpu.pipeline_mode<synchronous>, transform_indices = @transform_3, window_bounds = array<i64: 1, 32>}, {pipeline_mode = #tpu.pipeline_mode<synchronous>, transform_indices = @transform_4, window_bounds = array<i64: 144, 16>}, {pipeline_mode = #tpu.pipeline_mode<synchronous>, transform_indices = @transform_5, window_bounds = array<i64: 1, 16>}, {pipeline_mode = #tpu.pipeline_mode<synchronous>, transform_indices = @transform_6, window_bounds = array<i64: 16, 16>}, {pipeline_mode = #tpu.pipeline_mode<synchronous>, transform_indices = @transform_7, window_bounds = array<i64: 1, 16>}, {pipeline_mode = #tpu.pipeline_mode<synchronous>, transform_indices = @transform_8, window_bounds = array<i64: 16, 32>}, {pipeline_mode = #tpu.pipeline_mode<synchronous>, transform_indices = @transform_9, window_bounds = array<i64: 16, 32>}, {pipeline_mode = #tpu.pipeline_mode<synchronous>, transform_indices = @transform_10, window_bounds = array<i64: 1, 32>}, {transform_indices = @transform_11, window_bounds = array<i64: 1, 288, 32>}]} {
    %c0 = arith.constant 0 : index
    %c0_0 = arith.constant 0 : index
    %c0_1 = arith.constant 0 : index
    %0 = vector.load %arg1[%c0, %c0_0, %c0_1] : memref<1x288x4xbf16, #tpu.memory_space<vmem>>, vector<1x288x4xbf16>
    %1 = vector.shape_cast %0 : vector<1x288x4xbf16> to vector<288x4xbf16>
    %c0_2 = arith.constant 0 : index
    %c0_3 = arith.constant 0 : index
    %2 = vector.load %arg3[%c0_2, %c0_3] : memref<4x32xbf16, #tpu.memory_space<vmem>>, vector<4x32xbf16>
    %cst = arith.constant dense<0.000000e+00> : vector<288x32xf32>
    %3 = tpu.matmul %1, %2, %cst {dimension_numbers = #tpu.dot_dimension_numbers<[1], [0], [0], [1], [0, 0, 1, 1], [], []>} : vector<288x4xbf16>, vector<4x32xbf16>, vector<288x32xf32> -> vector<288x32xf32>
    %c0_4 = arith.constant 0 : index
    %c0_5 = arith.constant 0 : index
    %4 = vector.load %arg4[%c0_4, %c0_5] : memref<1x32xf32, #tpu.memory_space<vmem>>, vector<1x32xf32>
    %5 = vector.broadcast %4 : vector<1x32xf32> to vector<288x32xf32>
    %6 = arith.addf %3, %5 : vector<288x32xf32>
    %7 = vector.extract_strided_slice %6 {offsets = [0, 0], sizes = [288, 16], strides = [1, 1]} : vector<288x32xf32> to vector<288x16xf32>
    %8 = vector.extract_strided_slice %6 {offsets = [0, 16], sizes = [288, 16], strides = [1, 1]} : vector<288x32xf32> to vector<288x16xf32>
    %9 = arith.truncf %8 : vector<288x16xf32> to vector<288x16xbf16>
    %cst_6 = arith.constant 0.000000e+00 : bf16
    %10 = vector.broadcast %cst_6 : bf16 to vector<19x16xbf16>
    %c0_7 = arith.constant 0 : index
    %c0_8 = arith.constant 0 : index
    %11 = vector.load %arg13[%c0_7, %c0_8] : memref<328x16xbf16, #tpu.memory_space<vmem>>, vector<19x16xbf16>
    tpu.vector_store %arg13[%c0_7, %c0_8], %10 {strides = array<i32>} : memref<328x16xbf16, #tpu.memory_space<vmem>>, vector<19x16xbf16>,
    %cst_9 = arith.constant 0.000000e+00 : bf16
    %12 = vector.broadcast %cst_9 : bf16 to vector<21x16xbf16>
    %c307 = arith.constant 307 : index
    %c0_10 = arith.constant 0 : index
    %13 = vector.load %arg13[%c307, %c0_10] : memref<328x16xbf16, #tpu.memory_space<vmem>>, vector<21x16xbf16>
    tpu.vector_store %arg13[%c307, %c0_10], %12 {strides = array<i32>} : memref<328x16xbf16, #tpu.memory_space<vmem>>, vector<21x16xbf16>,
    %c0_11 = arith.constant 0 : index
    %c0_12 = arith.constant 0 : index
    %14 = vector.load %arg2[%c0_11, %c0_12] : memref<288x1xf32, #tpu.memory_space<vmem>>, vector<288x1xf32>
    %15 = vector.broadcast %14 : vector<288x1xf32> to vector<288x16xf32>
    %16 = arith.mulf %7, %15 : vector<288x16xf32>
    %17 = arith.truncf %16 : vector<288x16xf32> to vector<288x16xbf16>
    %c19 = arith.constant 19 : index
    %c0_13 = arith.constant 0 : index
    %18 = vector.load %arg13[%c19, %c0_13] : memref<328x16xbf16, #tpu.memory_space<vmem>>, vector<288x16xbf16>
    tpu.vector_store %arg13[%c19, %c0_13], %17 {strides = array<i32>} : memref<328x16xbf16, #tpu.memory_space<vmem>>, vector<288x16xbf16>,
    %c0_14 = arith.constant 0 : index
    %c0_15 = arith.constant 0 : index
    %19 = vector.load %arg13[%c0_14, %c0_15] : memref<328x16xbf16, #tpu.memory_space<vmem>>, vector<288x16xbf16>
    %c1 = arith.constant 1 : index
    %c0_16 = arith.constant 0 : index
    %20 = vector.load %arg13[%c1, %c0_16] : memref<328x16xbf16, #tpu.memory_space<vmem>>, vector<288x16xbf16>
    %c2 = arith.constant 2 : index
    %c0_17 = arith.constant 0 : index
    %21 = vector.load %arg13[%c2, %c0_17] : memref<328x16xbf16, #tpu.memory_space<vmem>>, vector<288x16xbf16>
    %c18 = arith.constant 18 : index
    %c0_18 = arith.constant 0 : index
    %22 = vector.load %arg13[%c18, %c0_18] : memref<328x16xbf16, #tpu.memory_space<vmem>>, vector<288x16xbf16>
    %c19_19 = arith.constant 19 : index
    %c0_20 = arith.constant 0 : index
    %23 = vector.load %arg13[%c19_19, %c0_20] : memref<328x16xbf16, #tpu.memory_space<vmem>>, vector<288x16xbf16>
    %c20 = arith.constant 20 : index
    %c0_21 = arith.constant 0 : index
    %24 = vector.load %arg13[%c20, %c0_21] : memref<328x16xbf16, #tpu.memory_space<vmem>>, vector<288x16xbf16>
    %c36 = arith.constant 36 : index
    %c0_22 = arith.constant 0 : index
    %25 = vector.load %arg13[%c36, %c0_22] : memref<328x16xbf16, #tpu.memory_space<vmem>>, vector<288x16xbf16>
    %c37 = arith.constant 37 : index
    %c0_23 = arith.constant 0 : index
    %26 = vector.load %arg13[%c37, %c0_23] : memref<328x16xbf16, #tpu.memory_space<vmem>>, vector<288x16xbf16>
    %c38 = arith.constant 38 : index
    %c0_24 = arith.constant 0 : index
    %27 = vector.load %arg13[%c38, %c0_24] : memref<328x16xbf16, #tpu.memory_space<vmem>>, vector<288x16xbf16>
    %28 = tpu.concatenate %19, %20, %21, %22, %23, %24, %25, %26, %27 in 1 : vector<288x16xbf16>, vector<288x16xbf16>, vector<288x16xbf16>, vector<288x16xbf16>, vector<288x16xbf16>, vector<288x16xbf16>, vector<288x16xbf16>, vector<288x16xbf16>, vector<288x16xbf16> -> vector<288x144xbf16>
    %c0_25 = arith.constant 0 : index
    %c0_26 = arith.constant 0 : index
    %29 = vector.load %arg5[%c0_25, %c0_26] : memref<144x16xbf16, #tpu.memory_space<vmem>>, vector<144x16xbf16>
    %cst_27 = arith.constant dense<0.000000e+00> : vector<288x16xf32>
    %30 = tpu.matmul %28, %29, %cst_27 {dimension_numbers = #tpu.dot_dimension_numbers<[1], [0], [0], [1], [0, 0, 1, 1], [], []>} : vector<288x144xbf16>, vector<144x16xbf16>, vector<288x16xf32> -> vector<288x16xf32>
    %c0_28 = arith.constant 0 : index
    %c0_29 = arith.constant 0 : index
    %31 = vector.load %arg6[%c0_28, %c0_29] : memref<1x16xf32, #tpu.memory_space<vmem>>, vector<1x16xf32>
    %32 = vector.broadcast %31 : vector<1x16xf32> to vector<288x16xf32>
    %33 = arith.addf %30, %32 : vector<288x16xf32>
    %cst_30 = arith.constant 1.000000e-01 : f32
    %34 = vector.broadcast %cst_30 : f32 to vector<288x16xf32>
    %35 = arith.mulf %34, %33 : vector<288x16xf32>
    %36 = arith.maximumf %33, %35 : vector<288x16xf32>
    %37 = arith.truncf %36 : vector<288x16xf32> to vector<288x16xbf16>
    %c0_31 = arith.constant 0 : index
    %c0_32 = arith.constant 0 : index
    %38 = vector.load %arg7[%c0_31, %c0_32] : memref<16x16xbf16, #tpu.memory_space<vmem>>, vector<16x16xbf16>
    %cst_33 = arith.constant dense<0.000000e+00> : vector<288x16xf32>
    %39 = tpu.matmul %37, %38, %cst_33 {dimension_numbers = #tpu.dot_dimension_numbers<[1], [0], [0], [1], [0, 0, 1, 1], [], []>} : vector<288x16xbf16>, vector<16x16xbf16>, vector<288x16xf32> -> vector<288x16xf32>
    %c0_34 = arith.constant 0 : index
    %c0_35 = arith.constant 0 : index
    %40 = vector.load %arg8[%c0_34, %c0_35] : memref<1x16xf32, #tpu.memory_space<vmem>>, vector<1x16xf32>
    %41 = vector.broadcast %40 : vector<1x16xf32> to vector<288x16xf32>
    %42 = arith.addf %39, %41 : vector<288x16xf32>
    %43 = arith.truncf %42 : vector<288x16xf32> to vector<288x16xbf16>
    %c0_36 = arith.constant 0 : index
    %c0_37 = arith.constant 0 : index
    %44 = vector.load %arg9[%c0_36, %c0_37] : memref<16x32xbf16, #tpu.memory_space<vmem>>, vector<16x32xbf16>
    %cst_38 = arith.constant dense<0.000000e+00> : vector<288x32xf32>
    %45 = tpu.matmul %43, %44, %cst_38 {dimension_numbers = #tpu.dot_dimension_numbers<[1], [0], [0], [1], [0, 0, 1, 1], [], []>} : vector<288x16xbf16>, vector<16x32xbf16>, vector<288x32xf32> -> vector<288x32xf32>
    %c0_39 = arith.constant 0 : index
    %c0_40 = arith.constant 0 : index
    %46 = vector.load %arg10[%c0_39, %c0_40] : memref<16x32xbf16, #tpu.memory_space<vmem>>, vector<16x32xbf16>
    %cst_41 = arith.constant dense<0.000000e+00> : vector<288x32xf32>
    %47 = tpu.matmul %9, %46, %cst_41 {dimension_numbers = #tpu.dot_dimension_numbers<[1], [0], [0], [1], [0, 0, 1, 1], [], []>} : vector<288x16xbf16>, vector<16x32xbf16>, vector<288x32xf32> -> vector<288x32xf32>
    %48 = arith.addf %45, %47 : vector<288x32xf32>
    %c0_42 = arith.constant 0 : index
    %c0_43 = arith.constant 0 : index
    %49 = vector.load %arg11[%c0_42, %c0_43] : memref<1x32xf32, #tpu.memory_space<vmem>>, vector<1x32xf32>
    %50 = vector.broadcast %49 : vector<1x32xf32> to vector<288x32xf32>
    %51 = arith.addf %48, %50 : vector<288x32xf32>
    %52 = vector.shape_cast %51 : vector<288x32xf32> to vector<1x288x32xf32>
    %53 = arith.truncf %52 : vector<1x288x32xf32> to vector<1x288x32xbf16>
    %c0_44 = arith.constant 0 : index
    %c0_45 = arith.constant 0 : index
    %c0_46 = arith.constant 0 : index
    %54 = vector.load %arg12[%c0_44, %c0_45, %c0_46] : memref<1x288x32xbf16, #tpu.memory_space<vmem>>, vector<1x288x32xbf16>
    tpu.vector_store %arg12[%c0_44, %c0_45, %c0_46], %53 {strides = array<i32>} : memref<1x288x32xbf16, #tpu.memory_space<vmem>>, vector<1x288x32xbf16>,
    return
  }
  func.func @transform_0(%arg0: i32) -> (i32, i32, i32) {
    %c0_i32 = arith.constant 0 : i32
    %c0_i32_0 = arith.constant 0 : i32
    %c0_i32_1 = arith.constant 0 : i32
    return %arg0, %c0_i32, %c0_i32_0 : i32, i32, i32
  }
  func.func @transform_1(%arg0: i32) -> (i32, i32) {
    %c0_i32 = arith.constant 0 : i32
    %c0_i32_0 = arith.constant 0 : i32
    %c0_i32_1 = arith.constant 0 : i32
    return %c0_i32, %c0_i32_0 : i32, i32
  }
  func.func @transform_2(%arg0: i32) -> (i32, i32) {
    %c0_i32 = arith.constant 0 : i32
    %c0_i32_0 = arith.constant 0 : i32
    %c0_i32_1 = arith.constant 0 : i32
    return %c0_i32, %c0_i32_0 : i32, i32
  }
  func.func @transform_3(%arg0: i32) -> (i32, i32) {
    %c0_i32 = arith.constant 0 : i32
    %c0_i32_0 = arith.constant 0 : i32
    %c0_i32_1 = arith.constant 0 : i32
    return %c0_i32, %c0_i32_0 : i32, i32
  }
  func.func @transform_4(%arg0: i32) -> (i32, i32) {
    %c0_i32 = arith.constant 0 : i32
    %c0_i32_0 = arith.constant 0 : i32
    %c0_i32_1 = arith.constant 0 : i32
    return %c0_i32, %c0_i32_0 : i32, i32
  }
  func.func @transform_5(%arg0: i32) -> (i32, i32) {
    %c0_i32 = arith.constant 0 : i32
    %c0_i32_0 = arith.constant 0 : i32
    %c0_i32_1 = arith.constant 0 : i32
    return %c0_i32, %c0_i32_0 : i32, i32
  }
  func.func @transform_6(%arg0: i32) -> (i32, i32) {
    %c0_i32 = arith.constant 0 : i32
    %c0_i32_0 = arith.constant 0 : i32
    %c0_i32_1 = arith.constant 0 : i32
    return %c0_i32, %c0_i32_0 : i32, i32
  }
  func.func @transform_7(%arg0: i32) -> (i32, i32) {
    %c0_i32 = arith.constant 0 : i32
    %c0_i32_0 = arith.constant 0 : i32
    %c0_i32_1 = arith.constant 0 : i32
    return %c0_i32, %c0_i32_0 : i32, i32
  }
  func.func @transform_8(%arg0: i32) -> (i32, i32) {
    %c0_i32 = arith.constant 0 : i32
    %c0_i32_0 = arith.constant 0 : i32
    %c0_i32_1 = arith.constant 0 : i32
    return %c0_i32, %c0_i32_0 : i32, i32
  }
  func.func @transform_9(%arg0: i32) -> (i32, i32) {
    %c0_i32 = arith.constant 0 : i32
    %c0_i32_0 = arith.constant 0 : i32
    %c0_i32_1 = arith.constant 0 : i32
    return %c0_i32, %c0_i32_0 : i32, i32
  }
  func.func @transform_10(%arg0: i32) -> (i32, i32) {
    %c0_i32 = arith.constant 0 : i32
    %c0_i32_0 = arith.constant 0 : i32
    %c0_i32_1 = arith.constant 0 : i32
    return %c0_i32, %c0_i32_0 : i32, i32
  }
  func.func @transform_11(%arg0: i32) -> (i32, i32, i32) {
    %c0_i32 = arith.constant 0 : i32
    %c0_i32_0 = arith.constant 0 : i32
    %c0_i32_1 = arith.constant 0 : i32
    return %arg0, %c0_i32, %c0_i32_0 : i32, i32, i32
  }
}

</mosaic_0001>

<llo_original>
// kernel: csp_residual_block.1
$region0: #{csp_residual_block.1}
  #allocation0 [shape = 'u32[]', space=smem, size = 0x4, offset = 0x4, fixed_abs, tag = 'smem constant byte address 0x4 - core index']
  #allocation1 [shape = 'u32[144,128]{1,0:T(1,128)}', space=vmem, size = 0x12000, scoped, tag = 'internal scratch']
  #allocation2 [shape = 'bf16[328,16]{1,0:T(8,128)(2,1)}', space=vmem, size = 0x14800, scoped, tag = 'scratch operand']
  %s0 = inlined_call_operand.hbm [shape: bf16[2,288,4], index: 0, kind: input, shape index: {}]
  %s1 = inlined_call_operand.hbm [shape: f32[288,1], index: 1, kind: input, shape index: {}]
  %s2 = inlined_call_operand.hbm [shape: bf16[4,32], index: 2, kind: input, shape index: {}]
  %s3 = inlined_call_operand.hbm [shape: f32[1,32], index: 3, kind: input, shape index: {}]
  %s4 = inlined_call_operand.hbm [shape: bf16[144,16], index: 4, kind: input, shape index: {}]
  %s5 = inlined_call_operand.hbm [shape: f32[1,16], index: 5, kind: input, shape index: {}]
  %s6 = inlined_call_operand.hbm [shape: bf16[16,16], index: 6, kind: input, shape index: {}]
  %s7 = inlined_call_operand.hbm [shape: f32[1,16], index: 7, kind: input, shape index: {}]
  %s8 = inlined_call_operand.hbm [shape: bf16[16,32], index: 8, kind: input, shape index: {}]
  %s9 = inlined_call_operand.hbm [shape: bf16[16,32], index: 9, kind: input, shape index: {}]
  %s10 = inlined_call_operand.hbm [shape: f32[1,32], index: 10, kind: input, shape index: {}]
  %s11 = inlined_call_operand.hbm [shape: bf16[2,288,32], index: 11, kind: output, shape index: {}]
  %s12 = sld [smem:[#allocation0]]
  $region121: #{csp_residual_block.1} parent=0
    _
  %s14 = ssub.s32 1, %s12
  %s15 = scalar_select 0, %s14, %s12
  $region1: #{csp_residual_block.1} parent=0
    #allocation3 [shape = 'u8[147456]{0}', space=vmem, size = 0x24000, scoped, tag = 'input window, operand 0']
    #allocation4 [shape = 's32[2]{0}', space=sflag, size = 0x8, scoped, tag = 'scoped memory for csp_residual_block.1']
    #allocation5 [shape = 's32[2]{0}', space=sflag, size = 0x8, scoped, tag = 'scoped memory for csp_residual_block.1']
    #allocation6 [shape = 'u8[147456]{0}', space=vmem, size = 0x24000, scoped, tag = 'input window, operand 1, single buffered']
    #allocation7 [shape = 's32[1]{0}', space=sflag, size = 0x4, scoped, tag = 'scoped memory for csp_residual_block.1']
    #allocation8 [shape = 'u8[1024]{0}', space=vmem, size = 0x400, scoped, tag = 'input window, operand 2, single buffered']
    #allocation9 [shape = 'u8[512]{0}', space=vmem, size = 0x400, scoped, tag = 'input window, operand 3, single buffered']
    #allocation10 [shape = 's32[1]{0}', space=sflag, size = 0x4, scoped, tag = 'scoped memory for csp_residual_block.1']
    #allocation11 [shape = 'u8[36864]{0}', space=vmem, size = 0x9000, scoped, tag = 'input window, operand 4, single buffered']
    #allocation12 [shape = 'u8[512]{0}', space=vmem, size = 0x400, scoped, tag = 'input window, operand 5, single buffered']
    #allocation13 [shape = 's32[1]{0}', space=sflag, size = 0x4, scoped, tag = 'scoped memory for csp_residual_block.1']
    #allocation14 [shape = 'u8[4096]{0}', space=vmem, size = 0x1000, scoped, tag = 'input window, operand 6, single buffered']
    #allocation15 [shape = 'u8[512]{0}', space=vmem, size = 0x400, scoped, tag = 'input window, operand 7, single buffered']
    #allocation16 [shape = 's32[1]{0}', space=sflag, size = 0x4, scoped, tag = 'scoped memory for csp_residual_block.1']
    #allocation17 [shape = 'u8[4096]{0}', space=vmem, size = 0x1000, scoped, tag = 'input window, operand 8, single buffered']
    #allocation18 [shape = 'u8[4096]{0}', space=vmem, size = 0x1000, scoped, tag = 'input window, operand 9, single buffered']
    #allocation19 [shape = 's32[1]{0}', space=sflag, size = 0x4, scoped, tag = 'scoped memory for csp_residual_block.1']
    #allocation20 [shape = 'u8[512]{0}', space=vmem, size = 0x400, scoped, tag = 'input window, operand 10, single buffered']
    #allocation21 [shape = 'u8[147456]{0}', space=vmem, size = 0x24000, scoped, tag = 'output window, operand 0']
    %16 = vsyncpa [#allocation4], 0
    %s17 = scalar_lea.sflag [#allocation4], 1
    %18 = vsyncpa %s17, 0
    %19 = vsyncpa [#allocation7], 0
    %20 = vsyncpa [#allocation10], 0
    %21 = vsyncpa [#allocation13], 0
    %22 = vsyncpa [#allocation16], 0
    %23 = vsyncpa [#allocation19], 0
    %24 = vsyncpa [#allocation5], 0
    %s25 = scalar_lea.sflag [#allocation5], 1
    %26 = vsyncpa %s25, 0
    loop: start=0, step=1, limit=4
    $region2: #{csp_residual_block.1} parent=1 // loop_pre_header
      _
    $region3: #{csp_residual_block.1} parent=1 // loop_header
      %s28 = sphi 0, %s32
      %p29 = scmp.ge.s32.totalorder %s28, 4
      %s38 = sphi 0, %s40
      %s41 = sphi 0, %s38
      %s42 = sphi 0, %s41
      %s58 = sphi 0, %s42
      %s62 = sphi 0, %s62
      %s64 = sphi 0, %s62
      %s65 = sphi 0, %s64
      %s79 = sphi 0, %s65
      %s83 = sphi 0, %s83
      %s85 = sphi 0, %s83
      %s86 = sphi 0, %s85
      %s100 = sphi 0, %s86
      %s104 = sphi 0, %s104
      %s106 = sphi 0, %s104
      %s107 = sphi 0, %s106
      %s121 = sphi 0, %s107
      %s125 = sphi 0, %s125
      %s127 = sphi 0, %s125
      %s128 = sphi 0, %s127
      %s142 = sphi 0, %s128
      %s146 = sphi 0, %s146
      %s148 = sphi 0, %s146
      %s149 = sphi 0, %s148
      %s163 = sphi 0, %s149
      %s167 = sphi 0, %s167
      %s169 = sphi 0, %s167
      %s170 = sphi 0, %s169
      %s184 = sphi 0, %s170
      %s188 = sphi 0, %s188
      %s190 = sphi 0, %s188
      %s191 = sphi 0, %s190
      %s205 = sphi 0, %s191
      %s209 = sphi 0, %s209
      %s211 = sphi 0, %s209
      %s212 = sphi 0, %s211
      %s226 = sphi 0, %s212
      %s230 = sphi 0, %s230
      %s232 = sphi 0, %s230
      %s233 = sphi 0, %s232
      %s247 = sphi 0, %s233
      %s251 = sphi 0, %s251
      %s253 = sphi 0, %s251
      %s254 = sphi 0, %s253
      %s268 = sphi 0, %s254
      %s274 = sphi 0, %s276
      %s277 = sphi 0, %s274
      %s278 = sphi 0, %s277
      %s294 = sphi 0, %s278
    $region4: #{csp_residual_block.1} parent=1 // loop_header_branch
      %31 = sbr.rel (%p29) target = $region8
    $region5: #{csp_residual_block.1} parent=1 // loop_body
      %s33 = ssub.s32 %s28, 1
      %s34 = ssub.s32 %s28, 2
      %s35 = sadd.s32 %s28, 1
      %s36 = ssub.s32 %s28, %s35
      %p37 = scmp.eq.s32.totalorder %s36, 0
      %s39 = sadd.s32 %s38, 1
      %s40 = scalar_select %p37, %s38, %s39
      %p43 = pneg %p37
      %p44 = scmp.eq.s32.totalorder %s28, 1
      %p45 = por %p43, %p44
      %p46 = scmp.ne.s32.totalorder %s38, %s41
      %p47 = scmp.eq.s32.totalorder %s28, 0
      %p48 = por %p46, %p47
      %p49 = scmp.ne.s32.totalorder %s38, %s41
      %p50 = scmp.eq.s32.totalorder %s33, 1
      %p51 = por %p49, %p50
      %p52 = scmp.ne.s32.totalorder %s41, %s42
      %p53 = scmp.eq.s32.totalorder %s33, 0
      %p54 = por %p52, %p53
      %p55 = scmp.ne.s32.totalorder %s41, %s42
      %p56 = scmp.eq.s32.totalorder %s34, 1
      %p57 = por %p55, %p56
      %p59 = scmp.ne.s32.totalorder %s42, %s58
      %p60 = scmp.eq.s32.totalorder %s34, 0
      %p61 = por %p59, %p60
      %s63 = sadd.s32 %s62, 1
      %p66 = scmp.eq.s32.totalorder %s28, 1
      %p67 = scmp.ne.s32.totalorder %s62, %s64
      %p68 = scmp.eq.s32.totalorder %s28, 0
      %p69 = por %p67, %p68
      %p70 = scmp.ne.s32.totalorder %s62, %s64
      %p71 = scmp.eq.s32.totalorder %s33, 1
      %p72 = por %p70, %p71
      %p73 = scmp.ne.s32.totalorder %s64, %s65
      %p74 = scmp.eq.s32.totalorder %s33, 0
      %p75 = por %p73, %p74
      %p76 = scmp.ne.s32.totalorder %s64, %s65
      %p77 = scmp.eq.s32.totalorder %s34, 1
      %p78 = por %p76, %p77
      %p80 = scmp.ne.s32.totalorder %s65, %s79
      %p81 = scmp.eq.s32.totalorder %s34, 0
      %p82 = por %p80, %p81
      %s84 = sadd.s32 %s83, 1
      %p87 = scmp.eq.s32.totalorder %s28, 1
      %p88 = scmp.ne.s32.totalorder %s83, %s85
      %p89 = scmp.eq.s32.totalorder %s28, 0
      %p90 = por %p88, %p89
      %p91 = scmp.ne.s32.totalorder %s83, %s85
      %p92 = scmp.eq.s32.totalorder %s33, 1
      %p93 = por %p91, %p92
      %p94 = scmp.ne.s32.totalorder %s85, %s86
      %p95 = scmp.eq.s32.totalorder %s33, 0
      %p96 = por %p94, %p95
      %p97 = scmp.ne.s32.totalorder %s85, %s86
      %p98 = scmp.eq.s32.totalorder %s34, 1
      %p99 = por %p97, %p98
      %p101 = scmp.ne.s32.totalorder %s86, %s100
      %p102 = scmp.eq.s32.totalorder %s34, 0
      %p103 = por %p101, %p102
      %s105 = sadd.s32 %s104, 1
      %p108 = scmp.eq.s32.totalorder %s28, 1
      %p109 = scmp.ne.s32.totalorder %s104, %s106
      %p110 = scmp.eq.s32.totalorder %s28, 0
      %p111 = por %p109, %p110
      %p112 = scmp.ne.s32.totalorder %s104, %s106
      %p113 = scmp.eq.s32.totalorder %s33, 1
      %p114 = por %p112, %p113
      %p115 = scmp.ne.s32.totalorder %s106, %s107
      %p116 = scmp.eq.s32.totalorder %s33, 0
      %p117 = por %p115, %p116
      %p118 = scmp.ne.s32.totalorder %s106, %s107
      %p119 = scmp.eq.s32.totalorder %s34, 1
      %p120 = por %p118, %p119
      %p122 = scmp.ne.s32.totalorder %s107, %s121
      %p123 = scmp.eq.s32.totalorder %s34, 0
      %p124 = por %p122, %p123
      %s126 = sadd.s32 %s125, 1
      %p129 = scmp.eq.s32.totalorder %s28, 1
      %p130 = scmp.ne.s32.totalorder %s125, %s127
      %p131 = scmp.eq.s32.totalorder %s28, 0
      %p132 = por %p130, %p131
      %p133 = scmp.ne.s32.totalorder %s125, %s127
      %p134 = scmp.eq.s32.totalorder %s33, 1
      %p135 = por %p133, %p134
      %p136 = scmp.ne.s32.totalorder %s127, %s128
      %p137 = scmp.eq.s32.totalorder %s33, 0
      %p138 = por %p136, %p137
      %p139 = scmp.ne.s32.totalorder %s127, %s128
      %p140 = scmp.eq.s32.totalorder %s34, 1
      %p141 = por %p139, %p140
      %p143 = scmp.ne.s32.totalorder %s128, %s142
      %p144 = scmp.eq.s32.totalorder %s34, 0
      %p145 = por %p143, %p144
      %s147 = sadd.s32 %s146, 1
      %p150 = scmp.eq.s32.totalorder %s28, 1
      %p151 = scmp.ne.s32.totalorder %s146, %s148
      %p152 = scmp.eq.s32.totalorder %s28, 0
      %p153 = por %p151, %p152
      %p154 = scmp.ne.s32.totalorder %s146, %s148
      %p155 = scmp.eq.s32.totalorder %s33, 1
      %p156 = por %p154, %p155
      %p157 = scmp.ne.s32.totalorder %s148, %s149
      %p158 = scmp.eq.s32.totalorder %s33, 0
      %p159 = por %p157, %p158
      %p160 = scmp.ne.s32.totalorder %s148, %s149
      %p161 = scmp.eq.s32.totalorder %s34, 1
      %p162 = por %p160, %p161
      %p164 = scmp.ne.s32.totalorder %s149, %s163
      %p165 = scmp.eq.s32.totalorder %s34, 0
      %p166 = por %p164, %p165
      %s168 = sadd.s32 %s167, 1
      %p171 = scmp.eq.s32.totalorder %s28, 1
      %p172 = scmp.ne.s32.totalorder %s167, %s169
      %p173 = scmp.eq.s32.totalorder %s28, 0
      %p174 = por %p172, %p173
      %p175 = scmp.ne.s32.totalorder %s167, %s169
      %p176 = scmp.eq.s32.totalorder %s33, 1
      %p177 = por %p175, %p176
      %p178 = scmp.ne.s32.totalorder %s169, %s170
      %p179 = scmp.eq.s32.totalorder %s33, 0
      %p180 = por %p178, %p179
      %p181 = scmp.ne.s32.totalorder %s169, %s170
      %p182 = scmp.eq.s32.totalorder %s34, 1
      %p183 = por %p181, %p182
      %p185 = scmp.ne.s32.totalorder %s170, %s184
      %p186 = scmp.eq.s32.totalorder %s34, 0
      %p187 = por %p185, %p186
      %s189 = sadd.s32 %s188, 1
      %p192 = scmp.eq.s32.totalorder %s28, 1
      %p193 = scmp.ne.s32.totalorder %s188, %s190
      %p194 = scmp.eq.s32.totalorder %s28, 0
      %p195 = por %p193, %p194
      %p196 = scmp.ne.s32.totalorder %s188, %s190
      %p197 = scmp.eq.s32.totalorder %s33, 1
      %p198 = por %p196, %p197
      %p199 = scmp.ne.s32.totalorder %s190, %s191
      %p200 = scmp.eq.s32.totalorder %s33, 0
      %p201 = por %p199, %p200
      %p202 = scmp.ne.s32.totalorder %s190, %s191
      %p203 = scmp.eq.s32.totalorder %s34, 1
      %p204 = por %p202, %p203
      %p206 = scmp.ne.s32.totalorder %s191, %s205
      %p207 = scmp.eq.s32.totalorder %s34, 0
      %p208 = por %p206, %p207
      %s210 = sadd.s32 %s209, 1
      %p213 = scmp.eq.s32.totalorder %s28, 1
      %p214 = scmp.ne.s32.totalorder %s209, %s211
      %p215 = scmp.eq.s32.totalorder %s28, 0
      %p216 = por %p214, %p215
      %p217 = scmp.ne.s32.totalorder %s209, %s211
      %p218 = scmp.eq.s32.totalorder %s33, 1
      %p219 = por %p217, %p218
      %p220 = scmp.ne.s32.totalorder %s211, %s212
      %p221 = scmp.eq.s32.totalorder %s33, 0
      %p222 = por %p220, %p221
      %p223 = scmp.ne.s32.totalorder %s211, %s212
      %p224 = scmp.eq.s32.totalorder %s34, 1
      %p225 = por %p223, %p224
      %p227 = scmp.ne.s32.totalorder %s212, %s226
      %p228 = scmp.eq.s32.totalorder %s34, 0
      %p229 = por %p227, %p228
      %s231 = sadd.s32 %s230, 1
      %p234 = scmp.eq.s32.totalorder %s28, 1
      %p235 = scmp.ne.s32.totalorder %s230, %s232
      %p236 = scmp.eq.s32.totalorder %s28, 0
      %p237 = por %p235, %p236
      %p238 = scmp.ne.s32.totalorder %s230, %s232
      %p239 = scmp.eq.s32.totalorder %s33, 1
      %p240 = por %p238, %p239
      %p241 = scmp.ne.s32.totalorder %s232, %s233
      %p242 = scmp.eq.s32.totalorder %s33, 0
      %p243 = por %p241, %p242
      %p244 = scmp.ne.s32.totalorder %s232, %s233
      %p245 = scmp.eq.s32.totalorder %s34, 1
      %p246 = por %p244, %p245
      %p248 = scmp.ne.s32.totalorder %s233, %s247
      %p249 = scmp.eq.s32.totalorder %s34, 0
      %p250 = por %p248, %p249
      %s252 = sadd.s32 %s251, 1
      %p255 = scmp.eq.s32.totalorder %s28, 1
      %p256 = scmp.ne.s32.totalorder %s251, %s253
      %p257 = scmp.eq.s32.totalorder %s28, 0
      %p258 = por %p256, %p257
      %p259 = scmp.ne.s32.totalorder %s251, %s253
      %p260 = scmp.eq.s32.totalorder %s33, 1
      %p261 = por %p259, %p260
      %p262 = scmp.ne.s32.totalorder %s253, %s254
      %p263 = scmp.eq.s32.totalorder %s33, 0
      %p264 = por %p262, %p263
      %p265 = scmp.ne.s32.totalorder %s253, %s254
      %p266 = scmp.eq.s32.totalorder %s34, 1
      %p267 = por %p265, %p266
      %p269 = scmp.ne.s32.totalorder %s254, %s268
      %p270 = scmp.eq.s32.totalorder %s34, 0
      %p271 = por %p269, %p270
      %s272 = ssub.s32 %s28, %s35
      %p273 = scmp.eq.s32.totalorder %s272, 0
      %s275 = sadd.s32 %s274, 1
      %s276 = scalar_select %p273, %s274, %s275
      %p279 = pneg %p273
      %p280 = scmp.eq.s32.totalorder %s28, 1
      %p281 = por %p279, %p280
      %p282 = scmp.ne.s32.totalorder %s274, %s277
      %p283 = scmp.eq.s32.totalorder %s28, 0
      %p284 = por %p282, %p283
      %p285 = scmp.ne.s32.totalorder %s274, %s277
      %p286 = scmp.eq.s32.totalorder %s33, 1
      %p287 = por %p285, %p286
      %p288 = scmp.ne.s32.totalorder %s277, %s278
      %p289 = scmp.eq.s32.totalorder %s33, 0
      %p290 = por %p288, %p289
      %p291 = scmp.ne.s32.totalorder %s277, %s278
      %p292 = scmp.eq.s32.totalorder %s34, 1
      %p293 = por %p291, %p292
      %p295 = scmp.ne.s32.totalorder %s278, %s294
      %p296 = scmp.eq.s32.totalorder %s34, 0
      %p297 = por %p295, %p296
      %p298 = scmp.le.s32.totalorder 1, %s28
      %p299 = scmp.lt.s32.totalorder %s28, 3
      %p300 = pnand %p298, %p299
      %p301 = pneg %p300
      // Predicated region
      $region9: #{csp_residual_block.1} parent=5 // pred_check
        _
      $region10: #{csp_residual_block.1} parent=5 // pred_check_branch
        %303 = sbr.rel (%p300) target = $region12
      $region11: #{csp_residual_block.1} parent=5 // pred_region
        %s304 = ssub.s32 %s28, 1
        // Predicated region
        $region13: #{csp_residual_block.1} parent=11 // pred_check
          %p305 = pneg %p75
        $region14: #{csp_residual_block.1} parent=11 // pred_check_branch
          %307 = sbr.rel (%p305) target = $region16
        $region15: #{csp_residual_block.1} parent=11 // pred_region
          %s309 = ssub.s32 4608, 4608
          %310 = vsyncadd [#allocation7], %s309
          %s311 = sshll.u32 [#allocation6], 4
          %s312 = int_to_ptr.vmem [resolvable:$true] %s311
          %317 = dma.hbm_to_vmem [thread:$0]  %s1, 4608, %s312, [#allocation7], 128, 128, 8
        $region16: #{csp_residual_block.1} parent=11 // pred_fallthru
          _
        // Predicated region
        $region17: #{csp_residual_block.1} parent=11 // pred_check
          %p318 = pneg %p96
        $region18: #{csp_residual_block.1} parent=11 // pred_check_branch
          %320 = sbr.rel (%p318) target = $region20
        $region19: #{csp_residual_block.1} parent=11 // pred_region
          %s322 = ssub.s32 32, 32
          %323 = vsyncadd [#allocation7], %s322
          %s325 = sshll.u32 [#allocation8], 4
          %s326 = int_to_ptr.vmem [resolvable:$true] %s325
          %328 = dma.hbm_to_vmem [thread:$0]  %s2, 32, %s326, [#allocation7]
        $region20: #{csp_residual_block.1} parent=11 // pred_fallthru
          _
        // Predicated region
        $region21: #{csp_residual_block.1} parent=11 // pred_check
          %p329 = pneg %p117
        $region22: #{csp_residual_block.1} parent=11 // pred_check_branch
          %331 = sbr.rel (%p329) target = $region24
        $region23: #{csp_residual_block.1} parent=11 // pred_region
          %s333 = ssub.s32 16, 16
          %334 = vsyncadd [#allocation10], %s333
          %s336 = sshll.u32 [#allocation9], 4
          %s337 = int_to_ptr.vmem [resolvable:$true] %s336
          %339 = dma.hbm_to_vmem [thread:$0]  %s3, 16, %s337, [#allocation10]
        $region24: #{csp_residual_block.1} parent=11 // pred_fallthru
          _
        // Predicated region
        $region25: #{csp_residual_block.1} parent=11 // pred_check
          %p340 = pneg %p138
        $region26: #{csp_residual_block.1} parent=11 // pred_check_branch
          %342 = sbr.rel (%p340) target = $region28
        $region27: #{csp_residual_block.1} parent=11 // pred_region
          %s344 = ssub.s32 1152, 1152
          %345 = vsyncadd [#allocation10], %s344
          %s346 = sshll.u32 [#allocation11], 4
          %s347 = int_to_ptr.vmem [resolvable:$true] %s346
          %352 = dma.hbm_to_vmem [thread:$0]  %s4, 1152, %s347, [#allocation10], 64, 64, 4
        $region28: #{csp_residual_block.1} parent=11 // pred_fallthru
          _
        // Predicated region
        $region29: #{csp_residual_block.1} parent=11 // pred_check
          %p353 = pneg %p159
        $region30: #{csp_residual_block.1} parent=11 // pred_check_branch
          %355 = sbr.rel (%p353) target = $region32
        $region31: #{csp_residual_block.1} parent=11 // pred_region
          %s357 = ssub.s32 16, 16
          %358 = vsyncadd [#allocation13], %s357
          %s360 = sshll.u32 [#allocation12], 4
          %s361 = int_to_ptr.vmem [resolvable:$true] %s360
          %363 = dma.hbm_to_vmem [thread:$0]  %s5, 16, %s361, [#allocation13]
        $region32: #{csp_residual_block.1} parent=11 // pred_fallthru
          _
        // Predicated region
        $region33: #{csp_residual_block.1} parent=11 // pred_check
          %p364 = pneg %p180
        $region34: #{csp_residual_block.1} parent=11 // pred_check_branch
          %366 = sbr.rel (%p364) target = $region36
        $region35: #{csp_residual_block.1} parent=11 // pred_region
          %s368 = ssub.s32 128, 128
          %369 = vsyncadd [#allocation13], %s368
          %s370 = sshll.u32 [#allocation14], 4
          %s371 = int_to_ptr.vmem [resolvable:$true] %s370
          %376 = dma.hbm_to_vmem [thread:$0]  %s6, 128, %s371, [#allocation13], 64, 64, 4
        $region36: #{csp_residual_block.1} parent=11 // pred_fallthru
          _
        // Predicated region
        $region37: #{csp_residual_block.1} parent=11 // pred_check
          %p377 = pneg %p201
        $region38: #{csp_residual_block.1} parent=11 // pred_check_branch
          %379 = sbr.rel (%p377) target = $region40
        $region39: #{csp_residual_block.1} parent=11 // pred_region
          %s381 = ssub.s32 16, 16
          %382 = vsyncadd [#allocation16], %s381
          %s384 = sshll.u32 [#allocation15], 4
          %s385 = int_to_ptr.vmem [resolvable:$true] %s384
          %387 = dma.hbm_to_vmem [thread:$0]  %s7, 16, %s385, [#allocation16]
        $region40: #{csp_residual_block.1} parent=11 // pred_fallthru
          _
        // Predicated region
        $region41: #{csp_residual_block.1} parent=11 // pred_check
          %p388 = pneg %p222
        $region42: #{csp_residual_block.1} parent=11 // pred_check_branch
          %390 = sbr.rel (%p388) target = $region44
        $region43: #{csp_residual_block.1} parent=11 // pred_region
          %s392 = ssub.s32 128, 128
          %393 = vsyncadd [#allocation16], %s392
          %s394 = sshll.u32 [#allocation17], 4
          %s395 = int_to_ptr.vmem [resolvable:$true] %s394
          %400 = dma.hbm_to_vmem [thread:$0]  %s8, 128, %s395, [#allocation16], 64, 64, 4
        $region44: #{csp_residual_block.1} parent=11 // pred_fallthru
          _
        // Predicated region
        $region45: #{csp_residual_block.1} parent=11 // pred_check
          %p401 = pneg %p243
        $region46: #{csp_residual_block.1} parent=11 // pred_check_branch
          %403 = sbr.rel (%p401) target = $region48
        $region47: #{csp_residual_block.1} parent=11 // pred_region
          %s405 = ssub.s32 128, 128
          %406 = vsyncadd [#allocation19], %s405
          %s407 = sshll.u32 [#allocation18], 4
          %s408 = int_to_ptr.vmem [resolvable:$true] %s407
          %413 = dma.hbm_to_vmem [thread:$0]  %s9, 128, %s408, [#allocation19], 64, 64, 4
        $region48: #{csp_residual_block.1} parent=11 // pred_fallthru
          _
        // Predicated region
        $region49: #{csp_residual_block.1} parent=11 // pred_check
          %p414 = pneg %p264
        $region50: #{csp_residual_block.1} parent=11 // pred_check_branch
          %416 = sbr.rel (%p414) target = $region52
        $region51: #{csp_residual_block.1} parent=11 // pred_region
          %s418 = ssub.s32 16, 16
          %419 = vsyncadd [#allocation19], %s418
          %s421 = sshll.u32 [#allocation20], 4
          %s422 = int_to_ptr.vmem [resolvable:$true] %s421
          %424 = dma.hbm_to_vmem [thread:$0]  %s10, 16, %s422, [#allocation19]
        $region52: #{csp_residual_block.1} parent=11 // pred_fallthru
          _
      $region12: #{csp_residual_block.1} parent=5 // pred_fallthru
        _
      %p425 = scmp.lt.s32.totalorder %s28, 2
      // Predicated region
      $region53: #{csp_residual_block.1} parent=5 // pred_check
        %p426 = pneg %p425
      $region54: #{csp_residual_block.1} parent=5 // pred_check_branch
        %428 = sbr.rel (%p426) target = $region56
      $region55: #{csp_residual_block.1} parent=5 // pred_region
        // Predicated region
        $region57: #{csp_residual_block.1} parent=55 // pred_check
          %p429 = pneg %p48
        $region58: #{csp_residual_block.1} parent=55 // pred_check_branch
          %431 = sbr.rel (%p429) target = $region60
        $region59: #{csp_residual_block.1} parent=55 // pred_region
          %s432 = sand.u32 %s38, 1
          %s433 = scalar_lea.sflag [#allocation4], %s432
          %s434 = sand.u32 %s38, 1
          %s435 = smul.addr %s434, 144
          %s436 = scalar_lea.vmem [#allocation3], %s435
          %s438 = ssub.s32 2304, 2304
          %439 = vsyncadd %s433, %s438
          %s440 = smul.addr %s28, 36
          %s441 = smul.addr %s440, 64
          %s442 = scalar_lea.hbm %s0, %s441
          %s443 = sshll.u32 %s436, 4
          %s444 = int_to_ptr.vmem [resolvable:$true] %s443
          %449 = dma.hbm_to_vmem [thread:$0]  %s442, 2304, %s444, %s433, 64, 64, 4
        $region60: #{csp_residual_block.1} parent=55 // pred_fallthru
          _
      $region56: #{csp_residual_block.1} parent=5 // pred_fallthru
        _
      %p450 = scmp.le.s32.totalorder 1, %s28
      %p451 = scmp.lt.s32.totalorder %s28, 3
      %p452 = pnand %p450, %p451
      %p453 = pneg %p452
      // Predicated region
      $region61: #{csp_residual_block.1} parent=5 // pred_check
        _
      $region62: #{csp_residual_block.1} parent=5 // pred_check_branch
        %455 = sbr.rel (%p452) target = $region64
      $region63: #{csp_residual_block.1} parent=5 // pred_region
        %s456 = ssub.s32 %s28, 1
        %s457 = sand.u32 %s41, 1
        %s458 = scalar_lea.sflag [#allocation4], %s457
        %s459 = sand.u32 %s41, 1
        %s460 = smul.addr %s459, 144
        %s461 = scalar_lea.vmem [#allocation3], %s460
        // Predicated region
        $region65: #{csp_residual_block.1} parent=63 // pred_check
          %p462 = pneg %p54
        $region66: #{csp_residual_block.1} parent=63 // pred_check_branch
          %464 = sbr.rel (%p462) target = $region68
        $region67: #{csp_residual_block.1} parent=63 // pred_region
          %465 = dma.done %s458, 2304
        $region68: #{csp_residual_block.1} parent=63 // pred_fallthru
          _
        // Predicated region
        $region69: #{csp_residual_block.1} parent=63 // pred_check
          %p466 = pneg %p75
        $region70: #{csp_residual_block.1} parent=63 // pred_check_branch
          %468 = sbr.rel (%p466) target = $region72
        $region71: #{csp_residual_block.1} parent=63 // pred_region
          %469 = dma.done [#allocation7], 4608
        $region72: #{csp_residual_block.1} parent=63 // pred_fallthru
          _
        // Predicated region
        $region73: #{csp_residual_block.1} parent=63 // pred_check
          %p470 = pneg %p96
        $region74: #{csp_residual_block.1} parent=63 // pred_check_branch
          %472 = sbr.rel (%p470) target = $region76
        $region75: #{csp_residual_block.1} parent=63 // pred_region
          %473 = dma.done [#allocation7], 32
        $region76: #{csp_residual_block.1} parent=63 // pred_fallthru
          _
        // Predicated region
        $region77: #{csp_residual_block.1} parent=63 // pred_check
          %p474 = pneg %p117
        $region78: #{csp_residual_block.1} parent=63 // pred_check_branch
          %476 = sbr.rel (%p474) target = $region80
        $region79: #{csp_residual_block.1} parent=63 // pred_region
          %477 = dma.done [#allocation10], 16
        $region80: #{csp_residual_block.1} parent=63 // pred_fallthru
          _
        // Predicated region
        $region81: #{csp_residual_block.1} parent=63 // pred_check
          %p478 = pneg %p138
        $region82: #{csp_residual_block.1} parent=63 // pred_check_branch
          %480 = sbr.rel (%p478) target = $region84
        $region83: #{csp_residual_block.1} parent=63 // pred_region
          %481 = dma.done [#allocation10], 1152
        $region84: #{csp_residual_block.1} parent=63 // pred_fallthru
          _
        // Predicated region
        $region85: #{csp_residual_block.1} parent=63 // pred_check
          %p482 = pneg %p159
        $region86: #{csp_residual_block.1} parent=63 // pred_check_branch
          %484 = sbr.rel (%p482) target = $region88
        $region87: #{csp_residual_block.1} parent=63 // pred_region
          %485 = dma.done [#allocation13], 16
        $region88: #{csp_residual_block.1} parent=63 // pred_fallthru
          _
        // Predicated region
        $region89: #{csp_residual_block.1} parent=63 // pred_check
          %p486 = pneg %p180
        $region90: #{csp_residual_block.1} parent=63 // pred_check_branch
          %488 = sbr.rel (%p486) target = $region92
        $region91: #{csp_residual_block.1} parent=63 // pred_region
          %489 = dma.done [#allocation13], 128
        $region92: #{csp_residual_block.1} parent=63 // pred_fallthru
          _
        // Predicated region
        $region93: #{csp_residual_block.1} parent=63 // pred_check
          %p490 = pneg %p201
        $region94: #{csp_residual_block.1} parent=63 // pred_check_branch
          %492 = sbr.rel (%p490) target = $region96
        $region95: #{csp_residual_block.1} parent=63 // pred_region
          %493 = dma.done [#allocation16], 16
        $region96: #{csp_residual_block.1} parent=63 // pred_fallthru
          _
        // Predicated region
        $region97: #{csp_residual_block.1} parent=63 // pred_check
          %p494 = pneg %p222
        $region98: #{csp_residual_block.1} parent=63 // pred_check_branch
          %496 = sbr.rel (%p494) target = $region100
        $region99: #{csp_residual_block.1} parent=63 // pred_region
          %497 = dma.done [#allocation16], 128
        $region100: #{csp_residual_block.1} parent=63 // pred_fallthru
          _
        // Predicated region
        $region101: #{csp_residual_block.1} parent=63 // pred_check
          %p498 = pneg %p243
        $region102: #{csp_residual_block.1} parent=63 // pred_check_branch
          %500 = sbr.rel (%p498) target = $region104
        $region103: #{csp_residual_block.1} parent=63 // pred_region
          %501 = dma.done [#allocation19], 128
        $region104: #{csp_residual_block.1} parent=63 // pred_fallthru
          _
        // Predicated region
        $region105: #{csp_residual_block.1} parent=63 // pred_check
          %p502 = pneg %p264
        $region106: #{csp_residual_block.1} parent=63 // pred_check_branch
          %504 = sbr.rel (%p502) target = $region108
        $region107: #{csp_residual_block.1} parent=63 // pred_region
          %505 = dma.done [#allocation19], 16
        $region108: #{csp_residual_block.1} parent=63 // pred_fallthru
          _
        %s506 = sand.u32 %s41, 1
        %s507 = scalar_lea.sflag [#allocation4], %s506
        %s508 = sand.u32 %s41, 1
        %s509 = smul.addr %s508, 144
        %s510 = scalar_lea.vmem [#allocation3], %s509
        %p511 = pneg %p54
        %p512 = pneg %p51
        %p513 = pneg %p75
        %p514 = pneg %p72
        %p515 = pneg %p96
        %p516 = pneg %p93
        %p517 = pneg %p117
        %p518 = pneg %p114
        %p519 = pneg %p138
        %p520 = pneg %p135
        %p521 = pneg %p159
        %p522 = pneg %p156
        %p523 = pneg %p180
        %p524 = pneg %p177
        %p525 = pneg %p201
        %p526 = pneg %p198
        %p527 = pneg %p222
        %p528 = pneg %p219
        %p529 = pneg %p243
        %p530 = pneg %p240
        %p531 = pneg %p264
        %p532 = pneg %p261
        %p533 = pneg %p290
        %p534 = pneg %p287
        %s535 = sand.u32 %s277, 1
        %s536 = scalar_lea.sflag [#allocation5], %s535
        %s537 = sand.u32 %s277, 1
        %s538 = smul.addr %s537, 144
        %s539 = scalar_lea.vmem [#allocation21], %s538
        %v541 = vld [vmem:[%s461] sm:$0xf]
        %v542 = vld [vmem:[%s461 + $0x4] sm:$0xf]
        %v543 = vld [vmem:[%s461 + $0x8] sm:$0xf]
        %v544 = vld [vmem:[%s461 + $0xc] sm:$0xf]
        %v545 = vld [vmem:[%s461 + $0x10] sm:$0xf]
        %v546 = vld [vmem:[%s461 + $0x14] sm:$0xf]
        %v547 = vld [vmem:[%s461 + $0x18] sm:$0xf]
        %v548 = vld [vmem:[%s461 + $0x1c] sm:$0xf]
        %v549 = vld [vmem:[%s461 + $0x20] sm:$0xf]
        %v550 = vld [vmem:[%s461 + $0x24] sm:$0xf]
        %v551 = vld [vmem:[%s461 + $0x28] sm:$0xf]
        %v552 = vld [vmem:[%s461 + $0x2c] sm:$0xf]
        %v553 = vld [vmem:[%s461 + $0x30] sm:$0xf]
        %v554 = vld [vmem:[%s461 + $0x34] sm:$0xf]
        %v555 = vld [vmem:[%s461 + $0x38] sm:$0xf]
        %v556 = vld [vmem:[%s461 + $0x3c] sm:$0xf]
        %v557 = vld [vmem:[%s461 + $0x40] sm:$0xf]
        %v558 = vld [vmem:[%s461 + $0x44] sm:$0xf]
        %v559 = vld [vmem:[%s461 + $0x48] sm:$0xf]
        %v560 = vld [vmem:[%s461 + $0x4c] sm:$0xf]
        %v561 = vld [vmem:[%s461 + $0x50] sm:$0xf]
        %v562 = vld [vmem:[%s461 + $0x54] sm:$0xf]
        %v563 = vld [vmem:[%s461 + $0x58] sm:$0xf]
        %v564 = vld [vmem:[%s461 + $0x5c] sm:$0xf]
        %v565 = vld [vmem:[%s461 + $0x60] sm:$0xf]
        %v566 = vld [vmem:[%s461 + $0x64] sm:$0xf]
        %v567 = vld [vmem:[%s461 + $0x68] sm:$0xf]
        %v568 = vld [vmem:[%s461 + $0x6c] sm:$0xf]
        %v569 = vld [vmem:[%s461 + $0x70] sm:$0xf]
        %v570 = vld [vmem:[%s461 + $0x74] sm:$0xf]
        %v571 = vld [vmem:[%s461 + $0x78] sm:$0xf]
        %v572 = vld [vmem:[%s461 + $0x7c] sm:$0xf]
        %v573 = vld [vmem:[%s461 + $0x80] sm:$0xf]
        %v574 = vld [vmem:[%s461 + $0x84] sm:$0xf]
        %v575 = vld [vmem:[%s461 + $0x88] sm:$0xf]
        %v576 = vld [vmem:[%s461 + $0x8c] sm:$0xf]
        %v577 = vld [vmem:[#allocation8] sm:$0x3]
        %v578 = vld [vmem:[#allocation9] sm:$0x1]
        %v580 = vlaneseq
        %v581 = vshrl.u32 %v580, 7
        %v582 = vsub.s32 0, %v581
        %v583 = vrot.slane %v578, %v582
        %v621 = vunpack.c.l.b16 %v541
        %v622 = vunpack.c.l.b16 %v542
        %v623 = vunpack.c.l.b16 %v543
        %v624 = vunpack.c.l.b16 %v544
        %v625 = vunpack.c.l.b16 %v545
        %v626 = vunpack.c.l.b16 %v546
        %v627 = vunpack.c.l.b16 %v547
        %v628 = vunpack.c.l.b16 %v548
        %v629 = vunpack.c.l.b16 %v549
        %v630 = vunpack.c.l.b16 %v550
        %v631 = vunpack.c.l.b16 %v551
        %v632 = vunpack.c.l.b16 %v552
        %v633 = vunpack.c.l.b16 %v553
        %v634 = vunpack.c.l.b16 %v554
        %v635 = vunpack.c.l.b16 %v555
        %v636 = vunpack.c.l.b16 %v556
        %v637 = vunpack.c.l.b16 %v557
        %v638 = vunpack.c.l.b16 %v558
        %v639 = vunpack.c.l.b16 %v559
        %v640 = vunpack.c.l.b16 %v560
        %v641 = vunpack.c.l.b16 %v561
        %v642 = vunpack.c.l.b16 %v562
        %v643 = vunpack.c.l.b16 %v563
        %v644 = vunpack.c.l.b16 %v564
        %v645 = vunpack.c.l.b16 %v565
        %v646 = vunpack.c.l.b16 %v566
        %v647 = vunpack.c.l.b16 %v567
        %v648 = vunpack.c.l.b16 %v568
        %v649 = vunpack.c.l.b16 %v569
        %v650 = vunpack.c.l.b16 %v570
        %v651 = vunpack.c.l.b16 %v571
        %v652 = vunpack.c.l.b16 %v572
        %v653 = vunpack.c.l.b16 %v573
        %v654 = vunpack.c.l.b16 %v574
        %v655 = vunpack.c.l.b16 %v575
        %v656 = vunpack.c.l.b16 %v576
        %v657 = vpack.c.b16 %v622, %v621
        %v658 = vpack.c.b16 %v624, %v623
        %v659 = vpack.c.b16 %v626, %v625
        %v660 = vpack.c.b16 %v628, %v627
        %v661 = vpack.c.b16 %v630, %v629
        %v662 = vpack.c.b16 %v632, %v631
        %v663 = vpack.c.b16 %v634, %v633
        %v664 = vpack.c.b16 %v636, %v635
        %v665 = vpack.c.b16 %v638, %v637
        %v666 = vpack.c.b16 %v640, %v639
        %v667 = vpack.c.b16 %v642, %v641
        %v668 = vpack.c.b16 %v644, %v643
        %v669 = vpack.c.b16 %v646, %v645
        %v670 = vpack.c.b16 %v648, %v647
        %v671 = vpack.c.b16 %v650, %v649
        %v672 = vpack.c.b16 %v652, %v651
        %v673 = vpack.c.b16 %v654, %v653
        %v674 = vpack.c.b16 %v656, %v655
        %vm675 = vcmask 31744
        %v677 = vsel %vm675, %v657, 0
        %v680 = vsel %vm675, %v658, 0
        %v683 = vsel %vm675, %v659, 0
        %v686 = vsel %vm675, %v660, 0
        %v689 = vsel %vm675, %v661, 0
        %v692 = vsel %vm675, %v662, 0
        %v695 = vsel %vm675, %v663, 0
        %v698 = vsel %vm675, %v664, 0
        %v701 = vsel %vm675, %v665, 0
        %v704 = vsel %vm675, %v666, 0
        %v707 = vsel %vm675, %v667, 0
        %v710 = vsel %vm675, %v668, 0
        %v713 = vsel %vm675, %v669, 0
        %v716 = vsel %vm675, %v670, 0
        %v719 = vsel %vm675, %v671, 0
        %v722 = vsel %vm675, %v672, 0
        %v725 = vsel %vm675, %v673, 0
        %v728 = vsel %vm675, %v674, 0
        %vm730 = vcmask 1041408
        %v732 = vsel %vm730, %v577, 0
        %734 = vmatprep.subr.bf16.mxu0 0
        %735 = vmatpush1.bf16.msra.mxu0 %v732
        %736 = vmatprep.subr.bf16.mxu0 0
        %737 = vmatpush1.bf16.msra.mxu0 0
        %738 = vmatprep.subr.bf16.mxu0 0
        %739 = vmatpush1.bf16.msra.mxu0 0
        %740 = vmatprep.subr.bf16.mxu0 0
        %741 = vmatpush1.bf16.msra.mxu0 0
        %742 = vmatprep.subr.bf16.mxu0 0
        %743 = vmatpush1.bf16.msra.mxu0 0
        %744 = vmatprep.subr.bf16.mxu0 0
        %745 = vmatpush1.bf16.msra.mxu0 0
        %746 = vmatprep.subr.bf16.mxu0 0
        %747 = vmatpush1.bf16.msra.mxu0 0
        %748 = vmatprep.subr.bf16.mxu0 0
        %749 = vmatpush1.bf16.msra.mxu0 0
        %750 = vmatprep.subr.bf16.mxu0 0
        %751 = vmatpush1.bf16.msra.mxu0 0
        %752 = vmatprep.subr.bf16.mxu0 0
        %753 = vmatpush1.bf16.msra.mxu0 0
        %754 = vmatprep.subr.bf16.mxu0 0
        %755 = vmatpush1.bf16.msra.mxu0 0
        %756 = vmatprep.subr.bf16.mxu0 0
        %757 = vmatpush1.bf16.msra.mxu0 0
        %758 = vmatprep.subr.bf16.mxu0 0
        %759 = vmatpush1.bf16.msra.mxu0 0
        %760 = vmatprep.subr.bf16.mxu0 0
        %761 = vmatpush1.bf16.msra.mxu0 0
        %762 = vmatprep.subr.bf16.mxu0 0
        %763 = vmatpush1.bf16.msra.mxu0 0
        %764 = vmatprep.subr.bf16.mxu0 0
        %765 = vmatpush1.bf16.msra.mxu0 0
        %766 = vmatprep.mubr.bf16.mxu0 0
        %767 = vmatmul.mubr.bf16.gmra.mrb[0].mxu0 %v677
        %v768 = vpop.f32.mrb[0].mxu0
        %v769 = vadd.f32 %v583, %v768
        %v770 = vpop.f32.mrb[0].mxu0
        %v771 = vpop.f32.mrb[0].mxu0
        %v772 = vadd.f32 %v583, %v771
        %v773 = vpop.f32.mrb[0].mxu0
        %774 = vmatprep.mubr.bf16.mxu0 0
        %775 = vmatmul.mubr.bf16.gmra.mrb[0].mxu0 %v680
        %v776 = vpop.f32.mrb[0].mxu0
        %v777 = vadd.f32 %v583, %v776
        %v778 = vpop.f32.mrb[0].mxu0
        %v779 = vpop.f32.mrb[0].mxu0
        %v780 = vadd.f32 %v583, %v779
        %v781 = vpop.f32.mrb[0].mxu0
        %782 = vmatprep.mubr.bf16.mxu0 0
        %783 = vmatmul.mubr.bf16.gmra.mrb[0].mxu0 %v683
        %v784 = vpop.f32.mrb[0].mxu0
        %v785 = vadd.f32 %v583, %v784
        %v786 = vpop.f32.mrb[0].mxu0
        %v787 = vpop.f32.mrb[0].mxu0
        %v788 = vadd.f32 %v583, %v787
        %v789 = vpop.f32.mrb[0].mxu0
        %790 = vmatprep.mubr.bf16.mxu0 0
        %791 = vmatmul.mubr.bf16.gmra.mrb[0].mxu0 %v686
        %v792 = vpop.f32.mrb[0].mxu0
        %v793 = vadd.f32 %v583, %v792
        %v794 = vpop.f32.mrb[0].mxu0
        %v795 = vpop.f32.mrb[0].mxu0
        %v796 = vadd.f32 %v583, %v795
        %v797 = vpop.f32.mrb[0].mxu0
        %798 = vmatprep.mubr.bf16.mxu0 0
        %799 = vmatmul.mubr.bf16.gmra.mrb[0].mxu0 %v689
        %v800 = vpop.f32.mrb[0].mxu0
        %v801 = vadd.f32 %v583, %v800
        %v802 = vpop.f32.mrb[0].mxu0
        %v803 = vpop.f32.mrb[0].mxu0
        %v804 = vadd.f32 %v583, %v803
        %v805 = vpop.f32.mrb[0].mxu0
        %806 = vmatprep.mubr.bf16.mxu0 0
        %807 = vmatmul.mubr.bf16.gmra.mrb[0].mxu0 %v692
        %v808 = vpop.f32.mrb[0].mxu0
        %v809 = vadd.f32 %v583, %v808
        %v810 = vpop.f32.mrb[0].mxu0
        %v811 = vpop.f32.mrb[0].mxu0
        %v812 = vadd.f32 %v583, %v811
        %v813 = vpop.f32.mrb[0].mxu0
        %814 = vmatprep.mubr.bf16.mxu0 0
        %815 = vmatmul.mubr.bf16.gmra.mrb[0].mxu0 %v695
        %v816 = vpop.f32.mrb[0].mxu0
        %v817 = vadd.f32 %v583, %v816
        %v818 = vpop.f32.mrb[0].mxu0
        %v819 = vpop.f32.mrb[0].mxu0
        %v820 = vadd.f32 %v583, %v819
        %v821 = vpop.f32.mrb[0].mxu0
        %822 = vmatprep.mubr.bf16.mxu0 0
        %823 = vmatmul.mubr.bf16.gmra.mrb[0].mxu0 %v698
        %v824 = vpop.f32.mrb[0].mxu0
        %v825 = vadd.f32 %v583, %v824
        %v826 = vpop.f32.mrb[0].mxu0
        %v827 = vpop.f32.mrb[0].mxu0
        %v828 = vadd.f32 %v583, %v827
        %v829 = vpop.f32.mrb[0].mxu0
        %830 = vmatprep.mubr.bf16.mxu0 0
        %831 = vmatmul.mubr.bf16.gmra.mrb[0].mxu0 %v701
        %v832 = vpop.f32.mrb[0].mxu0
        %v833 = vadd.f32 %v583, %v832
        %v834 = vpop.f32.mrb[0].mxu0
        %v835 = vpop.f32.mrb[0].mxu0
        %v836 = vadd.f32 %v583, %v835
        %v837 = vpop.f32.mrb[0].mxu0
        %838 = vmatprep.mubr.bf16.mxu0 0
        %839 = vmatmul.mubr.bf16.gmra.mrb[0].mxu0 %v704
        %v840 = vpop.f32.mrb[0].mxu0
        %v841 = vadd.f32 %v583, %v840
        %v842 = vpop.f32.mrb[0].mxu0
        %v843 = vpop.f32.mrb[0].mxu0
        %v844 = vadd.f32 %v583, %v843
        %v845 = vpop.f32.mrb[0].mxu0
        %846 = vmatprep.mubr.bf16.mxu0 0
        %847 = vmatmul.mubr.bf16.gmra.mrb[0].mxu0 %v707
        %v848 = vpop.f32.mrb[0].mxu0
        %v849 = vadd.f32 %v583, %v848
        %v850 = vpop.f32.mrb[0].mxu0
        %v851 = vpop.f32.mrb[0].mxu0
        %v852 = vadd.f32 %v583, %v851
        %v853 = vpop.f32.mrb[0].mxu0
        %854 = vmatprep.mubr.bf16.mxu0 0
        %855 = vmatmul.mubr.bf16.gmra.mrb[0].mxu0 %v710
        %v856 = vpop.f32.mrb[0].mxu0
        %v857 = vadd.f32 %v583, %v856
        %v858 = vpop.f32.mrb[0].mxu0
        %v859 = vpop.f32.mrb[0].mxu0
        %v860 = vadd.f32 %v583, %v859
        %v861 = vpop.f32.mrb[0].mxu0
        %862 = vmatprep.mubr.bf16.mxu0 0
        %863 = vmatmul.mubr.bf16.gmra.mrb[0].mxu0 %v713
        %v864 = vpop.f32.mrb[0].mxu0
        %v865 = vadd.f32 %v583, %v864
        %v866 = vpop.f32.mrb[0].mxu0
        %v867 = vpop.f32.mrb[0].mxu0
        %v868 = vadd.f32 %v583, %v867
        %v869 = vpop.f32.mrb[0].mxu0
        %870 = vmatprep.mubr.bf16.mxu0 0
        %871 = vmatmul.mubr.bf16.gmra.mrb[0].mxu0 %v716
        %v872 = vpop.f32.mrb[0].mxu0
        %v873 = vadd.f32 %v583, %v872
        %v874 = vpop.f32.mrb[0].mxu0
        %v875 = vpop.f32.mrb[0].mxu0
        %v876 = vadd.f32 %v583, %v875
        %v877 = vpop.f32.mrb[0].mxu0
        %878 = vmatprep.mubr.bf16.mxu0 0
        %879 = vmatmul.mubr.bf16.gmra.mrb[0].mxu0 %v719
        %v880 = vpop.f32.mrb[0].mxu0
        %v881 = vadd.f32 %v583, %v880
        %v882 = vpop.f32.mrb[0].mxu0
        %v883 = vpop.f32.mrb[0].mxu0
        %v884 = vadd.f32 %v583, %v883
        %v885 = vpop.f32.mrb[0].mxu0
        %886 = vmatprep.mubr.bf16.mxu0 0
        %887 = vmatmul.mubr.bf16.gmra.mrb[0].mxu0 %v722
        %v888 = vpop.f32.mrb[0].mxu0
        %v889 = vadd.f32 %v583, %v888
        %v890 = vpop.f32.mrb[0].mxu0
        %v891 = vpop.f32.mrb[0].mxu0
        %v892 = vadd.f32 %v583, %v891
        %v893 = vpop.f32.mrb[0].mxu0
        %894 = vmatprep.mubr.bf16.mxu0 0
        %895 = vmatmul.mubr.bf16.gmra.mrb[0].mxu0 %v725
        %v896 = vpop.f32.mrb[0].mxu0
        %v897 = vadd.f32 %v583, %v896
        %v898 = vpop.f32.mrb[0].mxu0
        %v899 = vpop.f32.mrb[0].mxu0
        %v900 = vadd.f32 %v583, %v899
        %v901 = vpop.f32.mrb[0].mxu0
        %902 = vmatprep.mubr.bf16.mxu0 0
        %903 = vmatmul.mubr.bf16.gmra.mrb[0].mxu0 %v728
        %v904 = vpop.f32.mrb[0].mxu0
        %v905 = vadd.f32 %v583, %v904
        %v906 = vpop.f32.mrb[0].mxu0
        %v907 = vpop.f32.mrb[0].mxu0
        %v908 = vadd.f32 %v583, %v907
        %v909 = vpop.f32.mrb[0].mxu0
        %910 = vdwg.mxu0
        %v911 = vpack.c.bf16 %v772, %v769
        %v912 = vpack.c.bf16 %v780, %v777
        %v913 = vpack.c.bf16 %v788, %v785
        %v914 = vpack.c.bf16 %v796, %v793
        %v915 = vpack.c.bf16 %v804, %v801
        %v916 = vpack.c.bf16 %v812, %v809
        %v917 = vpack.c.bf16 %v820, %v817
        %v918 = vpack.c.bf16 %v828, %v825
        %v919 = vpack.c.bf16 %v836, %v833
        %v920 = vpack.c.bf16 %v844, %v841
        %v921 = vpack.c.bf16 %v852, %v849
        %v922 = vpack.c.bf16 %v860, %v857
        %v923 = vpack.c.bf16 %v868, %v865
        %v924 = vpack.c.bf16 %v876, %v873
        %v925 = vpack.c.bf16 %v884, %v881
        %v926 = vpack.c.bf16 %v892, %v889
        %v927 = vpack.c.bf16 %v900, %v897
        %v928 = vpack.c.bf16 %v908, %v905
        %vm929 = vcmask 125952
        %930 = vst.msk [vmem:[#allocation2] sm:$0xf] %vm929, 0
        %931 = vst.msk [vmem:[#allocation2 + $0x4] sm:$0xf] %vm929, 0
        %vm932 = vcmask 123904
        %vm933 = vsmask.f32 1280
        %vm934 = vmand %vm932, %vm933
        %v935 = vld [vmem:[#allocation2 + $0x8] sm:$0x3]
        %v936 = vsel %vm934, 0, %v935
        %937 = vst [vmem:[#allocation2 + $0x8] sm:$0x3] %v936
        %vm938 = vcmask 125953
        %vm939 = vsmask.f32 7942
        %vm940 = vmand %vm938, %vm939
        %v941 = vld [vmem:[#allocation2 + $0x98] sm:$0xe]
        %v942 = vsel %vm940, 0, %v941
        %943 = vst [vmem:[#allocation2 + $0x98] sm:$0xe] %v942
        %944 = vst.msk [vmem:[#allocation2 + $0x9c] sm:$0xf] %vm929, 0
        %945 = vst.msk [vmem:[#allocation2 + $0xa0] sm:$0xf] %vm929, 0
        %v946 = vld [vmem:[#allocation6] sm:$0xff]
        %v947 = vld [vmem:[#allocation6 + $0x8] sm:$0xff]
        %v948 = vld [vmem:[#allocation6 + $0x10] sm:$0xff]
        %v949 = vld [vmem:[#allocation6 + $0x18] sm:$0xff]
        %v950 = vld [vmem:[#allocation6 + $0x20] sm:$0xff]
        %v951 = vld [vmem:[#allocation6 + $0x28] sm:$0xff]
        %v952 = vld [vmem:[#allocation6 + $0x30] sm:$0xff]
        %v953 = vld [vmem:[#allocation6 + $0x38] sm:$0xff]
        %v954 = vld [vmem:[#allocation6 + $0x40] sm:$0xff]
        %v955 = vld [vmem:[#allocation6 + $0x48] sm:$0xff]
        %v956 = vld [vmem:[#allocation6 + $0x50] sm:$0xff]
        %v957 = vld [vmem:[#allocation6 + $0x58] sm:$0xff]
        %v958 = vld [vmem:[#allocation6 + $0x60] sm:$0xff]
        %v959 = vld [vmem:[#allocation6 + $0x68] sm:$0xff]
        %v960 = vld [vmem:[#allocation6 + $0x70] sm:$0xff]
        %v961 = vld [vmem:[#allocation6 + $0x78] sm:$0xff]
        %v962 = vld [vmem:[#allocation6 + $0x80] sm:$0xff]
        %v963 = vld [vmem:[#allocation6 + $0x88] sm:$0xff]
        %v964 = vld [vmem:[#allocation6 + $0x90] sm:$0xff]
        %v965 = vld [vmem:[#allocation6 + $0x98] sm:$0xff]
        %v966 = vld [vmem:[#allocation6 + $0xa0] sm:$0xff]
        %v967 = vld [vmem:[#allocation6 + $0xa8] sm:$0xff]
        %v968 = vld [vmem:[#allocation6 + $0xb0] sm:$0xff]
        %v969 = vld [vmem:[#allocation6 + $0xb8] sm:$0xff]
        %v970 = vld [vmem:[#allocation6 + $0xc0] sm:$0xff]
        %v971 = vld [vmem:[#allocation6 + $0xc8] sm:$0xff]
        %v972 = vld [vmem:[#allocation6 + $0xd0] sm:$0xff]
        %v973 = vld [vmem:[#allocation6 + $0xd8] sm:$0xff]
        %v974 = vld [vmem:[#allocation6 + $0xe0] sm:$0xff]
        %v975 = vld [vmem:[#allocation6 + $0xe8] sm:$0xff]
        %v976 = vld [vmem:[#allocation6 + $0xf0] sm:$0xff]
        %v977 = vld [vmem:[#allocation6 + $0xf8] sm:$0xff]
        %v978 = vld [vmem:[#allocation6 + $0x100] sm:$0xff]
        %v979 = vld [vmem:[#allocation6 + $0x108] sm:$0xff]
        %v980 = vld [vmem:[#allocation6 + $0x110] sm:$0xff]
        %v981 = vld [vmem:[#allocation6 + $0x118] sm:$0xff]
        %983 = vset.pattern.permute.xlu0 0
        %984 = vperm.xlu0 %983, %v946
        %v985 = vpop.permute.xlu0 %984
        %988 = vset.pattern.permute.xlu0 0
        %989 = vperm.xlu0 %988, %v947
        %v990 = vpop.permute.xlu0 %989
        %993 = vset.pattern.permute.xlu0 0
        %994 = vperm.xlu0 %993, %v948
        %v995 = vpop.permute.xlu0 %994
        %998 = vset.pattern.permute.xlu0 0
        %999 = vperm.xlu0 %998, %v949
        %v1000 = vpop.permute.xlu0 %999
        %1003 = vset.pattern.permute.xlu0 0
        %1004 = vperm.xlu0 %1003, %v950
        %v1005 = vpop.permute.xlu0 %1004
        %1008 = vset.pattern.permute.xlu0 0
        %1009 = vperm.xlu0 %1008, %v951
        %v1010 = vpop.permute.xlu0 %1009
        %1013 = vset.pattern.permute.xlu0 0
        %1014 = vperm.xlu0 %1013, %v952
        %v1015 = vpop.permute.xlu0 %1014
        %1018 = vset.pattern.permute.xlu0 0
        %1019 = vperm.xlu0 %1018, %v953
        %v1020 = vpop.permute.xlu0 %1019
        %1023 = vset.pattern.permute.xlu0 0
        %1024 = vperm.xlu0 %1023, %v954
        %v1025 = vpop.permute.xlu0 %1024
        %1028 = vset.pattern.permute.xlu0 0
        %1029 = vperm.xlu0 %1028, %v955
        %v1030 = vpop.permute.xlu0 %1029
        %1033 = vset.pattern.permute.xlu0 0
        %1034 = vperm.xlu0 %1033, %v956
        %v1035 = vpop.permute.xlu0 %1034
        %1038 = vset.pattern.permute.xlu0 0
        %1039 = vperm.xlu0 %1038, %v957
        %v1040 = vpop.permute.xlu0 %1039
        %1043 = vset.pattern.permute.xlu0 0
        %1044 = vperm.xlu0 %1043, %v958
        %v1045 = vpop.permute.xlu0 %1044
        %1048 = vset.pattern.permute.xlu0 0
        %1049 = vperm.xlu0 %1048, %v959
        %v1050 = vpop.permute.xlu0 %1049
        %1053 = vset.pattern.permute.xlu0 0
        %1054 = vperm.xlu0 %1053, %v960
        %v1055 = vpop.permute.xlu0 %1054
        %1058 = vset.pattern.permute.xlu0 0
        %1059 = vperm.xlu0 %1058, %v961
        %v1060 = vpop.permute.xlu0 %1059
        %1063 = vset.pattern.permute.xlu0 0
        %1064 = vperm.xlu0 %1063, %v962
        %v1065 = vpop.permute.xlu0 %1064
        %1068 = vset.pattern.permute.xlu0 0
        %1069 = vperm.xlu0 %1068, %v963
        %v1070 = vpop.permute.xlu0 %1069
        %1073 = vset.pattern.permute.xlu0 0
        %1074 = vperm.xlu0 %1073, %v964
        %v1075 = vpop.permute.xlu0 %1074
        %1078 = vset.pattern.permute.xlu0 0
        %1079 = vperm.xlu0 %1078, %v965
        %v1080 = vpop.permute.xlu0 %1079
        %1083 = vset.pattern.permute.xlu0 0
        %1084 = vperm.xlu0 %1083, %v966
        %v1085 = vpop.permute.xlu0 %1084
        %1088 = vset.pattern.permute.xlu0 0
        %1089 = vperm.xlu0 %1088, %v967
        %v1090 = vpop.permute.xlu0 %1089
        %1093 = vset.pattern.permute.xlu0 0
        %1094 = vperm.xlu0 %1093, %v968
        %v1095 = vpop.permute.xlu0 %1094
        %1098 = vset.pattern.permute.xlu0 0
        %1099 = vperm.xlu0 %1098, %v969
        %v1100 = vpop.permute.xlu0 %1099
        %1103 = vset.pattern.permute.xlu0 0
        %1104 = vperm.xlu0 %1103, %v970
        %v1105 = vpop.permute.xlu0 %1104
        %1108 = vset.pattern.permute.xlu0 0
        %1109 = vperm.xlu0 %1108, %v971
        %v1110 = vpop.permute.xlu0 %1109
        %1113 = vset.pattern.permute.xlu0 0
        %1114 = vperm.xlu0 %1113, %v972
        %v1115 = vpop.permute.xlu0 %1114
        %1118 = vset.pattern.permute.xlu0 0
        %1119 = vperm.xlu0 %1118, %v973
        %v1120 = vpop.permute.xlu0 %1119
        %1123 = vset.pattern.permute.xlu0 0
        %1124 = vperm.xlu0 %1123, %v974
        %v1125 = vpop.permute.xlu0 %1124
        %1128 = vset.pattern.permute.xlu0 0
        %1129 = vperm.xlu0 %1128, %v975
        %v1130 = vpop.permute.xlu0 %1129
        %1133 = vset.pattern.permute.xlu0 0
        %1134 = vperm.xlu0 %1133, %v976
        %v1135 = vpop.permute.xlu0 %1134
        %1138 = vset.pattern.permute.xlu0 0
        %1139 = vperm.xlu0 %1138, %v977
        %v1140 = vpop.permute.xlu0 %1139
        %1143 = vset.pattern.permute.xlu0 0
        %1144 = vperm.xlu0 %1143, %v978
        %v1145 = vpop.permute.xlu0 %1144
        %1148 = vset.pattern.permute.xlu0 0
        %1149 = vperm.xlu0 %1148, %v979
        %v1150 = vpop.permute.xlu0 %1149
        %1153 = vset.pattern.permute.xlu0 0
        %1154 = vperm.xlu0 %1153, %v980
        %v1155 = vpop.permute.xlu0 %1154
        %1158 = vset.pattern.permute.xlu0 0
        %1159 = vperm.xlu0 %1158, %v981
        %v1160 = vpop.permute.xlu0 %1159
        %v1162 = vmul.f32 %v769, %v985
        %v1163 = vmul.f32 %v772, %v990
        %v1164 = vmul.f32 %v777, %v995
        %v1165 = vmul.f32 %v780, %v1000
        %v1166 = vmul.f32 %v785, %v1005
        %v1167 = vmul.f32 %v788, %v1010
        %v1168 = vmul.f32 %v793, %v1015
        %v1169 = vmul.f32 %v796, %v1020
        %v1170 = vmul.f32 %v801, %v1025
        %v1171 = vmul.f32 %v804, %v1030
        %v1172 = vmul.f32 %v809, %v1035
        %v1173 = vmul.f32 %v812, %v1040
        %v1174 = vmul.f32 %v817, %v1045
        %v1175 = vmul.f32 %v820, %v1050
        %v1176 = vmul.f32 %v825, %v1055
        %v1177 = vmul.f32 %v828, %v1060
        %v1178 = vmul.f32 %v833, %v1065
        %v1179 = vmul.f32 %v836, %v1070
        %v1180 = vmul.f32 %v841, %v1075
        %v1181 = vmul.f32 %v844, %v1080
        %v1182 = vmul.f32 %v849, %v1085
        %v1183 = vmul.f32 %v852, %v1090
        %v1184 = vmul.f32 %v857, %v1095
        %v1185 = vmul.f32 %v860, %v1100
        %v1186 = vmul.f32 %v865, %v1105
        %v1187 = vmul.f32 %v868, %v1110
        %v1188 = vmul.f32 %v873, %v1115
        %v1189 = vmul.f32 %v876, %v1120
        %v1190 = vmul.f32 %v881, %v1125
        %v1191 = vmul.f32 %v884, %v1130
        %v1192 = vmul.f32 %v889, %v1135
        %v1193 = vmul.f32 %v892, %v1140
        %v1194 = vmul.f32 %v897, %v1145
        %v1195 = vmul.f32 %v900, %v1150
        %v1196 = vmul.f32 %v905, %v1155
        %v1197 = vmul.f32 %v908, %v1160
        %v1198 = vpack.c.bf16 %v1163, %v1162
        %v1199 = vpack.c.bf16 %v1165, %v1164
        %v1200 = vpack.c.bf16 %v1167, %v1166
        %v1201 = vpack.c.bf16 %v1169, %v1168
        %v1202 = vpack.c.bf16 %v1171, %v1170
        %v1203 = vpack.c.bf16 %v1173, %v1172
        %v1204 = vpack.c.bf16 %v1175, %v1174
        %v1205 = vpack.c.bf16 %v1177, %v1176
        %v1206 = vpack.c.bf16 %v1179, %v1178
        %v1207 = vpack.c.bf16 %v1181, %v1180
        %v1208 = vpack.c.bf16 %v1183, %v1182
        %v1209 = vpack.c.bf16 %v1185, %v1184
        %v1210 = vpack.c.bf16 %v1187, %v1186
        %v1211 = vpack.c.bf16 %v1189, %v1188
        %v1212 = vpack.c.bf16 %v1191, %v1190
        %v1213 = vpack.c.bf16 %v1193, %v1192
        %v1214 = vpack.c.bf16 %v1195, %v1194
        %v1215 = vpack.c.bf16 %v1197, %v1196
        %v1234 = vunpack.c.l.b16 %v1198
        %v1235 = vunpack.c.h.b16 %v1198
        %v1236 = vunpack.c.l.b16 %v1199
        %v1237 = vunpack.c.h.b16 %v1199
        %v1238 = vunpack.c.l.b16 %v1200
        %v1239 = vunpack.c.h.b16 %v1200
        %v1240 = vunpack.c.l.b16 %v1201
        %v1241 = vunpack.c.h.b16 %v1201
        %v1242 = vunpack.c.l.b16 %v1202
        %v1243 = vunpack.c.h.b16 %v1202
        %v1244 = vunpack.c.l.b16 %v1203
        %v1245 = vunpack.c.h.b16 %v1203
        %v1246 = vunpack.c.l.b16 %v1204
        %v1247 = vunpack.c.h.b16 %v1204
        %v1248 = vunpack.c.l.b16 %v1205
        %v1249 = vunpack.c.h.b16 %v1205
        %v1250 = vunpack.c.l.b16 %v1206
        %v1251 = vunpack.c.h.b16 %v1206
        %v1252 = vunpack.c.l.b16 %v1207
        %v1253 = vunpack.c.h.b16 %v1207
        %v1254 = vunpack.c.l.b16 %v1208
        %v1255 = vunpack.c.h.b16 %v1208
        %v1256 = vunpack.c.l.b16 %v1209
        %v1257 = vunpack.c.h.b16 %v1209
        %v1258 = vunpack.c.l.b16 %v1210
        %v1259 = vunpack.c.h.b16 %v1210
        %v1260 = vunpack.c.l.b16 %v1211
        %v1261 = vunpack.c.h.b16 %v1211
        %v1262 = vunpack.c.l.b16 %v1212
        %v1263 = vunpack.c.h.b16 %v1212
        %v1264 = vunpack.c.l.b16 %v1213
        %v1265 = vunpack.c.h.b16 %v1213
        %v1266 = vunpack.c.l.b16 %v1214
        %v1267 = vunpack.c.h.b16 %v1214
        %v1268 = vunpack.c.l.b16 %v1215
        %v1269 = vunpack.c.h.b16 %v1215
        %v1270 = vpack.c.b16 %v1234, %v1234
        %v1271 = vpack.c.b16 %v1235, %v1235
        %v1272 = vpack.c.b16 %v1236, %v1236
        %v1273 = vpack.c.b16 %v1237, %v1237
        %v1274 = vpack.c.b16 %v1238, %v1238
        %v1275 = vpack.c.b16 %v1239, %v1239
        %v1276 = vpack.c.b16 %v1240, %v1240
        %v1277 = vpack.c.b16 %v1241, %v1241
        %v1278 = vpack.c.b16 %v1242, %v1242
        %v1279 = vpack.c.b16 %v1243, %v1243
        %v1280 = vpack.c.b16 %v1244, %v1244
        %v1281 = vpack.c.b16 %v1245, %v1245
        %v1282 = vpack.c.b16 %v1246, %v1246
        %v1283 = vpack.c.b16 %v1247, %v1247
        %v1284 = vpack.c.b16 %v1248, %v1248
        %v1285 = vpack.c.b16 %v1249, %v1249
        %v1286 = vpack.c.b16 %v1250, %v1250
        %v1287 = vpack.c.b16 %v1251, %v1251
        %v1288 = vpack.c.b16 %v1252, %v1252
        %v1289 = vpack.c.b16 %v1253, %v1253
        %v1290 = vpack.c.b16 %v1254, %v1254
        %v1291 = vpack.c.b16 %v1255, %v1255
        %v1292 = vpack.c.b16 %v1256, %v1256
        %v1293 = vpack.c.b16 %v1257, %v1257
        %v1294 = vpack.c.b16 %v1258, %v1258
        %v1295 = vpack.c.b16 %v1259, %v1259
        %v1296 = vpack.c.b16 %v1260, %v1260
        %v1297 = vpack.c.b16 %v1261, %v1261
        %v1298 = vpack.c.b16 %v1262, %v1262
        %v1299 = vpack.c.b16 %v1263, %v1263
        %v1300 = vpack.c.b16 %v1264, %v1264
        %v1301 = vpack.c.b16 %v1265, %v1265
        %v1302 = vpack.c.b16 %v1266, %v1266
        %v1303 = vpack.c.b16 %v1267, %v1267
        %v1304 = vpack.c.b16 %v1268, %v1268
        %v1305 = vpack.c.b16 %v1269, %v1269
        %vm1306 = vsmask.f32 5392
        %vm1307 = vmor %vm933, %vm1306
        %v1309 = vshrl.u32 %v1270, 16
        %v1311 = vrot.slane %v1309, 6
        %v1312 = vshll.u32 %v1270, 16
        %v1314 = vrot.slane %v1312, 7
        %v1315 = vor.u32 %v1311, %v1314
        %v1316 = vrot.slane %v1315, 4
        %v1318 = vshrl.u32 %v1271, 16
        %v1320 = vrot.slane %v1318, 6
        %v1321 = vshll.u32 %v1271, 16
        %v1323 = vrot.slane %v1321, 7
        %v1324 = vor.u32 %v1320, %v1323
        %v1325 = vsel %vm1307, %v1316, %v1324
        %v1326 = vrot.slane %v1324, 4
        %v1328 = vshrl.u32 %v1272, 16
        %v1330 = vrot.slane %v1328, 6
        %v1331 = vshll.u32 %v1272, 16
        %v1333 = vrot.slane %v1331, 7
        %v1334 = vor.u32 %v1330, %v1333
        %v1335 = vsel %vm1307, %v1326, %v1334
        %v1336 = vrot.slane %v1334, 4
        %v1338 = vshrl.u32 %v1273, 16
        %v1340 = vrot.slane %v1338, 6
        %v1341 = vshll.u32 %v1273, 16
        %v1343 = vrot.slane %v1341, 7
        %v1344 = vor.u32 %v1340, %v1343
        %v1345 = vsel %vm1307, %v1336, %v1344
        %v1346 = vrot.slane %v1344, 4
        %v1348 = vshrl.u32 %v1274, 16
        %v1350 = vrot.slane %v1348, 6
        %v1351 = vshll.u32 %v1274, 16
        %v1353 = vrot.slane %v1351, 7
        %v1354 = vor.u32 %v1350, %v1353
        %v1355 = vsel %vm1307, %v1346, %v1354
        %v1356 = vrot.slane %v1354, 4
        %v1358 = vshrl.u32 %v1275, 16
        %v1360 = vrot.slane %v1358, 6
        %v1361 = vshll.u32 %v1275, 16
        %v1363 = vrot.slane %v1361, 7
        %v1364 = vor.u32 %v1360, %v1363
        %v1365 = vsel %vm1307, %v1356, %v1364
        %v1366 = vrot.slane %v1364, 4
        %v1368 = vshrl.u32 %v1276, 16
        %v1370 = vrot.slane %v1368, 6
        %v1371 = vshll.u32 %v1276, 16
        %v1373 = vrot.slane %v1371, 7
        %v1374 = vor.u32 %v1370, %v1373
        %v1375 = vsel %vm1307, %v1366, %v1374
        %v1376 = vrot.slane %v1374, 4
        %v1378 = vshrl.u32 %v1277, 16
        %v1380 = vrot.slane %v1378, 6
        %v1381 = vshll.u32 %v1277, 16
        %v1383 = vrot.slane %v1381, 7
        %v1384 = vor.u32 %v1380, %v1383
        %v1385 = vsel %vm1307, %v1376, %v1384
        %v1386 = vrot.slane %v1384, 4
        %v1388 = vshrl.u32 %v1278, 16
        %v1390 = vrot.slane %v1388, 6
        %v1391 = vshll.u32 %v1278, 16
        %v1393 = vrot.slane %v1391, 7
        %v1394 = vor.u32 %v1390, %v1393
        %v1395 = vsel %vm1307, %v1386, %v1394
        %v1396 = vrot.slane %v1394, 4
        %v1398 = vshrl.u32 %v1279, 16
        %v1400 = vrot.slane %v1398, 6
        %v1401 = vshll.u32 %v1279, 16
        %v1403 = vrot.slane %v1401, 7
        %v1404 = vor.u32 %v1400, %v1403
        %v1405 = vsel %vm1307, %v1396, %v1404
        %v1406 = vrot.slane %v1404, 4
        %v1408 = vshrl.u32 %v1280, 16
        %v1410 = vrot.slane %v1408, 6
        %v1411 = vshll.u32 %v1280, 16
        %v1413 = vrot.slane %v1411, 7
        %v1414 = vor.u32 %v1410, %v1413
        %v1415 = vsel %vm1307, %v1406, %v1414
        %v1416 = vrot.slane %v1414, 4
        %v1418 = vshrl.u32 %v1281, 16
        %v1420 = vrot.slane %v1418, 6
        %v1421 = vshll.u32 %v1281, 16
        %v1423 = vrot.slane %v1421, 7
        %v1424 = vor.u32 %v1420, %v1423
        %v1425 = vsel %vm1307, %v1416, %v1424
        %v1426 = vrot.slane %v1424, 4
        %v1428 = vshrl.u32 %v1282, 16
        %v1430 = vrot.slane %v1428, 6
        %v1431 = vshll.u32 %v1282, 16
        %v1433 = vrot.slane %v1431, 7
        %v1434 = vor.u32 %v1430, %v1433
        %v1435 = vsel %vm1307, %v1426, %v1434
        %v1436 = vrot.slane %v1434, 4
        %v1438 = vshrl.u32 %v1283, 16
        %v1440 = vrot.slane %v1438, 6
        %v1441 = vshll.u32 %v1283, 16
        %v1443 = vrot.slane %v1441, 7
        %v1444 = vor.u32 %v1440, %v1443
        %v1445 = vsel %vm1307, %v1436, %v1444
        %v1446 = vrot.slane %v1444, 4
        %v1448 = vshrl.u32 %v1284, 16
        %v1450 = vrot.slane %v1448, 6
        %v1451 = vshll.u32 %v1284, 16
        %v1453 = vrot.slane %v1451, 7
        %v1454 = vor.u32 %v1450, %v1453
        %v1455 = vsel %vm1307, %v1446, %v1454
        %v1456 = vrot.slane %v1454, 4
        %v1458 = vshrl.u32 %v1285, 16
        %v1460 = vrot.slane %v1458, 6
        %v1461 = vshll.u32 %v1285, 16
        %v1463 = vrot.slane %v1461, 7
        %v1464 = vor.u32 %v1460, %v1463
        %v1465 = vsel %vm1307, %v1456, %v1464
        %v1466 = vrot.slane %v1464, 4
        %v1468 = vshrl.u32 %v1286, 16
        %v1470 = vrot.slane %v1468, 6
        %v1471 = vshll.u32 %v1286, 16
        %v1473 = vrot.slane %v1471, 7
        %v1474 = vor.u32 %v1470, %v1473
        %v1475 = vsel %vm1307, %v1466, %v1474
        %v1476 = vrot.slane %v1474, 4
        %v1478 = vshrl.u32 %v1287, 16
        %v1480 = vrot.slane %v1478, 6
        %v1481 = vshll.u32 %v1287, 16
        %v1483 = vrot.slane %v1481, 7
        %v1484 = vor.u32 %v1480, %v1483
        %v1485 = vsel %vm1307, %v1476, %v1484
        %v1486 = vrot.slane %v1484, 4
        %v1488 = vshrl.u32 %v1288, 16
        %v1490 = vrot.slane %v1488, 6
        %v1491 = vshll.u32 %v1288, 16
        %v1493 = vrot.slane %v1491, 7
        %v1494 = vor.u32 %v1490, %v1493
        %v1495 = vsel %vm1307, %v1486, %v1494
        %v1496 = vrot.slane %v1494, 4
        %v1498 = vshrl.u32 %v1289, 16
        %v1500 = vrot.slane %v1498, 6
        %v1501 = vshll.u32 %v1289, 16
        %v1503 = vrot.slane %v1501, 7
        %v1504 = vor.u32 %v1500, %v1503
        %v1505 = vsel %vm1307, %v1496, %v1504
        %v1506 = vrot.slane %v1504, 4
        %v1508 = vshrl.u32 %v1290, 16
        %v1510 = vrot.slane %v1508, 6
        %v1511 = vshll.u32 %v1290, 16
        %v1513 = vrot.slane %v1511, 7
        %v1514 = vor.u32 %v1510, %v1513
        %v1515 = vsel %vm1307, %v1506, %v1514
        %v1516 = vrot.slane %v1514, 4
        %v1518 = vshrl.u32 %v1291, 16
        %v1520 = vrot.slane %v1518, 6
        %v1521 = vshll.u32 %v1291, 16
        %v1523 = vrot.slane %v1521, 7
        %v1524 = vor.u32 %v1520, %v1523
        %v1525 = vsel %vm1307, %v1516, %v1524
        %v1526 = vrot.slane %v1524, 4
        %v1528 = vshrl.u32 %v1292, 16
        %v1530 = vrot.slane %v1528, 6
        %v1531 = vshll.u32 %v1292, 16
        %v1533 = vrot.slane %v1531, 7
        %v1534 = vor.u32 %v1530, %v1533
        %v1535 = vsel %vm1307, %v1526, %v1534
        %v1536 = vrot.slane %v1534, 4
        %v1538 = vshrl.u32 %v1293, 16
        %v1540 = vrot.slane %v1538, 6
        %v1541 = vshll.u32 %v1293, 16
        %v1543 = vrot.slane %v1541, 7
        %v1544 = vor.u32 %v1540, %v1543
        %v1545 = vsel %vm1307, %v1536, %v1544
        %v1546 = vrot.slane %v1544, 4
        %v1548 = vshrl.u32 %v1294, 16
        %v1550 = vrot.slane %v1548, 6
        %v1551 = vshll.u32 %v1294, 16
        %v1553 = vrot.slane %v1551, 7
        %v1554 = vor.u32 %v1550, %v1553
        %v1555 = vsel %vm1307, %v1546, %v1554
        %v1556 = vrot.slane %v1554, 4
        %v1558 = vshrl.u32 %v1295, 16
        %v1560 = vrot.slane %v1558, 6
        %v1561 = vshll.u32 %v1295, 16
        %v1563 = vrot.slane %v1561, 7
        %v1564 = vor.u32 %v1560, %v1563
        %v1565 = vsel %vm1307, %v1556, %v1564
        %v1566 = vrot.slane %v1564, 4
        %v1568 = vshrl.u32 %v1296, 16
        %v1570 = vrot.slane %v1568, 6
        %v1571 = vshll.u32 %v1296, 16
        %v1573 = vrot.slane %v1571, 7
        %v1574 = vor.u32 %v1570, %v1573
        %v1575 = vsel %vm1307, %v1566, %v1574
        %v1576 = vrot.slane %v1574, 4
        %v1578 = vshrl.u32 %v1297, 16
        %v1580 = vrot.slane %v1578, 6
        %v1581 = vshll.u32 %v1297, 16
        %v1583 = vrot.slane %v1581, 7
        %v1584 = vor.u32 %v1580, %v1583
        %v1585 = vsel %vm1307, %v1576, %v1584
        %v1586 = vrot.slane %v1584, 4
        %v1588 = vshrl.u32 %v1298, 16
        %v1590 = vrot.slane %v1588, 6
        %v1591 = vshll.u32 %v1298, 16
        %v1593 = vrot.slane %v1591, 7
        %v1594 = vor.u32 %v1590, %v1593
        %v1595 = vsel %vm1307, %v1586, %v1594
        %v1596 = vrot.slane %v1594, 4
        %v1598 = vshrl.u32 %v1299, 16
        %v1600 = vrot.slane %v1598, 6
        %v1601 = vshll.u32 %v1299, 16
        %v1603 = vrot.slane %v1601, 7
        %v1604 = vor.u32 %v1600, %v1603
        %v1605 = vsel %vm1307, %v1596, %v1604
        %v1606 = vrot.slane %v1604, 4
        %v1608 = vshrl.u32 %v1300, 16
        %v1610 = vrot.slane %v1608, 6
        %v1611 = vshll.u32 %v1300, 16
        %v1613 = vrot.slane %v1611, 7
        %v1614 = vor.u32 %v1610, %v1613
        %v1615 = vsel %vm1307, %v1606, %v1614
        %v1616 = vrot.slane %v1614, 4
        %v1618 = vshrl.u32 %v1301, 16
        %v1620 = vrot.slane %v1618, 6
        %v1621 = vshll.u32 %v1301, 16
        %v1623 = vrot.slane %v1621, 7
        %v1624 = vor.u32 %v1620, %v1623
        %v1625 = vsel %vm1307, %v1616, %v1624
        %v1626 = vrot.slane %v1624, 4
        %v1628 = vshrl.u32 %v1302, 16
        %v1630 = vrot.slane %v1628, 6
        %v1631 = vshll.u32 %v1302, 16
        %v1633 = vrot.slane %v1631, 7
        %v1634 = vor.u32 %v1630, %v1633
        %v1635 = vsel %vm1307, %v1626, %v1634
        %v1636 = vrot.slane %v1634, 4
        %v1638 = vshrl.u32 %v1303, 16
        %v1640 = vrot.slane %v1638, 6
        %v1641 = vshll.u32 %v1303, 16
        %v1643 = vrot.slane %v1641, 7
        %v1644 = vor.u32 %v1640, %v1643
        %v1645 = vsel %vm1307, %v1636, %v1644
        %v1646 = vrot.slane %v1644, 4
        %v1648 = vshrl.u32 %v1304, 16
        %v1650 = vrot.slane %v1648, 6
        %v1651 = vshll.u32 %v1304, 16
        %v1653 = vrot.slane %v1651, 7
        %v1654 = vor.u32 %v1650, %v1653
        %v1655 = vsel %vm1307, %v1646, %v1654
        %v1656 = vrot.slane %v1654, 4
        %v1658 = vshrl.u32 %v1305, 16
        %v1660 = vrot.slane %v1658, 6
        %v1661 = vshll.u32 %v1305, 16
        %v1663 = vrot.slane %v1661, 7
        %v1664 = vor.u32 %v1660, %v1663
        %v1665 = vsel %vm1307, %v1656, %v1664
        %v1666 = vrot.slane %v1664, 4
        %v1704 = vld [vmem:[#allocation2 + $0x8] sm:$0xe]
        %v1705 = vsel %vm940, %v1315, %v1704
        %1706 = vst [vmem:[#allocation2 + $0x8] sm:$0xe] %v1705
        %1707 = vst.msk [vmem:[#allocation2 + $0xc] sm:$0xf] %vm929, %v1325
        %1708 = vst.msk [vmem:[#allocation2 + $0x10] sm:$0xf] %vm929, %v1335
        %1709 = vst.msk [vmem:[#allocation2 + $0x14] sm:$0xf] %vm929, %v1345
        %1710 = vst.msk [vmem:[#allocation2 + $0x18] sm:$0xf] %vm929, %v1355
        %1711 = vst.msk [vmem:[#allocation2 + $0x1c] sm:$0xf] %vm929, %v1365
        %1712 = vst.msk [vmem:[#allocation2 + $0x20] sm:$0xf] %vm929, %v1375
        %1713 = vst.msk [vmem:[#allocation2 + $0x24] sm:$0xf] %vm929, %v1385
        %1714 = vst.msk [vmem:[#allocation2 + $0x28] sm:$0xf] %vm929, %v1395
        %1715 = vst.msk [vmem:[#allocation2 + $0x2c] sm:$0xf] %vm929, %v1405
        %1716 = vst.msk [vmem:[#allocation2 + $0x30] sm:$0xf] %vm929, %v1415
        %1717 = vst.msk [vmem:[#allocation2 + $0x34] sm:$0xf] %vm929, %v1425
        %1718 = vst.msk [vmem:[#allocation2 + $0x38] sm:$0xf] %vm929, %v1435
        %1719 = vst.msk [vmem:[#allocation2 + $0x3c] sm:$0xf] %vm929, %v1445
        %1720 = vst.msk [vmem:[#allocation2 + $0x40] sm:$0xf] %vm929, %v1455
        %1721 = vst.msk [vmem:[#allocation2 + $0x44] sm:$0xf] %vm929, %v1465
        %1722 = vst.msk [vmem:[#allocation2 + $0x48] sm:$0xf] %vm929, %v1475
        %1723 = vst.msk [vmem:[#allocation2 + $0x4c] sm:$0xf] %vm929, %v1485
        %1724 = vst.msk [vmem:[#allocation2 + $0x50] sm:$0xf] %vm929, %v1495
        %1725 = vst.msk [vmem:[#allocation2 + $0x54] sm:$0xf] %vm929, %v1505
        %1726 = vst.msk [vmem:[#allocation2 + $0x58] sm:$0xf] %vm929, %v1515
        %1727 = vst.msk [vmem:[#allocation2 + $0x5c] sm:$0xf] %vm929, %v1525
        %1728 = vst.msk [vmem:[#allocation2 + $0x60] sm:$0xf] %vm929, %v1535
        %1729 = vst.msk [vmem:[#allocation2 + $0x64] sm:$0xf] %vm929, %v1545
        %1730 = vst.msk [vmem:[#allocation2 + $0x68] sm:$0xf] %vm929, %v1555
        %1731 = vst.msk [vmem:[#allocation2 + $0x6c] sm:$0xf] %vm929, %v1565
        %1732 = vst.msk [vmem:[#allocation2 + $0x70] sm:$0xf] %vm929, %v1575
        %1733 = vst.msk [vmem:[#allocation2 + $0x74] sm:$0xf] %vm929, %v1585
        %1734 = vst.msk [vmem:[#allocation2 + $0x78] sm:$0xf] %vm929, %v1595
        %1735 = vst.msk [vmem:[#allocation2 + $0x7c] sm:$0xf] %vm929, %v1605
        %1736 = vst.msk [vmem:[#allocation2 + $0x80] sm:$0xf] %vm929, %v1615
        %1737 = vst.msk [vmem:[#allocation2 + $0x84] sm:$0xf] %vm929, %v1625
        %1738 = vst.msk [vmem:[#allocation2 + $0x88] sm:$0xf] %vm929, %v1635
        %1739 = vst.msk [vmem:[#allocation2 + $0x8c] sm:$0xf] %vm929, %v1645
        %1740 = vst.msk [vmem:[#allocation2 + $0x90] sm:$0xf] %vm929, %v1655
        %1741 = vst.msk [vmem:[#allocation2 + $0x94] sm:$0xf] %vm929, %v1665
        %v1742 = vld [vmem:[#allocation2 + $0x98] sm:$0x3]
        %v1743 = vsel %vm934, %v1666, %v1742
        %1744 = vst [vmem:[#allocation2 + $0x98] sm:$0x3] %v1743
        %v1745 = vld [vmem:[#allocation2] sm:$0xf]
        %v1746 = vld [vmem:[#allocation2 + $0x4] sm:$0xf]
        %v1747 = vld [vmem:[#allocation2 + $0x8] sm:$0xf]
        %v1748 = vld [vmem:[#allocation2 + $0xc] sm:$0xf]
        %v1749 = vld [vmem:[#allocation2 + $0x10] sm:$0xf]
        %v1750 = vld [vmem:[#allocation2 + $0x14] sm:$0xf]
        %v1751 = vld [vmem:[#allocation2 + $0x18] sm:$0xf]
        %v1752 = vld [vmem:[#allocation2 + $0x1c] sm:$0xf]
        %v1753 = vld [vmem:[#allocation2 + $0x20] sm:$0xf]
        %v1754 = vld [vmem:[#allocation2 + $0x24] sm:$0xf]
        %v1755 = vld [vmem:[#allocation2 + $0x28] sm:$0xf]
        %v1756 = vld [vmem:[#allocation2 + $0x2c] sm:$0xf]
        %v1757 = vld [vmem:[#allocation2 + $0x30] sm:$0xf]
        %v1758 = vld [vmem:[#allocation2 + $0x34] sm:$0xf]
        %v1759 = vld [vmem:[#allocation2 + $0x38] sm:$0xf]
        %v1760 = vld [vmem:[#allocation2 + $0x3c] sm:$0xf]
        %v1761 = vld [vmem:[#allocation2 + $0x40] sm:$0xf]
        %v1762 = vld [vmem:[#allocation2 + $0x44] sm:$0xf]
        %v1763 = vld [vmem:[#allocation2 + $0x48] sm:$0xf]
        %v1764 = vld [vmem:[#allocation2 + $0x4c] sm:$0xf]
        %v1765 = vld [vmem:[#allocation2 + $0x50] sm:$0xf]
        %v1766 = vld [vmem:[#allocation2 + $0x54] sm:$0xf]
        %v1767 = vld [vmem:[#allocation2 + $0x58] sm:$0xf]
        %v1768 = vld [vmem:[#allocation2 + $0x5c] sm:$0xf]
        %v1769 = vld [vmem:[#allocation2 + $0x60] sm:$0xf]
        %v1770 = vld [vmem:[#allocation2 + $0x64] sm:$0xf]
        %v1771 = vld [vmem:[#allocation2 + $0x68] sm:$0xf]
        %v1772 = vld [vmem:[#allocation2 + $0x6c] sm:$0xf]
        %v1773 = vld [vmem:[#allocation2 + $0x70] sm:$0xf]
        %v1774 = vld [vmem:[#allocation2 + $0x74] sm:$0xf]
        %v1775 = vld [vmem:[#allocation2 + $0x78] sm:$0xf]
        %v1776 = vld [vmem:[#allocation2 + $0x7c] sm:$0xf]
        %v1777 = vld [vmem:[#allocation2 + $0x80] sm:$0xf]
        %v1778 = vld [vmem:[#allocation2 + $0x84] sm:$0xf]
        %v1779 = vld [vmem:[#allocation2 + $0x88] sm:$0xf]
        %v1780 = vld [vmem:[#allocation2 + $0x8c] sm:$0xf]
        %v1781 = vld [vmem:[#allocation2 + $0x90] sm:$0x1]
        %v1782 = vld [vmem:[#allocation2] sm:$0xe]
        %v1783 = vld [vmem:[#allocation2 + $0x8] sm:$0xe]
        %v1784 = vld [vmem:[#allocation2 + $0x90] sm:$0xf]
        %v1785 = vld [vmem:[#allocation2 + $0x94] sm:$0xf]
        %v1786 = vld [vmem:[#allocation2 + $0x98] sm:$0x1]
        %v1787 = vld [vmem:[#allocation2 + $0x98] sm:$0x3]
        %v1788 = vld [vmem:[#allocation2 + $0x8] sm:$0xc]
        %v1789 = vld [vmem:[#allocation2 + $0x10] sm:$0xc]
        %v1790 = vld [vmem:[#allocation2 + $0x98] sm:$0xf]
        %v1791 = vld [vmem:[#allocation2 + $0x9c] sm:$0xf]
        %v1792 = vld [vmem:[#allocation2 + $0xa0] sm:$0x3]
        %v1793 = vld [vmem:[#allocation2 + $0xa0] sm:$0x7]
        %v1794 = vld [vmem:[#allocation2 + $0x10] sm:$0x8]
        %v1831 = vunpack.c.l.b16 %v1745
        %v1832 = vunpack.c.l.b16 %v1746
        %v1833 = vunpack.c.l.b16 %v1747
        %v1834 = vunpack.c.l.b16 %v1748
        %v1835 = vunpack.c.l.b16 %v1749
        %v1836 = vunpack.c.l.b16 %v1750
        %v1837 = vunpack.c.l.b16 %v1751
        %v1838 = vunpack.c.l.b16 %v1752
        %v1839 = vunpack.c.l.b16 %v1753
        %v1840 = vunpack.c.l.b16 %v1754
        %v1841 = vunpack.c.l.b16 %v1755
        %v1842 = vunpack.c.l.b16 %v1756
        %v1843 = vunpack.c.l.b16 %v1757
        %v1844 = vunpack.c.l.b16 %v1758
        %v1845 = vunpack.c.l.b16 %v1759
        %v1846 = vunpack.c.l.b16 %v1760
        %v1847 = vunpack.c.l.b16 %v1761
        %v1848 = vunpack.c.l.b16 %v1762
        %v1849 = vunpack.c.l.b16 %v1763
        %v1850 = vunpack.c.l.b16 %v1764
        %v1851 = vunpack.c.l.b16 %v1765
        %v1852 = vunpack.c.l.b16 %v1766
        %v1853 = vunpack.c.l.b16 %v1767
        %v1854 = vunpack.c.l.b16 %v1768
        %v1855 = vunpack.c.l.b16 %v1769
        %v1856 = vunpack.c.l.b16 %v1770
        %v1857 = vunpack.c.l.b16 %v1771
        %v1858 = vunpack.c.l.b16 %v1772
        %v1859 = vunpack.c.l.b16 %v1773
        %v1860 = vunpack.c.l.b16 %v1774
        %v1861 = vunpack.c.l.b16 %v1775
        %v1862 = vunpack.c.l.b16 %v1776
        %v1863 = vunpack.c.l.b16 %v1777
        %v1864 = vunpack.c.l.b16 %v1778
        %v1865 = vunpack.c.l.b16 %v1779
        %v1866 = vunpack.c.l.b16 %v1780
        %v1867 = vpack.c.b16 %v1832, %v1831
        %v1868 = vpack.c.b16 %v1834, %v1833
        %v1869 = vpack.c.b16 %v1836, %v1835
        %v1870 = vpack.c.b16 %v1838, %v1837
        %v1871 = vpack.c.b16 %v1840, %v1839
        %v1872 = vpack.c.b16 %v1842, %v1841
        %v1873 = vpack.c.b16 %v1844, %v1843
        %v1874 = vpack.c.b16 %v1846, %v1845
        %v1875 = vpack.c.b16 %v1848, %v1847
        %v1876 = vpack.c.b16 %v1850, %v1849
        %v1877 = vpack.c.b16 %v1852, %v1851
        %v1878 = vpack.c.b16 %v1854, %v1853
        %v1879 = vpack.c.b16 %v1856, %v1855
        %v1880 = vpack.c.b16 %v1858, %v1857
        %v1881 = vpack.c.b16 %v1860, %v1859
        %v1882 = vpack.c.b16 %v1862, %v1861
        %v1883 = vpack.c.b16 %v1864, %v1863
        %v1884 = vpack.c.b16 %v1866, %v1865
        %v1886 = vunpack.c.l.b16 %v1781
        %v1887 = vpack.c.b16 %v1886, %v1886
        %vm1888 = vsmask.f32 7424
        %v1890 = vshrl.u32 %v1867, 16
        %v1892 = vshll.u32 %v1867, 16
        %v1894 = vrot.slane %v1892, 1
        %v1895 = vor.u32 %v1890, %v1894
        %v1897 = vshll.u32 %v1868, 16
        %v1899 = vrot.slane %v1897, 1
        %v1900 = vsel %vm1888, %v1895, %v1899
        %v1901 = vshrl.u32 %v1868, 16
        %v1903 = vor.u32 %v1901, %v1899
        %v1905 = vshll.u32 %v1869, 16
        %v1907 = vrot.slane %v1905, 1
        %v1908 = vsel %vm1888, %v1903, %v1907
        %v1909 = vshrl.u32 %v1869, 16
        %v1911 = vor.u32 %v1909, %v1907
        %v1913 = vshll.u32 %v1870, 16
        %v1915 = vrot.slane %v1913, 1
        %v1916 = vsel %vm1888, %v1911, %v1915
        %v1917 = vshrl.u32 %v1870, 16
        %v1919 = vor.u32 %v1917, %v1915
        %v1921 = vshll.u32 %v1871, 16
        %v1923 = vrot.slane %v1921, 1
        %v1924 = vsel %vm1888, %v1919, %v1923
        %v1925 = vshrl.u32 %v1871, 16
        %v1927 = vor.u32 %v1925, %v1923
        %v1929 = vshll.u32 %v1872, 16
        %v1931 = vrot.slane %v1929, 1
        %v1932 = vsel %vm1888, %v1927, %v1931
        %v1933 = vshrl.u32 %v1872, 16
        %v1935 = vor.u32 %v1933, %v1931
        %v1937 = vshll.u32 %v1873, 16
        %v1939 = vrot.slane %v1937, 1
        %v1940 = vsel %vm1888, %v1935, %v1939
        %v1941 = vshrl.u32 %v1873, 16
        %v1943 = vor.u32 %v1941, %v1939
        %v1945 = vshll.u32 %v1874, 16
        %v1947 = vrot.slane %v1945, 1
        %v1948 = vsel %vm1888, %v1943, %v1947
        %v1949 = vshrl.u32 %v1874, 16
        %v1951 = vor.u32 %v1949, %v1947
        %v1953 = vshll.u32 %v1875, 16
        %v1955 = vrot.slane %v1953, 1
        %v1956 = vsel %vm1888, %v1951, %v1955
        %v1957 = vshrl.u32 %v1875, 16
        %v1959 = vor.u32 %v1957, %v1955
        %v1961 = vshll.u32 %v1876, 16
        %v1963 = vrot.slane %v1961, 1
        %v1964 = vsel %vm1888, %v1959, %v1963
        %v1965 = vshrl.u32 %v1876, 16
        %v1967 = vor.u32 %v1965, %v1963
        %v1969 = vshll.u32 %v1877, 16
        %v1971 = vrot.slane %v1969, 1
        %v1972 = vsel %vm1888, %v1967, %v1971
        %v1973 = vshrl.u32 %v1877, 16
        %v1975 = vor.u32 %v1973, %v1971
        %v1977 = vshll.u32 %v1878, 16
        %v1979 = vrot.slane %v1977, 1
        %v1980 = vsel %vm1888, %v1975, %v1979
        %v1981 = vshrl.u32 %v1878, 16
        %v1983 = vor.u32 %v1981, %v1979
        %v1985 = vshll.u32 %v1879, 16
        %v1987 = vrot.slane %v1985, 1
        %v1988 = vsel %vm1888, %v1983, %v1987
        %v1989 = vshrl.u32 %v1879, 16
        %v1991 = vor.u32 %v1989, %v1987
        %v1993 = vshll.u32 %v1880, 16
        %v1995 = vrot.slane %v1993, 1
        %v1996 = vsel %vm1888, %v1991, %v1995
        %v1997 = vshrl.u32 %v1880, 16
        %v1999 = vor.u32 %v1997, %v1995
        %v2001 = vshll.u32 %v1881, 16
        %v2003 = vrot.slane %v2001, 1
        %v2004 = vsel %vm1888, %v1999, %v2003
        %v2005 = vshrl.u32 %v1881, 16
        %v2007 = vor.u32 %v2005, %v2003
        %v2009 = vshll.u32 %v1882, 16
        %v2011 = vrot.slane %v2009, 1
        %v2012 = vsel %vm1888, %v2007, %v2011
        %v2013 = vshrl.u32 %v1882, 16
        %v2015 = vor.u32 %v2013, %v2011
        %v2017 = vshll.u32 %v1883, 16
        %v2019 = vrot.slane %v2017, 1
        %v2020 = vsel %vm1888, %v2015, %v2019
        %v2021 = vshrl.u32 %v1883, 16
        %v2023 = vor.u32 %v2021, %v2019
        %v2025 = vshll.u32 %v1884, 16
        %v2027 = vrot.slane %v2025, 1
        %v2028 = vsel %vm1888, %v2023, %v2027
        %v2029 = vshrl.u32 %v1884, 16
        %v2031 = vor.u32 %v2029, %v2027
        %v2033 = vshll.u32 %v1887, 16
        %v2035 = vrot.slane %v2033, 1
        %v2036 = vsel %vm1888, %v2031, %v2035
        %2037 = vrot.lane.b32.xlu0 %v1900, 16
        %v2038 = vpop.permute.xlu0 %2037
        %2039 = vrot.lane.b32.xlu0 %v1908, 16
        %v2040 = vpop.permute.xlu0 %2039
        %2041 = vrot.lane.b32.xlu0 %v1916, 16
        %v2042 = vpop.permute.xlu0 %2041
        %2043 = vrot.lane.b32.xlu0 %v1924, 16
        %v2044 = vpop.permute.xlu0 %2043
        %2045 = vrot.lane.b32.xlu0 %v1932, 16
        %v2046 = vpop.permute.xlu0 %2045
        %2047 = vrot.lane.b32.xlu0 %v1940, 16
        %v2048 = vpop.permute.xlu0 %2047
        %2049 = vrot.lane.b32.xlu0 %v1948, 16
        %v2050 = vpop.permute.xlu0 %2049
        %2051 = vrot.lane.b32.xlu0 %v1956, 16
        %v2052 = vpop.permute.xlu0 %2051
        %2053 = vrot.lane.b32.xlu0 %v1964, 16
        %v2054 = vpop.permute.xlu0 %2053
        %2055 = vrot.lane.b32.xlu0 %v1972, 16
        %v2056 = vpop.permute.xlu0 %2055
        %2057 = vrot.lane.b32.xlu0 %v1980, 16
        %v2058 = vpop.permute.xlu0 %2057
        %2059 = vrot.lane.b32.xlu0 %v1988, 16
        %v2060 = vpop.permute.xlu0 %2059
        %2061 = vrot.lane.b32.xlu0 %v1996, 16
        %v2062 = vpop.permute.xlu0 %2061
        %2063 = vrot.lane.b32.xlu0 %v2004, 16
        %v2064 = vpop.permute.xlu0 %2063
        %2065 = vrot.lane.b32.xlu0 %v2012, 16
        %v2066 = vpop.permute.xlu0 %2065
        %2067 = vrot.lane.b32.xlu0 %v2020, 16
        %v2068 = vpop.permute.xlu0 %2067
        %2069 = vrot.lane.b32.xlu0 %v2028, 16
        %v2070 = vpop.permute.xlu0 %2069
        %2071 = vrot.lane.b32.xlu0 %v2036, 16
        %v2072 = vpop.permute.xlu0 %2071
        %v2074 = vunpack.c.l.b16 %v1782
        %v2075 = vpack.c.b16 %v1832, %v2074
        %vm2076 = vcmask 1046528
        %v2077 = vrot.slane %v2075, 1
        %v2078 = vrot.slane %v1868, 1
        %v2079 = vsel %vm2076, %v2077, %v2078
        %v2080 = vrot.slane %v1869, 1
        %v2081 = vsel %vm2076, %v2078, %v2080
        %v2082 = vrot.slane %v1870, 1
        %v2083 = vsel %vm2076, %v2080, %v2082
        %v2084 = vrot.slane %v1871, 1
        %v2085 = vsel %vm2076, %v2082, %v2084
        %v2086 = vrot.slane %v1872, 1
        %v2087 = vsel %vm2076, %v2084, %v2086
        %v2088 = vrot.slane %v1873, 1
        %v2089 = vsel %vm2076, %v2086, %v2088
        %v2090 = vrot.slane %v1874, 1
        %v2091 = vsel %vm2076, %v2088, %v2090
        %v2092 = vrot.slane %v1875, 1
        %v2093 = vsel %vm2076, %v2090, %v2092
        %v2094 = vrot.slane %v1876, 1
        %v2095 = vsel %vm2076, %v2092, %v2094
        %v2096 = vrot.slane %v1877, 1
        %v2097 = vsel %vm2076, %v2094, %v2096
        %v2098 = vrot.slane %v1878, 1
        %v2099 = vsel %vm2076, %v2096, %v2098
        %v2100 = vrot.slane %v1879, 1
        %v2101 = vsel %vm2076, %v2098, %v2100
        %v2102 = vrot.slane %v1880, 1
        %v2103 = vsel %vm2076, %v2100, %v2102
        %v2104 = vrot.slane %v1881, 1
        %v2105 = vsel %vm2076, %v2102, %v2104
        %v2106 = vrot.slane %v1882, 1
        %v2107 = vsel %vm2076, %v2104, %v2106
        %v2108 = vrot.slane %v1883, 1
        %v2109 = vsel %vm2076, %v2106, %v2108
        %v2110 = vrot.slane %v1884, 1
        %v2111 = vsel %vm2076, %v2108, %v2110
        %v2112 = vrot.slane %v1887, 1
        %v2113 = vsel %vm2076, %v2110, %v2112
        %2114 = vrot.lane.b32.xlu0 %v2079, 32
        %v2115 = vpop.permute.xlu0 %2114
        %2116 = vrot.lane.b32.xlu0 %v2081, 32
        %v2117 = vpop.permute.xlu0 %2116
        %2118 = vrot.lane.b32.xlu0 %v2083, 32
        %v2119 = vpop.permute.xlu0 %2118
        %2120 = vrot.lane.b32.xlu0 %v2085, 32
        %v2121 = vpop.permute.xlu0 %2120
        %2122 = vrot.lane.b32.xlu0 %v2087, 32
        %v2123 = vpop.permute.xlu0 %2122
        %2124 = vrot.lane.b32.xlu0 %v2089, 32
        %v2125 = vpop.permute.xlu0 %2124
        %2126 = vrot.lane.b32.xlu0 %v2091, 32
        %v2127 = vpop.permute.xlu0 %2126
        %2128 = vrot.lane.b32.xlu0 %v2093, 32
        %v2129 = vpop.permute.xlu0 %2128
        %2130 = vrot.lane.b32.xlu0 %v2095, 32
        %v2131 = vpop.permute.xlu0 %2130
        %2132 = vrot.lane.b32.xlu0 %v2097, 32
        %v2133 = vpop.permute.xlu0 %2132
        %2134 = vrot.lane.b32.xlu0 %v2099, 32
        %v2135 = vpop.permute.xlu0 %2134
        %2136 = vrot.lane.b32.xlu0 %v2101, 32
        %v2137 = vpop.permute.xlu0 %2136
        %2138 = vrot.lane.b32.xlu0 %v2103, 32
        %v2139 = vpop.permute.xlu0 %2138
        %2140 = vrot.lane.b32.xlu0 %v2105, 32
        %v2141 = vpop.permute.xlu0 %2140
        %2142 = vrot.lane.b32.xlu0 %v2107, 32
        %v2143 = vpop.permute.xlu0 %2142
        %2144 = vrot.lane.b32.xlu0 %v2109, 32
        %v2145 = vpop.permute.xlu0 %2144
        %2146 = vrot.lane.b32.xlu0 %v2111, 32
        %v2147 = vpop.permute.xlu0 %2146
        %2148 = vrot.lane.b32.xlu0 %v2113, 32
        %v2149 = vpop.permute.xlu0 %2148
        %v2154 = vunpack.c.l.b16 %v1783
        %v2155 = vunpack.c.l.b16 %v1784
        %v2156 = vunpack.c.l.b16 %v1785
        %v2157 = vunpack.c.l.b16 %v1786
        %v2158 = vpack.c.b16 %v1834, %v2154
        %v2159 = vpack.c.b16 %v2156, %v2155
        %v2160 = vpack.c.b16 %v2157, %v2157
        %v2161 = vrot.slane %v2158, 1
        %v2162 = vsel %vm2076, %v2161, %v2080
        %v2163 = vrot.slane %v2159, 1
        %v2164 = vsel %vm2076, %v2110, %v2163
        %v2165 = vrot.slane %v2160, 1
        %v2166 = vsel %vm2076, %v2163, %v2165
        %2167 = vrot.lane.b32.xlu0 %v2162, 48
        %v2168 = vpop.permute.xlu0 %2167
        %2169 = vrot.lane.b32.xlu0 %v2083, 48
        %v2170 = vpop.permute.xlu0 %2169
        %2171 = vrot.lane.b32.xlu0 %v2085, 48
        %v2172 = vpop.permute.xlu0 %2171
        %2173 = vrot.lane.b32.xlu0 %v2087, 48
        %v2174 = vpop.permute.xlu0 %2173
        %2175 = vrot.lane.b32.xlu0 %v2089, 48
        %v2176 = vpop.permute.xlu0 %2175
        %2177 = vrot.lane.b32.xlu0 %v2091, 48
        %v2178 = vpop.permute.xlu0 %2177
        %2179 = vrot.lane.b32.xlu0 %v2093, 48
        %v2180 = vpop.permute.xlu0 %2179
        %2181 = vrot.lane.b32.xlu0 %v2095, 48
        %v2182 = vpop.permute.xlu0 %2181
        %2183 = vrot.lane.b32.xlu0 %v2097, 48
        %v2184 = vpop.permute.xlu0 %2183
        %2185 = vrot.lane.b32.xlu0 %v2099, 48
        %v2186 = vpop.permute.xlu0 %2185
        %2187 = vrot.lane.b32.xlu0 %v2101, 48
        %v2188 = vpop.permute.xlu0 %2187
        %2189 = vrot.lane.b32.xlu0 %v2103, 48
        %v2190 = vpop.permute.xlu0 %2189
        %2191 = vrot.lane.b32.xlu0 %v2105, 48
        %v2192 = vpop.permute.xlu0 %2191
        %2193 = vrot.lane.b32.xlu0 %v2107, 48
        %v2194 = vpop.permute.xlu0 %2193
        %2195 = vrot.lane.b32.xlu0 %v2109, 48
        %v2196 = vpop.permute.xlu0 %2195
        %2197 = vrot.lane.b32.xlu0 %v2111, 48
        %v2198 = vpop.permute.xlu0 %2197
        %2199 = vrot.lane.b32.xlu0 %v2164, 48
        %v2200 = vpop.permute.xlu0 %2199
        %2201 = vrot.lane.b32.xlu0 %v2166, 48
        %v2202 = vpop.permute.xlu0 %2201
        %v2204 = vunpack.c.l.b16 %v1787
        %v2205 = vpack.c.b16 %v2204, %v2204
        %vm2206 = vsmask.f32 6400
        %v2208 = vshrl.u32 %v2158, 16
        %v2210 = vrot.slane %v2208, 1
        %v2211 = vshll.u32 %v2158, 16
        %v2213 = vrot.slane %v2211, 2
        %v2214 = vor.u32 %v2210, %v2213
        %v2215 = vrot.slane %v1909, 1
        %v2216 = vrot.slane %v1905, 2
        %v2217 = vor.u32 %v2215, %v2216
        %v2218 = vsel %vm2206, %v2214, %v2217
        %v2219 = vrot.slane %v1917, 1
        %v2220 = vrot.slane %v1913, 2
        %v2221 = vor.u32 %v2219, %v2220
        %v2222 = vsel %vm2206, %v2217, %v2221
        %v2223 = vrot.slane %v1925, 1
        %v2224 = vrot.slane %v1921, 2
        %v2225 = vor.u32 %v2223, %v2224
        %v2226 = vsel %vm2206, %v2221, %v2225
        %v2227 = vrot.slane %v1933, 1
        %v2228 = vrot.slane %v1929, 2
        %v2229 = vor.u32 %v2227, %v2228
        %v2230 = vsel %vm2206, %v2225, %v2229
        %v2231 = vrot.slane %v1941, 1
        %v2232 = vrot.slane %v1937, 2
        %v2233 = vor.u32 %v2231, %v2232
        %v2234 = vsel %vm2206, %v2229, %v2233
        %v2235 = vrot.slane %v1949, 1
        %v2236 = vrot.slane %v1945, 2
        %v2237 = vor.u32 %v2235, %v2236
        %v2238 = vsel %vm2206, %v2233, %v2237
        %v2239 = vrot.slane %v1957, 1
        %v2240 = vrot.slane %v1953, 2
        %v2241 = vor.u32 %v2239, %v2240
        %v2242 = vsel %vm2206, %v2237, %v2241
        %v2243 = vrot.slane %v1965, 1
        %v2244 = vrot.slane %v1961, 2
        %v2245 = vor.u32 %v2243, %v2244
        %v2246 = vsel %vm2206, %v2241, %v2245
        %v2247 = vrot.slane %v1973, 1
        %v2248 = vrot.slane %v1969, 2
        %v2249 = vor.u32 %v2247, %v2248
        %v2250 = vsel %vm2206, %v2245, %v2249
        %v2251 = vrot.slane %v1981, 1
        %v2252 = vrot.slane %v1977, 2
        %v2253 = vor.u32 %v2251, %v2252
        %v2254 = vsel %vm2206, %v2249, %v2253
        %v2255 = vrot.slane %v1989, 1
        %v2256 = vrot.slane %v1985, 2
        %v2257 = vor.u32 %v2255, %v2256
        %v2258 = vsel %vm2206, %v2253, %v2257
        %v2259 = vrot.slane %v1997, 1
        %v2260 = vrot.slane %v1993, 2
        %v2261 = vor.u32 %v2259, %v2260
        %v2262 = vsel %vm2206, %v2257, %v2261
        %v2263 = vrot.slane %v2005, 1
        %v2264 = vrot.slane %v2001, 2
        %v2265 = vor.u32 %v2263, %v2264
        %v2266 = vsel %vm2206, %v2261, %v2265
        %v2267 = vrot.slane %v2013, 1
        %v2268 = vrot.slane %v2009, 2
        %v2269 = vor.u32 %v2267, %v2268
        %v2270 = vsel %vm2206, %v2265, %v2269
        %v2271 = vrot.slane %v2021, 1
        %v2272 = vrot.slane %v2017, 2
        %v2273 = vor.u32 %v2271, %v2272
        %v2274 = vsel %vm2206, %v2269, %v2273
        %v2275 = vrot.slane %v2029, 1
        %v2276 = vrot.slane %v2025, 2
        %v2277 = vor.u32 %v2275, %v2276
        %v2278 = vsel %vm2206, %v2273, %v2277
        %v2280 = vshrl.u32 %v2159, 16
        %v2282 = vrot.slane %v2280, 1
        %v2283 = vshll.u32 %v2159, 16
        %v2285 = vrot.slane %v2283, 2
        %v2286 = vor.u32 %v2282, %v2285
        %v2287 = vsel %vm2206, %v2277, %v2286
        %v2289 = vshrl.u32 %v2205, 16
        %v2291 = vrot.slane %v2289, 1
        %v2292 = vshll.u32 %v2205, 16
        %v2294 = vrot.slane %v2292, 2
        %v2295 = vor.u32 %v2291, %v2294
        %v2296 = vsel %vm2206, %v2286, %v2295
        %2297 = vrot.lane.b32.xlu0 %v2218, 64
        %v2298 = vpop.permute.xlu0 %2297
        %2299 = vrot.lane.b32.xlu0 %v2222, 64
        %v2300 = vpop.permute.xlu0 %2299
        %2301 = vrot.lane.b32.xlu0 %v2226, 64
        %v2302 = vpop.permute.xlu0 %2301
        %2303 = vrot.lane.b32.xlu0 %v2230, 64
        %v2304 = vpop.permute.xlu0 %2303
        %2305 = vrot.lane.b32.xlu0 %v2234, 64
        %v2306 = vpop.permute.xlu0 %2305
        %2307 = vrot.lane.b32.xlu0 %v2238, 64
        %v2308 = vpop.permute.xlu0 %2307
        %2309 = vrot.lane.b32.xlu0 %v2242, 64
        %v2310 = vpop.permute.xlu0 %2309
        %2311 = vrot.lane.b32.xlu0 %v2246, 64
        %v2312 = vpop.permute.xlu0 %2311
        %2313 = vrot.lane.b32.xlu0 %v2250, 64
        %v2314 = vpop.permute.xlu0 %2313
        %2315 = vrot.lane.b32.xlu0 %v2254, 64
        %v2316 = vpop.permute.xlu0 %2315
        %2317 = vrot.lane.b32.xlu0 %v2258, 64
        %v2318 = vpop.permute.xlu0 %2317
        %2319 = vrot.lane.b32.xlu0 %v2262, 64
        %v2320 = vpop.permute.xlu0 %2319
        %2321 = vrot.lane.b32.xlu0 %v2266, 64
        %v2322 = vpop.permute.xlu0 %2321
        %2323 = vrot.lane.b32.xlu0 %v2270, 64
        %v2324 = vpop.permute.xlu0 %2323
        %2325 = vrot.lane.b32.xlu0 %v2274, 64
        %v2326 = vpop.permute.xlu0 %2325
        %2327 = vrot.lane.b32.xlu0 %v2278, 64
        %v2328 = vpop.permute.xlu0 %2327
        %2329 = vrot.lane.b32.xlu0 %v2287, 64
        %v2330 = vpop.permute.xlu0 %2329
        %2331 = vrot.lane.b32.xlu0 %v2296, 64
        %v2332 = vpop.permute.xlu0 %2331
        %v2334 = vunpack.c.l.b16 %v1788
        %v2335 = vpack.c.b16 %v1834, %v2334
        %vm2336 = vcmask 1045504
        %v2337 = vrot.slane %v2335, 2
        %v2338 = vrot.slane %v1869, 2
        %v2339 = vsel %vm2336, %v2337, %v2338
        %v2340 = vrot.slane %v1870, 2
        %v2341 = vsel %vm2336, %v2338, %v2340
        %v2342 = vrot.slane %v1871, 2
        %v2343 = vsel %vm2336, %v2340, %v2342
        %v2344 = vrot.slane %v1872, 2
        %v2345 = vsel %vm2336, %v2342, %v2344
        %v2346 = vrot.slane %v1873, 2
        %v2347 = vsel %vm2336, %v2344, %v2346
        %v2348 = vrot.slane %v1874, 2
        %v2349 = vsel %vm2336, %v2346, %v2348
        %v2350 = vrot.slane %v1875, 2
        %v2351 = vsel %vm2336, %v2348, %v2350
        %v2352 = vrot.slane %v1876, 2
        %v2353 = vsel %vm2336, %v2350, %v2352
        %v2354 = vrot.slane %v1877, 2
        %v2355 = vsel %vm2336, %v2352, %v2354
        %v2356 = vrot.slane %v1878, 2
        %v2357 = vsel %vm2336, %v2354, %v2356
        %v2358 = vrot.slane %v1879, 2
        %v2359 = vsel %vm2336, %v2356, %v2358
        %v2360 = vrot.slane %v1880, 2
        %v2361 = vsel %vm2336, %v2358, %v2360
        %v2362 = vrot.slane %v1881, 2
        %v2363 = vsel %vm2336, %v2360, %v2362
        %v2364 = vrot.slane %v1882, 2
        %v2365 = vsel %vm2336, %v2362, %v2364
        %v2366 = vrot.slane %v1883, 2
        %v2367 = vsel %vm2336, %v2364, %v2366
        %v2368 = vrot.slane %v1884, 2
        %v2369 = vsel %vm2336, %v2366, %v2368
        %v2370 = vrot.slane %v2159, 2
        %v2371 = vsel %vm2336, %v2368, %v2370
        %v2372 = vrot.slane %v2205, 2
        %v2373 = vsel %vm2336, %v2370, %v2372
        %2374 = vrot.lane.b32.xlu0 %v2339, 80
        %v2375 = vpop.permute.xlu0 %2374
        %2376 = vrot.lane.b32.xlu0 %v2341, 80
        %v2377 = vpop.permute.xlu0 %2376
        %2378 = vrot.lane.b32.xlu0 %v2343, 80
        %v2379 = vpop.permute.xlu0 %2378
        %2380 = vrot.lane.b32.xlu0 %v2345, 80
        %v2381 = vpop.permute.xlu0 %2380
        %2382 = vrot.lane.b32.xlu0 %v2347, 80
        %v2383 = vpop.permute.xlu0 %2382
        %2384 = vrot.lane.b32.xlu0 %v2349, 80
        %v2385 = vpop.permute.xlu0 %2384
        %2386 = vrot.lane.b32.xlu0 %v2351, 80
        %v2387 = vpop.permute.xlu0 %2386
        %2388 = vrot.lane.b32.xlu0 %v2353, 80
        %v2389 = vpop.permute.xlu0 %2388
        %2390 = vrot.lane.b32.xlu0 %v2355, 80
        %v2391 = vpop.permute.xlu0 %2390
        %2392 = vrot.lane.b32.xlu0 %v2357, 80
        %v2393 = vpop.permute.xlu0 %2392
        %2394 = vrot.lane.b32.xlu0 %v2359, 80
        %v2395 = vpop.permute.xlu0 %2394
        %2396 = vrot.lane.b32.xlu0 %v2361, 80
        %v2397 = vpop.permute.xlu0 %2396
        %2398 = vrot.lane.b32.xlu0 %v2363, 80
        %v2399 = vpop.permute.xlu0 %2398
        %2400 = vrot.lane.b32.xlu0 %v2365, 80
        %v2401 = vpop.permute.xlu0 %2400
        %2402 = vrot.lane.b32.xlu0 %v2367, 80
        %v2403 = vpop.permute.xlu0 %2402
        %2404 = vrot.lane.b32.xlu0 %v2369, 80
        %v2405 = vpop.permute.xlu0 %2404
        %2406 = vrot.lane.b32.xlu0 %v2371, 80
        %v2407 = vpop.permute.xlu0 %2406
        %2408 = vrot.lane.b32.xlu0 %v2373, 80
        %v2409 = vpop.permute.xlu0 %2408
        %v2414 = vunpack.c.l.b16 %v1789
        %v2415 = vunpack.c.l.b16 %v1790
        %v2416 = vunpack.c.l.b16 %v1791
        %v2417 = vunpack.c.l.b16 %v1792
        %v2418 = vpack.c.b16 %v1836, %v2414
        %v2419 = vpack.c.b16 %v2416, %v2415
        %v2420 = vpack.c.b16 %v2417, %v2417
        %v2421 = vrot.slane %v2418, 2
        %v2422 = vsel %vm2336, %v2421, %v2340
        %v2423 = vrot.slane %v2419, 2
        %v2424 = vsel %vm2336, %v2370, %v2423
        %v2425 = vrot.slane %v2420, 2
        %v2426 = vsel %vm2336, %v2423, %v2425
        %2427 = vrot.lane.b32.xlu0 %v2422, 96
        %v2428 = vpop.permute.xlu0 %2427
        %2429 = vrot.lane.b32.xlu0 %v2343, 96
        %v2430 = vpop.permute.xlu0 %2429
        %2431 = vrot.lane.b32.xlu0 %v2345, 96
        %v2432 = vpop.permute.xlu0 %2431
        %2433 = vrot.lane.b32.xlu0 %v2347, 96
        %v2434 = vpop.permute.xlu0 %2433
        %2435 = vrot.lane.b32.xlu0 %v2349, 96
        %v2436 = vpop.permute.xlu0 %2435
        %2437 = vrot.lane.b32.xlu0 %v2351, 96
        %v2438 = vpop.permute.xlu0 %2437
        %2439 = vrot.lane.b32.xlu0 %v2353, 96
        %v2440 = vpop.permute.xlu0 %2439
        %2441 = vrot.lane.b32.xlu0 %v2355, 96
        %v2442 = vpop.permute.xlu0 %2441
        %2443 = vrot.lane.b32.xlu0 %v2357, 96
        %v2444 = vpop.permute.xlu0 %2443
        %2445 = vrot.lane.b32.xlu0 %v2359, 96
        %v2446 = vpop.permute.xlu0 %2445
        %2447 = vrot.lane.b32.xlu0 %v2361, 96
        %v2448 = vpop.permute.xlu0 %2447
        %2449 = vrot.lane.b32.xlu0 %v2363, 96
        %v2450 = vpop.permute.xlu0 %2449
        %2451 = vrot.lane.b32.xlu0 %v2365, 96
        %v2452 = vpop.permute.xlu0 %2451
        %2453 = vrot.lane.b32.xlu0 %v2367, 96
        %v2454 = vpop.permute.xlu0 %2453
        %2455 = vrot.lane.b32.xlu0 %v2369, 96
        %v2456 = vpop.permute.xlu0 %2455
        %2457 = vrot.lane.b32.xlu0 %v2371, 96
        %v2458 = vpop.permute.xlu0 %2457
        %2459 = vrot.lane.b32.xlu0 %v2424, 96
        %v2460 = vpop.permute.xlu0 %2459
        %2461 = vrot.lane.b32.xlu0 %v2426, 96
        %v2462 = vpop.permute.xlu0 %2461
        %v2464 = vunpack.c.l.b16 %v1793
        %v2465 = vpack.c.b16 %v2464, %v2464
        %vm2466 = vsmask.f32 5376
        %v2468 = vshrl.u32 %v2418, 16
        %v2470 = vrot.slane %v2468, 2
        %v2471 = vshll.u32 %v2418, 16
        %v2473 = vrot.slane %v2471, 3
        %v2474 = vor.u32 %v2470, %v2473
        %v2475 = vrot.slane %v1917, 2
        %v2476 = vrot.slane %v1913, 3
        %v2477 = vor.u32 %v2475, %v2476
        %v2478 = vsel %vm2466, %v2474, %v2477
        %v2479 = vrot.slane %v1925, 2
        %v2480 = vrot.slane %v1921, 3
        %v2481 = vor.u32 %v2479, %v2480
        %v2482 = vsel %vm2466, %v2477, %v2481
        %v2483 = vrot.slane %v1933, 2
        %v2484 = vrot.slane %v1929, 3
        %v2485 = vor.u32 %v2483, %v2484
        %v2486 = vsel %vm2466, %v2481, %v2485
        %v2487 = vrot.slane %v1941, 2
        %v2488 = vrot.slane %v1937, 3
        %v2489 = vor.u32 %v2487, %v2488
        %v2490 = vsel %vm2466, %v2485, %v2489
        %v2491 = vrot.slane %v1949, 2
        %v2492 = vrot.slane %v1945, 3
        %v2493 = vor.u32 %v2491, %v2492
        %v2494 = vsel %vm2466, %v2489, %v2493
        %v2495 = vrot.slane %v1957, 2
        %v2496 = vrot.slane %v1953, 3
        %v2497 = vor.u32 %v2495, %v2496
        %v2498 = vsel %vm2466, %v2493, %v2497
        %v2499 = vrot.slane %v1965, 2
        %v2500 = vrot.slane %v1961, 3
        %v2501 = vor.u32 %v2499, %v2500
        %v2502 = vsel %vm2466, %v2497, %v2501
        %v2503 = vrot.slane %v1973, 2
        %v2504 = vrot.slane %v1969, 3
        %v2505 = vor.u32 %v2503, %v2504
        %v2506 = vsel %vm2466, %v2501, %v2505
        %v2507 = vrot.slane %v1981, 2
        %v2508 = vrot.slane %v1977, 3
        %v2509 = vor.u32 %v2507, %v2508
        %v2510 = vsel %vm2466, %v2505, %v2509
        %v2511 = vrot.slane %v1989, 2
        %v2512 = vrot.slane %v1985, 3
        %v2513 = vor.u32 %v2511, %v2512
        %v2514 = vsel %vm2466, %v2509, %v2513
        %v2515 = vrot.slane %v1997, 2
        %v2516 = vrot.slane %v1993, 3
        %v2517 = vor.u32 %v2515, %v2516
        %v2518 = vsel %vm2466, %v2513, %v2517
        %v2519 = vrot.slane %v2005, 2
        %v2520 = vrot.slane %v2001, 3
        %v2521 = vor.u32 %v2519, %v2520
        %v2522 = vsel %vm2466, %v2517, %v2521
        %v2523 = vrot.slane %v2013, 2
        %v2524 = vrot.slane %v2009, 3
        %v2525 = vor.u32 %v2523, %v2524
        %v2526 = vsel %vm2466, %v2521, %v2525
        %v2527 = vrot.slane %v2021, 2
        %v2528 = vrot.slane %v2017, 3
        %v2529 = vor.u32 %v2527, %v2528
        %v2530 = vsel %vm2466, %v2525, %v2529
        %v2531 = vrot.slane %v2029, 2
        %v2532 = vrot.slane %v2025, 3
        %v2533 = vor.u32 %v2531, %v2532
        %v2534 = vsel %vm2466, %v2529, %v2533
        %v2535 = vrot.slane %v2280, 2
        %v2536 = vrot.slane %v2283, 3
        %v2537 = vor.u32 %v2535, %v2536
        %v2538 = vsel %vm2466, %v2533, %v2537
        %v2540 = vshrl.u32 %v2419, 16
        %v2542 = vrot.slane %v2540, 2
        %v2543 = vshll.u32 %v2419, 16
        %v2545 = vrot.slane %v2543, 3
        %v2546 = vor.u32 %v2542, %v2545
        %v2547 = vsel %vm2466, %v2537, %v2546
        %v2549 = vshrl.u32 %v2465, 16
        %v2551 = vrot.slane %v2549, 2
        %v2552 = vshll.u32 %v2465, 16
        %v2554 = vrot.slane %v2552, 3
        %v2555 = vor.u32 %v2551, %v2554
        %v2556 = vsel %vm2466, %v2546, %v2555
        %2557 = vrot.lane.b32.xlu0 %v2478, 112
        %v2558 = vpop.permute.xlu0 %2557
        %2559 = vrot.lane.b32.xlu0 %v2482, 112
        %v2560 = vpop.permute.xlu0 %2559
        %2561 = vrot.lane.b32.xlu0 %v2486, 112
        %v2562 = vpop.permute.xlu0 %2561
        %2563 = vrot.lane.b32.xlu0 %v2490, 112
        %v2564 = vpop.permute.xlu0 %2563
        %2565 = vrot.lane.b32.xlu0 %v2494, 112
        %v2566 = vpop.permute.xlu0 %2565
        %2567 = vrot.lane.b32.xlu0 %v2498, 112
        %v2568 = vpop.permute.xlu0 %2567
        %2569 = vrot.lane.b32.xlu0 %v2502, 112
        %v2570 = vpop.permute.xlu0 %2569
        %2571 = vrot.lane.b32.xlu0 %v2506, 112
        %v2572 = vpop.permute.xlu0 %2571
        %2573 = vrot.lane.b32.xlu0 %v2510, 112
        %v2574 = vpop.permute.xlu0 %2573
        %2575 = vrot.lane.b32.xlu0 %v2514, 112
        %v2576 = vpop.permute.xlu0 %2575
        %2577 = vrot.lane.b32.xlu0 %v2518, 112
        %v2578 = vpop.permute.xlu0 %2577
        %2579 = vrot.lane.b32.xlu0 %v2522, 112
        %v2580 = vpop.permute.xlu0 %2579
        %2581 = vrot.lane.b32.xlu0 %v2526, 112
        %v2582 = vpop.permute.xlu0 %2581
        %2583 = vrot.lane.b32.xlu0 %v2530, 112
        %v2584 = vpop.permute.xlu0 %2583
        %2585 = vrot.lane.b32.xlu0 %v2534, 112
        %v2586 = vpop.permute.xlu0 %2585
        %2587 = vrot.lane.b32.xlu0 %v2538, 112
        %v2588 = vpop.permute.xlu0 %2587
        %2589 = vrot.lane.b32.xlu0 %v2547, 112
        %v2590 = vpop.permute.xlu0 %2589
        %2591 = vrot.lane.b32.xlu0 %v2556, 112
        %v2592 = vpop.permute.xlu0 %2591
        %v2594 = vunpack.c.l.b16 %v1794
        %v2595 = vpack.c.b16 %v1836, %v2594
        %vm2596 = vcmask 1044480
        %v2597 = vrot.slane %v2595, 3
        %v2598 = vrot.slane %v1870, 3
        %v2599 = vsel %vm2596, %v2597, %v2598
        %v2600 = vrot.slane %v1871, 3
        %v2601 = vsel %vm2596, %v2598, %v2600
        %v2602 = vrot.slane %v1872, 3
        %v2603 = vsel %vm2596, %v2600, %v2602
        %v2604 = vrot.slane %v1873, 3
        %v2605 = vsel %vm2596, %v2602, %v2604
        %v2606 = vrot.slane %v1874, 3
        %v2607 = vsel %vm2596, %v2604, %v2606
        %v2608 = vrot.slane %v1875, 3
        %v2609 = vsel %vm2596, %v2606, %v2608
        %v2610 = vrot.slane %v1876, 3
        %v2611 = vsel %vm2596, %v2608, %v2610
        %v2612 = vrot.slane %v1877, 3
        %v2613 = vsel %vm2596, %v2610, %v2612
        %v2614 = vrot.slane %v1878, 3
        %v2615 = vsel %vm2596, %v2612, %v2614
        %v2616 = vrot.slane %v1879, 3
        %v2617 = vsel %vm2596, %v2614, %v2616
        %v2618 = vrot.slane %v1880, 3
        %v2619 = vsel %vm2596, %v2616, %v2618
        %v2620 = vrot.slane %v1881, 3
        %v2621 = vsel %vm2596, %v2618, %v2620
        %v2622 = vrot.slane %v1882, 3
        %v2623 = vsel %vm2596, %v2620, %v2622
        %v2624 = vrot.slane %v1883, 3
        %v2625 = vsel %vm2596, %v2622, %v2624
        %v2626 = vrot.slane %v1884, 3
        %v2627 = vsel %vm2596, %v2624, %v2626
        %v2628 = vrot.slane %v2159, 3
        %v2629 = vsel %vm2596, %v2626, %v2628
        %v2630 = vrot.slane %v2419, 3
        %v2631 = vsel %vm2596, %v2628, %v2630
        %v2632 = vrot.slane %v2465, 3
        %v2633 = vsel %vm2596, %v2630, %v2632
        %vm2634 = vcmask 130048
        %v2636 = vsel %vm2634, %v1867, %v2038
        %v2638 = vsel %vm2634, %v1868, %v2040
        %v2640 = vsel %vm2634, %v1869, %v2042
        %v2642 = vsel %vm2634, %v1870, %v2044
        %v2644 = vsel %vm2634, %v1871, %v2046
        %v2646 = vsel %vm2634, %v1872, %v2048
        %v2648 = vsel %vm2634, %v1873, %v2050
        %v2650 = vsel %vm2634, %v1874, %v2052
        %v2652 = vsel %vm2634, %v1875, %v2054
        %v2654 = vsel %vm2634, %v1876, %v2056
        %v2656 = vsel %vm2634, %v1877, %v2058
        %v2658 = vsel %vm2634, %v1878, %v2060
        %v2660 = vsel %vm2634, %v1879, %v2062
        %v2662 = vsel %vm2634, %v1880, %v2064
        %v2664 = vsel %vm2634, %v1881, %v2066
        %v2666 = vsel %vm2634, %v1882, %v2068
        %v2668 = vsel %vm2634, %v1883, %v2070
        %v2670 = vsel %vm2634, %v1884, %v2072
        %vm2671 = vcmask 261120
        %v2673 = vsel %vm2671, %v2636, %v2115
        %v2675 = vsel %vm2671, %v2638, %v2117
        %v2677 = vsel %vm2671, %v2640, %v2119
        %v2679 = vsel %vm2671, %v2642, %v2121
        %v2681 = vsel %vm2671, %v2644, %v2123
        %v2683 = vsel %vm2671, %v2646, %v2125
        %v2685 = vsel %vm2671, %v2648, %v2127
        %v2687 = vsel %vm2671, %v2650, %v2129
        %v2689 = vsel %vm2671, %v2652, %v2131
        %v2691 = vsel %vm2671, %v2654, %v2133
        %v2693 = vsel %vm2671, %v2656, %v2135
        %v2695 = vsel %vm2671, %v2658, %v2137
        %v2697 = vsel %vm2671, %v2660, %v2139
        %v2699 = vsel %vm2671, %v2662, %v2141
        %v2701 = vsel %vm2671, %v2664, %v2143
        %v2703 = vsel %vm2671, %v2666, %v2145
        %v2705 = vsel %vm2671, %v2668, %v2147
        %v2707 = vsel %vm2671, %v2670, %v2149
        %vm2708 = vcmask 392192
        %v2710 = vsel %vm2708, %v2673, %v2168
        %v2712 = vsel %vm2708, %v2675, %v2170
        %v2714 = vsel %vm2708, %v2677, %v2172
        %v2716 = vsel %vm2708, %v2679, %v2174
        %v2718 = vsel %vm2708, %v2681, %v2176
        %v2720 = vsel %vm2708, %v2683, %v2178
        %v2722 = vsel %vm2708, %v2685, %v2180
        %v2724 = vsel %vm2708, %v2687, %v2182
        %v2726 = vsel %vm2708, %v2689, %v2184
        %v2728 = vsel %vm2708, %v2691, %v2186
        %v2730 = vsel %vm2708, %v2693, %v2188
        %v2732 = vsel %vm2708, %v2695, %v2190
        %v2734 = vsel %vm2708, %v2697, %v2192
        %v2736 = vsel %vm2708, %v2699, %v2194
        %v2738 = vsel %vm2708, %v2701, %v2196
        %v2740 = vsel %vm2708, %v2703, %v2198
        %v2742 = vsel %vm2708, %v2705, %v2200
        %v2744 = vsel %vm2708, %v2707, %v2202
        %vm2745 = vcmask 523264
        %v2747 = vsel %vm2745, %v2710, %v2298
        %v2749 = vsel %vm2745, %v2712, %v2300
        %v2751 = vsel %vm2745, %v2714, %v2302
        %v2753 = vsel %vm2745, %v2716, %v2304
        %v2755 = vsel %vm2745, %v2718, %v2306
        %v2757 = vsel %vm2745, %v2720, %v2308
        %v2759 = vsel %vm2745, %v2722, %v2310
        %v2761 = vsel %vm2745, %v2724, %v2312
        %v2763 = vsel %vm2745, %v2726, %v2314
        %v2765 = vsel %vm2745, %v2728, %v2316
        %v2767 = vsel %vm2745, %v2730, %v2318
        %v2769 = vsel %vm2745, %v2732, %v2320
        %v2771 = vsel %vm2745, %v2734, %v2322
        %v2773 = vsel %vm2745, %v2736, %v2324
        %v2775 = vsel %vm2745, %v2738, %v2326
        %v2777 = vsel %vm2745, %v2740, %v2328
        %v2779 = vsel %vm2745, %v2742, %v2330
        %v2781 = vsel %vm2745, %v2744, %v2332
        %vm2782 = vcmask 654336
        %v2784 = vsel %vm2782, %v2747, %v2375
        %v2786 = vsel %vm2782, %v2749, %v2377
        %v2788 = vsel %vm2782, %v2751, %v2379
        %v2790 = vsel %vm2782, %v2753, %v2381
        %v2792 = vsel %vm2782, %v2755, %v2383
        %v2794 = vsel %vm2782, %v2757, %v2385
        %v2796 = vsel %vm2782, %v2759, %v2387
        %v2798 = vsel %vm2782, %v2761, %v2389
        %v2800 = vsel %vm2782, %v2763, %v2391
        %v2802 = vsel %vm2782, %v2765, %v2393
        %v2804 = vsel %vm2782, %v2767, %v2395
        %v2806 = vsel %vm2782, %v2769, %v2397
        %v2808 = vsel %vm2782, %v2771, %v2399
        %v2810 = vsel %vm2782, %v2773, %v2401
        %v2812 = vsel %vm2782, %v2775, %v2403
        %v2814 = vsel %vm2782, %v2777, %v2405
        %v2816 = vsel %vm2782, %v2779, %v2407
        %v2818 = vsel %vm2782, %v2781, %v2409
        %vm2819 = vcmask 785408
        %v2821 = vsel %vm2819, %v2784, %v2428
        %v2823 = vsel %vm2819, %v2786, %v2430
        %v2825 = vsel %vm2819, %v2788, %v2432
        %v2827 = vsel %vm2819, %v2790, %v2434
        %v2829 = vsel %vm2819, %v2792, %v2436
        %v2831 = vsel %vm2819, %v2794, %v2438
        %v2833 = vsel %vm2819, %v2796, %v2440
        %v2835 = vsel %vm2819, %v2798, %v2442
        %v2837 = vsel %vm2819, %v2800, %v2444
        %v2839 = vsel %vm2819, %v2802, %v2446
        %v2841 = vsel %vm2819, %v2804, %v2448
        %v2843 = vsel %vm2819, %v2806, %v2450
        %v2845 = vsel %vm2819, %v2808, %v2452
        %v2847 = vsel %vm2819, %v2810, %v2454
        %v2849 = vsel %vm2819, %v2812, %v2456
        %v2851 = vsel %vm2819, %v2814, %v2458
        %v2853 = vsel %vm2819, %v2816, %v2460
        %v2855 = vsel %vm2819, %v2818, %v2462
        %vm2856 = vcmask 916480
        %v2858 = vsel %vm2856, %v2821, %v2558
        %v2861 = vsel %vm2856, %v2823, %v2560
        %v2864 = vsel %vm2856, %v2825, %v2562
        %v2867 = vsel %vm2856, %v2827, %v2564
        %v2870 = vsel %vm2856, %v2829, %v2566
        %v2873 = vsel %vm2856, %v2831, %v2568
        %v2876 = vsel %vm2856, %v2833, %v2570
        %v2879 = vsel %vm2856, %v2835, %v2572
        %v2882 = vsel %vm2856, %v2837, %v2574
        %v2885 = vsel %vm2856, %v2839, %v2576
        %v2888 = vsel %vm2856, %v2841, %v2578
        %v2891 = vsel %vm2856, %v2843, %v2580
        %v2894 = vsel %vm2856, %v2845, %v2582
        %v2897 = vsel %vm2856, %v2847, %v2584
        %v2900 = vsel %vm2856, %v2849, %v2586
        %v2903 = vsel %vm2856, %v2851, %v2588
        %v2906 = vsel %vm2856, %v2853, %v2590
        %v2909 = vsel %vm2856, %v2855, %v2592
        %v2911 = vld [vmem:[#allocation11] sm:$0xf]
        %v2912 = vld [vmem:[#allocation11 + $0x4] sm:$0xf]
        %v2913 = vld [vmem:[#allocation11 + $0x8] sm:$0xf]
        %v2914 = vld [vmem:[#allocation11 + $0xc] sm:$0xf]
        %v2915 = vld [vmem:[#allocation11 + $0x10] sm:$0xf]
        %v2916 = vld [vmem:[#allocation11 + $0x14] sm:$0xf]
        %v2917 = vld [vmem:[#allocation11 + $0x18] sm:$0xf]
        %v2918 = vld [vmem:[#allocation11 + $0x1c] sm:$0xf]
        %v2919 = vld [vmem:[#allocation11 + $0x20] sm:$0xf]
        %v2920 = vld [vmem:[#allocation11 + $0x24] sm:$0xf]
        %v2921 = vld [vmem:[#allocation11 + $0x28] sm:$0xf]
        %v2922 = vld [vmem:[#allocation11 + $0x2c] sm:$0xf]
        %v2923 = vld [vmem:[#allocation11 + $0x30] sm:$0xf]
        %v2924 = vld [vmem:[#allocation11 + $0x34] sm:$0xf]
        %v2925 = vld [vmem:[#allocation11 + $0x38] sm:$0xf]
        %v2926 = vld [vmem:[#allocation11 + $0x3c] sm:$0xf]
        %v2927 = vld [vmem:[#allocation11 + $0x40] sm:$0xf]
        %v2928 = vld [vmem:[#allocation11 + $0x44] sm:$0xf]
        %v2929 = vld [vmem:[#allocation12] sm:$0x1]
        %v2931 = vlaneseq
        %v2932 = vshrl.u32 %v2931, 7
        %v2933 = vsub.s32 0, %v2932
        %v2934 = vrot.slane %v2929, %v2933
        %v2954 = vunpack.c.l.b16 %v2911
        %v2955 = vunpack.c.l.b16 %v2912
        %v2956 = vunpack.c.l.b16 %v2913
        %v2957 = vunpack.c.l.b16 %v2914
        %v2958 = vunpack.c.l.b16 %v2915
        %v2959 = vunpack.c.l.b16 %v2916
        %v2960 = vunpack.c.l.b16 %v2917
        %v2961 = vunpack.c.l.b16 %v2918
        %v2962 = vunpack.c.l.b16 %v2919
        %v2963 = vunpack.c.l.b16 %v2920
        %v2964 = vunpack.c.l.b16 %v2921
        %v2965 = vunpack.c.l.b16 %v2922
        %v2966 = vunpack.c.l.b16 %v2923
        %v2967 = vunpack.c.l.b16 %v2924
        %v2968 = vunpack.c.l.b16 %v2925
        %v2969 = vunpack.c.l.b16 %v2926
        %v2970 = vunpack.c.l.b16 %v2927
        %v2971 = vunpack.c.l.b16 %v2928
        %v2972 = vpack.c.b16 %v2955, %v2954
        %v2973 = vpack.c.b16 %v2957, %v2956
        %v2974 = vpack.c.b16 %v2959, %v2958
        %v2975 = vpack.c.b16 %v2961, %v2960
        %v2976 = vpack.c.b16 %v2963, %v2962
        %v2977 = vpack.c.b16 %v2965, %v2964
        %v2978 = vpack.c.b16 %v2967, %v2966
        %v2979 = vpack.c.b16 %v2969, %v2968
        %v2980 = vpack.c.b16 %v2971, %v2970
        %v2991 = vsel %vm2634, %v2599, 0
        %v2994 = vsel %vm2634, %v2601, 0
        %v2997 = vsel %vm2634, %v2603, 0
        %v3000 = vsel %vm2634, %v2605, 0
        %v3003 = vsel %vm2634, %v2607, 0
        %v3006 = vsel %vm2634, %v2609, 0
        %v3009 = vsel %vm2634, %v2611, 0
        %v3012 = vsel %vm2634, %v2613, 0
        %v3015 = vsel %vm2634, %v2615, 0
        %v3018 = vsel %vm2634, %v2617, 0
        %v3021 = vsel %vm2634, %v2619, 0
        %v3024 = vsel %vm2634, %v2621, 0
        %v3027 = vsel %vm2634, %v2623, 0
        %v3030 = vsel %vm2634, %v2625, 0
        %v3033 = vsel %vm2634, %v2627, 0
        %v3036 = vsel %vm2634, %v2629, 0
        %v3039 = vsel %vm2634, %v2631, 0
        %v3042 = vsel %vm2634, %v2633, 0
        %3044 = vmatprep.subr.bf16.mxu0 0
        %3045 = vmatpush1.bf16.msra.mxu0 %v2972
        %3046 = vmatprep.subr.bf16.mxu0 0
        %3047 = vmatpush1.bf16.msra.mxu0 %v2973
        %3048 = vmatprep.subr.bf16.mxu0 0
        %3049 = vmatpush1.bf16.msra.mxu0 %v2974
        %3050 = vmatprep.subr.bf16.mxu0 0
        %3051 = vmatpush1.bf16.msra.mxu0 %v2975
        %3052 = vmatprep.subr.bf16.mxu0 0
        %3053 = vmatpush1.bf16.msra.mxu0 %v2976
        %3054 = vmatprep.subr.bf16.mxu0 0
        %3055 = vmatpush1.bf16.msra.mxu0 %v2977
        %3056 = vmatprep.subr.bf16.mxu0 0
        %3057 = vmatpush1.bf16.msra.mxu0 %v2978
        %3058 = vmatprep.subr.bf16.mxu0 0
        %3059 = vmatpush1.bf16.msra.mxu0 %v2979
        %3060 = vmatprep.subr.bf16.mxu0 0
        %3061 = vmatpush1.bf16.msra.mxu0 %v2980
        %3062 = vmatprep.subr.bf16.mxu0 0
        %3063 = vmatpush1.bf16.msra.mxu0 0
        %3064 = vmatprep.subr.bf16.mxu0 0
        %3065 = vmatpush1.bf16.msra.mxu0 0
        %3066 = vmatprep.subr.bf16.mxu0 0
        %3067 = vmatpush1.bf16.msra.mxu0 0
        %3068 = vmatprep.subr.bf16.mxu0 0
        %3069 = vmatpush1.bf16.msra.mxu0 0
        %3070 = vmatprep.subr.bf16.mxu0 0
        %3071 = vmatpush1.bf16.msra.mxu0 0
        %3072 = vmatprep.subr.bf16.mxu0 0
        %3073 = vmatpush1.bf16.msra.mxu0 0
        %3074 = vmatprep.subr.bf16.mxu0 0
        %3075 = vmatpush1.bf16.msra.mxu0 0
        %3076 = vmatprep.mubr.bf16.mxu0 %v2991
        %3077 = vmatmul.mubr.bf16.gmra.mrb[0].mxu0 %v2858
        %v3078 = vpop.f32.mrb[0].mxu0
        %v3079 = vadd.f32 %v2934, %v3078
        %v3080 = vpop.f32.mrb[0].mxu0
        %v3081 = vpop.f32.mrb[0].mxu0
        %v3082 = vadd.f32 %v2934, %v3081
        %v3083 = vpop.f32.mrb[0].mxu0
        %3084 = vmatprep.mubr.bf16.mxu0 %v2994
        %3085 = vmatmul.mubr.bf16.gmra.mrb[0].mxu0 %v2861
        %v3086 = vpop.f32.mrb[0].mxu0
        %v3087 = vadd.f32 %v2934, %v3086
        %v3088 = vpop.f32.mrb[0].mxu0
        %v3089 = vpop.f32.mrb[0].mxu0
        %v3090 = vadd.f32 %v2934, %v3089
        %v3091 = vpop.f32.mrb[0].mxu0
        %3092 = vmatprep.mubr.bf16.mxu0 %v2997
        %3093 = vmatmul.mubr.bf16.gmra.mrb[0].mxu0 %v2864
        %v3094 = vpop.f32.mrb[0].mxu0
        %v3095 = vadd.f32 %v2934, %v3094
        %v3096 = vpop.f32.mrb[0].mxu0
        %v3097 = vpop.f32.mrb[0].mxu0
        %v3098 = vadd.f32 %v2934, %v3097
        %v3099 = vpop.f32.mrb[0].mxu0
        %3100 = vmatprep.mubr.bf16.mxu0 %v3000
        %3101 = vmatmul.mubr.bf16.gmra.mrb[0].mxu0 %v2867
        %v3102 = vpop.f32.mrb[0].mxu0
        %v3103 = vadd.f32 %v2934, %v3102
        %v3104 = vpop.f32.mrb[0].mxu0
        %v3105 = vpop.f32.mrb[0].mxu0
        %v3106 = vadd.f32 %v2934, %v3105
        %v3107 = vpop.f32.mrb[0].mxu0
        %3108 = vmatprep.mubr.bf16.mxu0 %v3003
        %3109 = vmatmul.mubr.bf16.gmra.mrb[0].mxu0 %v2870
        %v3110 = vpop.f32.mrb[0].mxu0
        %v3111 = vadd.f32 %v2934, %v3110
        %v3112 = vpop.f32.mrb[0].mxu0
        %v3113 = vpop.f32.mrb[0].mxu0
        %v3114 = vadd.f32 %v2934, %v3113
        %v3115 = vpop.f32.mrb[0].mxu0
        %3116 = vmatprep.mubr.bf16.mxu0 %v3006
        %3117 = vmatmul.mubr.bf16.gmra.mrb[0].mxu0 %v2873
        %v3118 = vpop.f32.mrb[0].mxu0
        %v3119 = vadd.f32 %v2934, %v3118
        %v3120 = vpop.f32.mrb[0].mxu0
        %v3121 = vpop.f32.mrb[0].mxu0
        %v3122 = vadd.f32 %v2934, %v3121
        %v3123 = vpop.f32.mrb[0].mxu0
        %3124 = vmatprep.mubr.bf16.mxu0 %v3009
        %3125 = vmatmul.mubr.bf16.gmra.mrb[0].mxu0 %v2876
        %v3126 = vpop.f32.mrb[0].mxu0
        %v3127 = vadd.f32 %v2934, %v3126
        %v3128 = vpop.f32.mrb[0].mxu0
        %v3129 = vpop.f32.mrb[0].mxu0
        %v3130 = vadd.f32 %v2934, %v3129
        %v3131 = vpop.f32.mrb[0].mxu0
        %3132 = vmatprep.mubr.bf16.mxu0 %v3012
        %3133 = vmatmul.mubr.bf16.gmra.mrb[0].mxu0 %v2879
        %v3134 = vpop.f32.mrb[0].mxu0
        %v3135 = vadd.f32 %v2934, %v3134
        %v3136 = vpop.f32.mrb[0].mxu0
        %v3137 = vpop.f32.mrb[0].mxu0
        %v3138 = vadd.f32 %v2934, %v3137
        %v3139 = vpop.f32.mrb[0].mxu0
        %3140 = vmatprep.mubr.bf16.mxu0 %v3015
        %3141 = vmatmul.mubr.bf16.gmra.mrb[0].mxu0 %v2882
        %v3142 = vpop.f32.mrb[0].mxu0
        %v3143 = vadd.f32 %v2934, %v3142
        %v3144 = vpop.f32.mrb[0].mxu0
        %v3145 = vpop.f32.mrb[0].mxu0
        %v3146 = vadd.f32 %v2934, %v3145
        %v3147 = vpop.f32.mrb[0].mxu0
        %3148 = vmatprep.mubr.bf16.mxu0 %v3018
        %3149 = vmatmul.mubr.bf16.gmra.mrb[0].mxu0 %v2885
        %v3150 = vpop.f32.mrb[0].mxu0
        %v3151 = vadd.f32 %v2934, %v3150
        %v3152 = vpop.f32.mrb[0].mxu0
        %v3153 = vpop.f32.mrb[0].mxu0
        %v3154 = vadd.f32 %v2934, %v3153
        %v3155 = vpop.f32.mrb[0].mxu0
        %3156 = vmatprep.mubr.bf16.mxu0 %v3021
        %3157 = vmatmul.mubr.bf16.gmra.mrb[0].mxu0 %v2888
        %v3158 = vpop.f32.mrb[0].mxu0
        %v3159 = vadd.f32 %v2934, %v3158
        %v3160 = vpop.f32.mrb[0].mxu0
        %v3161 = vpop.f32.mrb[0].mxu0
        %v3162 = vadd.f32 %v2934, %v3161
        %v3163 = vpop.f32.mrb[0].mxu0
        %3164 = vmatprep.mubr.bf16.mxu0 %v3024
        %3165 = vmatmul.mubr.bf16.gmra.mrb[0].mxu0 %v2891
        %v3166 = vpop.f32.mrb[0].mxu0
        %v3167 = vadd.f32 %v2934, %v3166
        %v3168 = vpop.f32.mrb[0].mxu0
        %v3169 = vpop.f32.mrb[0].mxu0
        %v3170 = vadd.f32 %v2934, %v3169
        %v3171 = vpop.f32.mrb[0].mxu0
        %3172 = vmatprep.mubr.bf16.mxu0 %v3027
        %3173 = vmatmul.mubr.bf16.gmra.mrb[0].mxu0 %v2894
        %v3174 = vpop.f32.mrb[0].mxu0
        %v3175 = vadd.f32 %v2934, %v3174
        %v3176 = vpop.f32.mrb[0].mxu0
        %v3177 = vpop.f32.mrb[0].mxu0
        %v3178 = vadd.f32 %v2934, %v3177
        %v3179 = vpop.f32.mrb[0].mxu0
        %3180 = vmatprep.mubr.bf16.mxu0 %v3030
        %3181 = vmatmul.mubr.bf16.gmra.mrb[0].mxu0 %v2897
        %v3182 = vpop.f32.mrb[0].mxu0
        %v3183 = vadd.f32 %v2934, %v3182
        %v3184 = vpop.f32.mrb[0].mxu0
        %v3185 = vpop.f32.mrb[0].mxu0
        %v3186 = vadd.f32 %v2934, %v3185
        %v3187 = vpop.f32.mrb[0].mxu0
        %3188 = vmatprep.mubr.bf16.mxu0 %v3033
        %3189 = vmatmul.mubr.bf16.gmra.mrb[0].mxu0 %v2900
        %v3190 = vpop.f32.mrb[0].mxu0
        %v3191 = vadd.f32 %v2934, %v3190
        %v3192 = vpop.f32.mrb[0].mxu0
        %v3193 = vpop.f32.mrb[0].mxu0
        %v3194 = vadd.f32 %v2934, %v3193
        %v3195 = vpop.f32.mrb[0].mxu0
        %3196 = vmatprep.mubr.bf16.mxu0 %v3036
        %3197 = vmatmul.mubr.bf16.gmra.mrb[0].mxu0 %v2903
        %v3198 = vpop.f32.mrb[0].mxu0
        %v3199 = vadd.f32 %v2934, %v3198
        %v3200 = vpop.f32.mrb[0].mxu0
        %v3201 = vpop.f32.mrb[0].mxu0
        %v3202 = vadd.f32 %v2934, %v3201
        %v3203 = vpop.f32.mrb[0].mxu0
        %3204 = vmatprep.mubr.bf16.mxu0 %v3039
        %3205 = vmatmul.mubr.bf16.gmra.mrb[0].mxu0 %v2906
        %v3206 = vpop.f32.mrb[0].mxu0
        %v3207 = vadd.f32 %v2934, %v3206
        %v3208 = vpop.f32.mrb[0].mxu0
        %v3209 = vpop.f32.mrb[0].mxu0
        %v3210 = vadd.f32 %v2934, %v3209
        %v3211 = vpop.f32.mrb[0].mxu0
        %3212 = vmatprep.mubr.bf16.mxu0 %v3042
        %3213 = vmatmul.mubr.bf16.gmra.mrb[0].mxu0 %v2909
        %v3214 = vpop.f32.mrb[0].mxu0
        %v3215 = vadd.f32 %v2934, %v3214
        %v3216 = vpop.f32.mrb[0].mxu0
        %v3217 = vpop.f32.mrb[0].mxu0
        %v3218 = vadd.f32 %v2934, %v3217
        %v3219 = vpop.f32.mrb[0].mxu0
        %3220 = vdwg.mxu0
        %v3221 = vmul.f32 %v3079, 0.1
        %v3222 = vmul.f32 %v3082, 0.1
        %v3223 = vmul.f32 %v3087, 0.1
        %v3224 = vmul.f32 %v3090, 0.1
        %v3225 = vmul.f32 %v3095, 0.1
        %v3226 = vmul.f32 %v3098, 0.1
        %v3227 = vmul.f32 %v3103, 0.1
        %v3228 = vmul.f32 %v3106, 0.1
        %v3229 = vmul.f32 %v3111, 0.1
        %v3230 = vmul.f32 %v3114, 0.1
        %v3231 = vmul.f32 %v3119, 0.1
        %v3232 = vmul.f32 %v3122, 0.1
        %v3233 = vmul.f32 %v3127, 0.1
        %v3234 = vmul.f32 %v3130, 0.1
        %v3235 = vmul.f32 %v3135, 0.1
        %v3236 = vmul.f32 %v3138, 0.1
        %v3237 = vmul.f32 %v3143, 0.1
        %v3238 = vmul.f32 %v3146, 0.1
        %v3239 = vmul.f32 %v3151, 0.1
        %v3240 = vmul.f32 %v3154, 0.1
        %v3241 = vmul.f32 %v3159, 0.1
        %v3242 = vmul.f32 %v3162, 0.1
        %v3243 = vmul.f32 %v3167, 0.1
        %v3244 = vmul.f32 %v3170, 0.1
        %v3245 = vmul.f32 %v3175, 0.1
        %v3246 = vmul.f32 %v3178, 0.1
        %v3247 = vmul.f32 %v3183, 0.1
        %v3248 = vmul.f32 %v3186, 0.1
        %v3249 = vmul.f32 %v3191, 0.1
        %v3250 = vmul.f32 %v3194, 0.1
        %v3251 = vmul.f32 %v3199, 0.1
        %v3252 = vmul.f32 %v3202, 0.1
        %v3253 = vmul.f32 %v3207, 0.1
        %v3254 = vmul.f32 %v3210, 0.1
        %v3255 = vmul.f32 %v3215, 0.1
        %v3256 = vmul.f32 %v3218, 0.1
        %v3257 = vmax.f32 %v3079, %v3221
        %v3258 = vmax.f32 %v3082, %v3222
        %v3259 = vmax.f32 %v3087, %v3223
        %v3260 = vmax.f32 %v3090, %v3224
        %v3261 = vmax.f32 %v3095, %v3225
        %v3262 = vmax.f32 %v3098, %v3226
        %v3263 = vmax.f32 %v3103, %v3227
        %v3264 = vmax.f32 %v3106, %v3228
        %v3265 = vmax.f32 %v3111, %v3229
        %v3266 = vmax.f32 %v3114, %v3230
        %v3267 = vmax.f32 %v3119, %v3231
        %v3268 = vmax.f32 %v3122, %v3232
        %v3269 = vmax.f32 %v3127, %v3233
        %v3270 = vmax.f32 %v3130, %v3234
        %v3271 = vmax.f32 %v3135, %v3235
        %v3272 = vmax.f32 %v3138, %v3236
        %v3273 = vmax.f32 %v3143, %v3237
        %v3274 = vmax.f32 %v3146, %v3238
        %v3275 = vmax.f32 %v3151, %v3239
        %v3276 = vmax.f32 %v3154, %v3240
        %v3277 = vmax.f32 %v3159, %v3241
        %v3278 = vmax.f32 %v3162, %v3242
        %v3279 = vmax.f32 %v3167, %v3243
        %v3280 = vmax.f32 %v3170, %v3244
        %v3281 = vmax.f32 %v3175, %v3245
        %v3282 = vmax.f32 %v3178, %v3246
        %v3283 = vmax.f32 %v3183, %v3247
        %v3284 = vmax.f32 %v3186, %v3248
        %v3285 = vmax.f32 %v3191, %v3249
        %v3286 = vmax.f32 %v3194, %v3250
        %v3287 = vmax.f32 %v3199, %v3251
        %v3288 = vmax.f32 %v3202, %v3252
        %v3289 = vmax.f32 %v3207, %v3253
        %v3290 = vmax.f32 %v3210, %v3254
        %v3291 = vmax.f32 %v3215, %v3255
        %v3292 = vmax.f32 %v3218, %v3256
        %v3293 = vpack.c.bf16 %v3258, %v3257
        %v3294 = vpack.c.bf16 %v3260, %v3259
        %v3295 = vpack.c.bf16 %v3262, %v3261
        %v3296 = vpack.c.bf16 %v3264, %v3263
        %v3297 = vpack.c.bf16 %v3266, %v3265
        %v3298 = vpack.c.bf16 %v3268, %v3267
        %v3299 = vpack.c.bf16 %v3270, %v3269
        %v3300 = vpack.c.bf16 %v3272, %v3271
        %v3301 = vpack.c.bf16 %v3274, %v3273
        %v3302 = vpack.c.bf16 %v3276, %v3275
        %v3303 = vpack.c.bf16 %v3278, %v3277
        %v3304 = vpack.c.bf16 %v3280, %v3279
        %v3305 = vpack.c.bf16 %v3282, %v3281
        %v3306 = vpack.c.bf16 %v3284, %v3283
        %v3307 = vpack.c.bf16 %v3286, %v3285
        %v3308 = vpack.c.bf16 %v3288, %v3287
        %v3309 = vpack.c.bf16 %v3290, %v3289
        %v3310 = vpack.c.bf16 %v3292, %v3291
        %v3311 = vld [vmem:[#allocation14] sm:$0xf]
        %v3312 = vld [vmem:[#allocation14 + $0x4] sm:$0xf]
        %v3313 = vld [vmem:[#allocation15] sm:$0x1]
        %v3315 = vlaneseq
        %v3316 = vshrl.u32 %v3315, 7
        %v3317 = vsub.s32 0, %v3316
        %v3318 = vrot.slane %v3313, %v3317
        %v3322 = vunpack.c.l.b16 %v3311
        %v3323 = vunpack.c.l.b16 %v3312
        %v3324 = vpack.c.b16 %v3323, %v3322
        %v3327 = vsel %vm2634, %v3293, 0
        %v3330 = vsel %vm2634, %v3294, 0
        %v3333 = vsel %vm2634, %v3295, 0
        %v3336 = vsel %vm2634, %v3296, 0
        %v3339 = vsel %vm2634, %v3297, 0
        %v3342 = vsel %vm2634, %v3298, 0
        %v3345 = vsel %vm2634, %v3299, 0
        %v3348 = vsel %vm2634, %v3300, 0
        %v3351 = vsel %vm2634, %v3301, 0
        %v3354 = vsel %vm2634, %v3302, 0
        %v3357 = vsel %vm2634, %v3303, 0
        %v3360 = vsel %vm2634, %v3304, 0
        %v3363 = vsel %vm2634, %v3305, 0
        %v3366 = vsel %vm2634, %v3306, 0
        %v3369 = vsel %vm2634, %v3307, 0
        %v3372 = vsel %vm2634, %v3308, 0
        %v3375 = vsel %vm2634, %v3309, 0
        %v3378 = vsel %vm2634, %v3310, 0
        %3380 = vmatprep.subr.bf16.mxu0 0
        %3381 = vmatpush1.bf16.msra.mxu0 %v3324
        %3382 = vmatprep.subr.bf16.mxu0 0
        %3383 = vmatpush1.bf16.msra.mxu0 0
        %3384 = vmatprep.subr.bf16.mxu0 0
        %3385 = vmatpush1.bf16.msra.mxu0 0
        %3386 = vmatprep.subr.bf16.mxu0 0
        %3387 = vmatpush1.bf16.msra.mxu0 0
        %3388 = vmatprep.subr.bf16.mxu0 0
        %3389 = vmatpush1.bf16.msra.mxu0 0
        %3390 = vmatprep.subr.bf16.mxu0 0
        %3391 = vmatpush1.bf16.msra.mxu0 0
        %3392 = vmatprep.subr.bf16.mxu0 0
        %3393 = vmatpush1.bf16.msra.mxu0 0
        %3394 = vmatprep.subr.bf16.mxu0 0
        %3395 = vmatpush1.bf16.msra.mxu0 0
        %3396 = vmatprep.subr.bf16.mxu0 0
        %3397 = vmatpush1.bf16.msra.mxu0 0
        %3398 = vmatprep.subr.bf16.mxu0 0
        %3399 = vmatpush1.bf16.msra.mxu0 0
        %3400 = vmatprep.subr.bf16.mxu0 0
        %3401 = vmatpush1.bf16.msra.mxu0 0
        %3402 = vmatprep.subr.bf16.mxu0 0
        %3403 = vmatpush1.bf16.msra.mxu0 0
        %3404 = vmatprep.subr.bf16.mxu0 0
        %3405 = vmatpush1.bf16.msra.mxu0 0
        %3406 = vmatprep.subr.bf16.mxu0 0
        %3407 = vmatpush1.bf16.msra.mxu0 0
        %3408 = vmatprep.subr.bf16.mxu0 0
        %3409 = vmatpush1.bf16.msra.mxu0 0
        %3410 = vmatprep.subr.bf16.mxu0 0
        %3411 = vmatpush1.bf16.msra.mxu0 0
        %3412 = vmatprep.mubr.bf16.mxu0 0
        %3413 = vmatmul.mubr.bf16.gmra.mrb[0].mxu0 %v3327
        %v3414 = vpop.f32.mrb[0].mxu0
        %v3415 = vadd.f32 %v3318, %v3414
        %v3416 = vpop.f32.mrb[0].mxu0
        %v3417 = vpop.f32.mrb[0].mxu0
        %v3418 = vadd.f32 %v3318, %v3417
        %v3419 = vpop.f32.mrb[0].mxu0
        %3420 = vmatprep.mubr.bf16.mxu0 0
        %3421 = vmatmul.mubr.bf16.gmra.mrb[0].mxu0 %v3330
        %v3422 = vpop.f32.mrb[0].mxu0
        %v3423 = vadd.f32 %v3318, %v3422
        %v3424 = vpop.f32.mrb[0].mxu0
        %v3425 = vpop.f32.mrb[0].mxu0
        %v3426 = vadd.f32 %v3318, %v3425
        %v3427 = vpop.f32.mrb[0].mxu0
        %3428 = vmatprep.mubr.bf16.mxu0 0
        %3429 = vmatmul.mubr.bf16.gmra.mrb[0].mxu0 %v3333
        %v3430 = vpop.f32.mrb[0].mxu0
        %v3431 = vadd.f32 %v3318, %v3430
        %v3432 = vpop.f32.mrb[0].mxu0
        %v3433 = vpop.f32.mrb[0].mxu0
        %v3434 = vadd.f32 %v3318, %v3433
        %v3435 = vpop.f32.mrb[0].mxu0
        %3436 = vmatprep.mubr.bf16.mxu0 0
        %3437 = vmatmul.mubr.bf16.gmra.mrb[0].mxu0 %v3336
        %v3438 = vpop.f32.mrb[0].mxu0
        %v3439 = vadd.f32 %v3318, %v3438
        %v3440 = vpop.f32.mrb[0].mxu0
        %v3441 = vpop.f32.mrb[0].mxu0
        %v3442 = vadd.f32 %v3318, %v3441
        %v3443 = vpop.f32.mrb[0].mxu0
        %3444 = vmatprep.mubr.bf16.mxu0 0
        %3445 = vmatmul.mubr.bf16.gmra.mrb[0].mxu0 %v3339
        %v3446 = vpop.f32.mrb[0].mxu0
        %v3447 = vadd.f32 %v3318, %v3446
        %v3448 = vpop.f32.mrb[0].mxu0
        %v3449 = vpop.f32.mrb[0].mxu0
        %v3450 = vadd.f32 %v3318, %v3449
        %v3451 = vpop.f32.mrb[0].mxu0
        %3452 = vmatprep.mubr.bf16.mxu0 0
        %3453 = vmatmul.mubr.bf16.gmra.mrb[0].mxu0 %v3342
        %v3454 = vpop.f32.mrb[0].mxu0
        %v3455 = vadd.f32 %v3318, %v3454
        %v3456 = vpop.f32.mrb[0].mxu0
        %v3457 = vpop.f32.mrb[0].mxu0
        %v3458 = vadd.f32 %v3318, %v3457
        %v3459 = vpop.f32.mrb[0].mxu0
        %3460 = vmatprep.mubr.bf16.mxu0 0
        %3461 = vmatmul.mubr.bf16.gmra.mrb[0].mxu0 %v3345
        %v3462 = vpop.f32.mrb[0].mxu0
        %v3463 = vadd.f32 %v3318, %v3462
        %v3464 = vpop.f32.mrb[0].mxu0
        %v3465 = vpop.f32.mrb[0].mxu0
        %v3466 = vadd.f32 %v3318, %v3465
        %v3467 = vpop.f32.mrb[0].mxu0
        %3468 = vmatprep.mubr.bf16.mxu0 0
        %3469 = vmatmul.mubr.bf16.gmra.mrb[0].mxu0 %v3348
        %v3470 = vpop.f32.mrb[0].mxu0
        %v3471 = vadd.f32 %v3318, %v3470
        %v3472 = vpop.f32.mrb[0].mxu0
        %v3473 = vpop.f32.mrb[0].mxu0
        %v3474 = vadd.f32 %v3318, %v3473
        %v3475 = vpop.f32.mrb[0].mxu0
        %3476 = vmatprep.mubr.bf16.mxu0 0
        %3477 = vmatmul.mubr.bf16.gmra.mrb[0].mxu0 %v3351
        %v3478 = vpop.f32.mrb[0].mxu0
        %v3479 = vadd.f32 %v3318, %v3478
        %v3480 = vpop.f32.mrb[0].mxu0
        %v3481 = vpop.f32.mrb[0].mxu0
        %v3482 = vadd.f32 %v3318, %v3481
        %v3483 = vpop.f32.mrb[0].mxu0
        %3484 = vmatprep.mubr.bf16.mxu0 0
        %3485 = vmatmul.mubr.bf16.gmra.mrb[0].mxu0 %v3354
        %v3486 = vpop.f32.mrb[0].mxu0
        %v3487 = vadd.f32 %v3318, %v3486
        %v3488 = vpop.f32.mrb[0].mxu0
        %v3489 = vpop.f32.mrb[0].mxu0
        %v3490 = vadd.f32 %v3318, %v3489
        %v3491 = vpop.f32.mrb[0].mxu0
        %3492 = vmatprep.mubr.bf16.mxu0 0
        %3493 = vmatmul.mubr.bf16.gmra.mrb[0].mxu0 %v3357
        %v3494 = vpop.f32.mrb[0].mxu0
        %v3495 = vadd.f32 %v3318, %v3494
        %v3496 = vpop.f32.mrb[0].mxu0
        %v3497 = vpop.f32.mrb[0].mxu0
        %v3498 = vadd.f32 %v3318, %v3497
        %v3499 = vpop.f32.mrb[0].mxu0
        %3500 = vmatprep.mubr.bf16.mxu0 0
        %3501 = vmatmul.mubr.bf16.gmra.mrb[0].mxu0 %v3360
        %v3502 = vpop.f32.mrb[0].mxu0
        %v3503 = vadd.f32 %v3318, %v3502
        %v3504 = vpop.f32.mrb[0].mxu0
        %v3505 = vpop.f32.mrb[0].mxu0
        %v3506 = vadd.f32 %v3318, %v3505
        %v3507 = vpop.f32.mrb[0].mxu0
        %3508 = vmatprep.mubr.bf16.mxu0 0
        %3509 = vmatmul.mubr.bf16.gmra.mrb[0].mxu0 %v3363
        %v3510 = vpop.f32.mrb[0].mxu0
        %v3511 = vadd.f32 %v3318, %v3510
        %v3512 = vpop.f32.mrb[0].mxu0
        %v3513 = vpop.f32.mrb[0].mxu0
        %v3514 = vadd.f32 %v3318, %v3513
        %v3515 = vpop.f32.mrb[0].mxu0
        %3516 = vmatprep.mubr.bf16.mxu0 0
        %3517 = vmatmul.mubr.bf16.gmra.mrb[0].mxu0 %v3366
        %v3518 = vpop.f32.mrb[0].mxu0
        %v3519 = vadd.f32 %v3318, %v3518
        %v3520 = vpop.f32.mrb[0].mxu0
        %v3521 = vpop.f32.mrb[0].mxu0
        %v3522 = vadd.f32 %v3318, %v3521
        %v3523 = vpop.f32.mrb[0].mxu0
        %3524 = vmatprep.mubr.bf16.mxu0 0
        %3525 = vmatmul.mubr.bf16.gmra.mrb[0].mxu0 %v3369
        %v3526 = vpop.f32.mrb[0].mxu0
        %v3527 = vadd.f32 %v3318, %v3526
        %v3528 = vpop.f32.mrb[0].mxu0
        %v3529 = vpop.f32.mrb[0].mxu0
        %v3530 = vadd.f32 %v3318, %v3529
        %v3531 = vpop.f32.mrb[0].mxu0
        %3532 = vmatprep.mubr.bf16.mxu0 0
        %3533 = vmatmul.mubr.bf16.gmra.mrb[0].mxu0 %v3372
        %v3534 = vpop.f32.mrb[0].mxu0
        %v3535 = vadd.f32 %v3318, %v3534
        %v3536 = vpop.f32.mrb[0].mxu0
        %v3537 = vpop.f32.mrb[0].mxu0
        %v3538 = vadd.f32 %v3318, %v3537
        %v3539 = vpop.f32.mrb[0].mxu0
        %3540 = vmatprep.mubr.bf16.mxu0 0
        %3541 = vmatmul.mubr.bf16.gmra.mrb[0].mxu0 %v3375
        %v3542 = vpop.f32.mrb[0].mxu0
        %v3543 = vadd.f32 %v3318, %v3542
        %v3544 = vpop.f32.mrb[0].mxu0
        %v3545 = vpop.f32.mrb[0].mxu0
        %v3546 = vadd.f32 %v3318, %v3545
        %v3547 = vpop.f32.mrb[0].mxu0
        %3548 = vmatprep.mubr.bf16.mxu0 0
        %3549 = vmatmul.mubr.bf16.gmra.mrb[0].mxu0 %v3378
        %v3550 = vpop.f32.mrb[0].mxu0
        %v3551 = vadd.f32 %v3318, %v3550
        %v3552 = vpop.f32.mrb[0].mxu0
        %v3553 = vpop.f32.mrb[0].mxu0
        %v3554 = vadd.f32 %v3318, %v3553
        %v3555 = vpop.f32.mrb[0].mxu0
        %3556 = vdwg.mxu0
        %v3557 = vpack.c.bf16 %v3418, %v3415
        %v3558 = vpack.c.bf16 %v3426, %v3423
        %v3559 = vpack.c.bf16 %v3434, %v3431
        %v3560 = vpack.c.bf16 %v3442, %v3439
        %v3561 = vpack.c.bf16 %v3450, %v3447
        %v3562 = vpack.c.bf16 %v3458, %v3455
        %v3563 = vpack.c.bf16 %v3466, %v3463
        %v3564 = vpack.c.bf16 %v3474, %v3471
        %v3565 = vpack.c.bf16 %v3482, %v3479
        %v3566 = vpack.c.bf16 %v3490, %v3487
        %v3567 = vpack.c.bf16 %v3498, %v3495
        %v3568 = vpack.c.bf16 %v3506, %v3503
        %v3569 = vpack.c.bf16 %v3514, %v3511
        %v3570 = vpack.c.bf16 %v3522, %v3519
        %v3571 = vpack.c.bf16 %v3530, %v3527
        %v3572 = vpack.c.bf16 %v3538, %v3535
        %v3573 = vpack.c.bf16 %v3546, %v3543
        %v3574 = vpack.c.bf16 %v3554, %v3551
        %v3575 = vld [vmem:[#allocation17] sm:$0xf]
        %v3576 = vld [vmem:[#allocation17 + $0x4] sm:$0xf]
        %v3577 = vld [vmem:[#allocation18] sm:$0xf]
        %v3578 = vld [vmem:[#allocation18 + $0x4] sm:$0xf]
        %3597 = vrot.lane.b32.xlu0 %v911, 112
        %v3598 = vpop.permute.xlu0 %3597
        %3599 = vrot.lane.b32.xlu0 %v912, 112
        %v3600 = vpop.permute.xlu0 %3599
        %3601 = vrot.lane.b32.xlu0 %v913, 112
        %v3602 = vpop.permute.xlu0 %3601
        %3603 = vrot.lane.b32.xlu0 %v914, 112
        %v3604 = vpop.permute.xlu0 %3603
        %3605 = vrot.lane.b32.xlu0 %v915, 112
        %v3606 = vpop.permute.xlu0 %3605
        %3607 = vrot.lane.b32.xlu0 %v916, 112
        %v3608 = vpop.permute.xlu0 %3607
        %3609 = vrot.lane.b32.xlu0 %v917, 112
        %v3610 = vpop.permute.xlu0 %3609
        %3611 = vrot.lane.b32.xlu0 %v918, 112
        %v3612 = vpop.permute.xlu0 %3611
        %3613 = vrot.lane.b32.xlu0 %v919, 112
        %v3614 = vpop.permute.xlu0 %3613
        %3615 = vrot.lane.b32.xlu0 %v920, 112
        %v3616 = vpop.permute.xlu0 %3615
        %3617 = vrot.lane.b32.xlu0 %v921, 112
        %v3618 = vpop.permute.xlu0 %3617
        %3619 = vrot.lane.b32.xlu0 %v922, 112
        %v3620 = vpop.permute.xlu0 %3619
        %3621 = vrot.lane.b32.xlu0 %v923, 112
        %v3622 = vpop.permute.xlu0 %3621
        %3623 = vrot.lane.b32.xlu0 %v924, 112
        %v3624 = vpop.permute.xlu0 %3623
        %3625 = vrot.lane.b32.xlu0 %v925, 112
        %v3626 = vpop.permute.xlu0 %3625
        %3627 = vrot.lane.b32.xlu0 %v926, 112
        %v3628 = vpop.permute.xlu0 %3627
        %3629 = vrot.lane.b32.xlu0 %v927, 112
        %v3630 = vpop.permute.xlu0 %3629
        %3631 = vrot.lane.b32.xlu0 %v928, 112
        %v3632 = vpop.permute.xlu0 %3631
        %v3635 = vunpack.c.l.b16 %v3577
        %v3636 = vunpack.c.l.b16 %v3578
        %v3637 = vpack.c.b16 %v3636, %v3635
        %v3640 = vsel %vm2634, %v3598, 0
        %v3643 = vsel %vm2634, %v3600, 0
        %v3646 = vsel %vm2634, %v3602, 0
        %v3649 = vsel %vm2634, %v3604, 0
        %v3652 = vsel %vm2634, %v3606, 0
        %v3655 = vsel %vm2634, %v3608, 0
        %v3658 = vsel %vm2634, %v3610, 0
        %v3661 = vsel %vm2634, %v3612, 0
        %v3664 = vsel %vm2634, %v3614, 0
        %v3667 = vsel %vm2634, %v3616, 0
        %v3670 = vsel %vm2634, %v3618, 0
        %v3673 = vsel %vm2634, %v3620, 0
        %v3676 = vsel %vm2634, %v3622, 0
        %v3679 = vsel %vm2634, %v3624, 0
        %v3682 = vsel %vm2634, %v3626, 0
        %v3685 = vsel %vm2634, %v3628, 0
        %v3688 = vsel %vm2634, %v3630, 0
        %v3691 = vsel %vm2634, %v3632, 0
        %3693 = vmatprep.subr.bf16.mxu0 0
        %3694 = vmatpush1.bf16.msra.mxu0 %v3637
        %3695 = vmatprep.subr.bf16.mxu0 0
        %3696 = vmatpush1.bf16.msra.mxu0 0
        %3697 = vmatprep.subr.bf16.mxu0 0
        %3698 = vmatpush1.bf16.msra.mxu0 0
        %3699 = vmatprep.subr.bf16.mxu0 0
        %3700 = vmatpush1.bf16.msra.mxu0 0
        %3701 = vmatprep.subr.bf16.mxu0 0
        %3702 = vmatpush1.bf16.msra.mxu0 0
        %3703 = vmatprep.subr.bf16.mxu0 0
        %3704 = vmatpush1.bf16.msra.mxu0 0
        %3705 = vmatprep.subr.bf16.mxu0 0
        %3706 = vmatpush1.bf16.msra.mxu0 0
        %3707 = vmatprep.subr.bf16.mxu0 0
        %3708 = vmatpush1.bf16.msra.mxu0 0
        %3709 = vmatprep.subr.bf16.mxu0 0
        %3710 = vmatpush1.bf16.msra.mxu0 0
        %3711 = vmatprep.subr.bf16.mxu0 0
        %3712 = vmatpush1.bf16.msra.mxu0 0
        %3713 = vmatprep.subr.bf16.mxu0 0
        %3714 = vmatpush1.bf16.msra.mxu0 0
        %3715 = vmatprep.subr.bf16.mxu0 0
        %3716 = vmatpush1.bf16.msra.mxu0 0
        %3717 = vmatprep.subr.bf16.mxu0 0
        %3718 = vmatpush1.bf16.msra.mxu0 0
        %3719 = vmatprep.subr.bf16.mxu0 0
        %3720 = vmatpush1.bf16.msra.mxu0 0
        %3721 = vmatprep.subr.bf16.mxu0 0
        %3722 = vmatpush1.bf16.msra.mxu0 0
        %3723 = vmatprep.subr.bf16.mxu0 0
        %3724 = vmatpush1.bf16.msra.mxu0 0
        %3725 = vmatprep.mubr.bf16.mxu0 0
        %3726 = vmatmul.mubr.bf16.gmra.mrb[0].mxu0 %v3640
        %v3727 = vpop.f32.mrb[0].mxu0
        %v3728 = vadd.f32 0.0, %v3727
        %v3729 = vpop.f32.mrb[0].mxu0
        %v3730 = vpop.f32.mrb[0].mxu0
        %v3731 = vadd.f32 0.0, %v3730
        %v3732 = vpop.f32.mrb[0].mxu0
        %3733 = vmatprep.mubr.bf16.mxu0 0
        %3734 = vmatmul.mubr.bf16.gmra.mrb[0].mxu0 %v3643
        %v3735 = vpop.f32.mrb[0].mxu0
        %v3736 = vadd.f32 0.0, %v3735
        %v3737 = vpop.f32.mrb[0].mxu0
        %v3738 = vpop.f32.mrb[0].mxu0
        %v3739 = vadd.f32 0.0, %v3738
        %v3740 = vpop.f32.mrb[0].mxu0
        %3741 = vmatprep.mubr.bf16.mxu0 0
        %3742 = vmatmul.mubr.bf16.gmra.mrb[0].mxu0 %v3646
        %v3743 = vpop.f32.mrb[0].mxu0
        %v3744 = vadd.f32 0.0, %v3743
        %v3745 = vpop.f32.mrb[0].mxu0
        %v3746 = vpop.f32.mrb[0].mxu0
        %v3747 = vadd.f32 0.0, %v3746
        %v3748 = vpop.f32.mrb[0].mxu0
        %3749 = vmatprep.mubr.bf16.mxu0 0
        %3750 = vmatmul.mubr.bf16.gmra.mrb[0].mxu0 %v3649
        %v3751 = vpop.f32.mrb[0].mxu0
        %v3752 = vadd.f32 0.0, %v3751
        %v3753 = vpop.f32.mrb[0].mxu0
        %v3754 = vpop.f32.mrb[0].mxu0
        %v3755 = vadd.f32 0.0, %v3754
        %v3756 = vpop.f32.mrb[0].mxu0
        %3757 = vmatprep.mubr.bf16.mxu0 0
        %3758 = vmatmul.mubr.bf16.gmra.mrb[0].mxu0 %v3652
        %v3759 = vpop.f32.mrb[0].mxu0
        %v3760 = vadd.f32 0.0, %v3759
        %v3761 = vpop.f32.mrb[0].mxu0
        %v3762 = vpop.f32.mrb[0].mxu0
        %v3763 = vadd.f32 0.0, %v3762
        %v3764 = vpop.f32.mrb[0].mxu0
        %3765 = vmatprep.mubr.bf16.mxu0 0
        %3766 = vmatmul.mubr.bf16.gmra.mrb[0].mxu0 %v3655
        %v3767 = vpop.f32.mrb[0].mxu0
        %v3768 = vadd.f32 0.0, %v3767
        %v3769 = vpop.f32.mrb[0].mxu0
        %v3770 = vpop.f32.mrb[0].mxu0
        %v3771 = vadd.f32 0.0, %v3770
        %v3772 = vpop.f32.mrb[0].mxu0
        %3773 = vmatprep.mubr.bf16.mxu0 0
        %3774 = vmatmul.mubr.bf16.gmra.mrb[0].mxu0 %v3658
        %v3775 = vpop.f32.mrb[0].mxu0
        %v3776 = vadd.f32 0.0, %v3775
        %v3777 = vpop.f32.mrb[0].mxu0
        %v3778 = vpop.f32.mrb[0].mxu0
        %v3779 = vadd.f32 0.0, %v3778
        %v3780 = vpop.f32.mrb[0].mxu0
        %3781 = vmatprep.mubr.bf16.mxu0 0
        %3782 = vmatmul.mubr.bf16.gmra.mrb[0].mxu0 %v3661
        %v3783 = vpop.f32.mrb[0].mxu0
        %v3784 = vadd.f32 0.0, %v3783
        %v3785 = vpop.f32.mrb[0].mxu0
        %v3786 = vpop.f32.mrb[0].mxu0
        %v3787 = vadd.f32 0.0, %v3786
        %v3788 = vpop.f32.mrb[0].mxu0
        %3789 = vmatprep.mubr.bf16.mxu0 0
        %3790 = vmatmul.mubr.bf16.gmra.mrb[0].mxu0 %v3664
        %v3791 = vpop.f32.mrb[0].mxu0
        %v3792 = vadd.f32 0.0, %v3791
        %v3793 = vpop.f32.mrb[0].mxu0
        %v3794 = vpop.f32.mrb[0].mxu0
        %v3795 = vadd.f32 0.0, %v3794
        %v3796 = vpop.f32.mrb[0].mxu0
        %3797 = vmatprep.mubr.bf16.mxu0 0
        %3798 = vmatmul.mubr.bf16.gmra.mrb[0].mxu0 %v3667
        %v3799 = vpop.f32.mrb[0].mxu0
        %v3800 = vadd.f32 0.0, %v3799
        %v3801 = vpop.f32.mrb[0].mxu0
        %v3802 = vpop.f32.mrb[0].mxu0
        %v3803 = vadd.f32 0.0, %v3802
        %v3804 = vpop.f32.mrb[0].mxu0
        %3805 = vmatprep.mubr.bf16.mxu0 0
        %3806 = vmatmul.mubr.bf16.gmra.mrb[0].mxu0 %v3670
        %v3807 = vpop.f32.mrb[0].mxu0
        %v3808 = vadd.f32 0.0, %v3807
        %v3809 = vpop.f32.mrb[0].mxu0
        %v3810 = vpop.f32.mrb[0].mxu0
        %v3811 = vadd.f32 0.0, %v3810
        %v3812 = vpop.f32.mrb[0].mxu0
        %3813 = vmatprep.mubr.bf16.mxu0 0
        %3814 = vmatmul.mubr.bf16.gmra.mrb[0].mxu0 %v3673
        %v3815 = vpop.f32.mrb[0].mxu0
        %v3816 = vadd.f32 0.0, %v3815
        %v3817 = vpop.f32.mrb[0].mxu0
        %v3818 = vpop.f32.mrb[0].mxu0
        %v3819 = vadd.f32 0.0, %v3818
        %v3820 = vpop.f32.mrb[0].mxu0
        %3821 = vmatprep.mubr.bf16.mxu0 0
        %3822 = vmatmul.mubr.bf16.gmra.mrb[0].mxu0 %v3676
        %v3823 = vpop.f32.mrb[0].mxu0
        %v3824 = vadd.f32 0.0, %v3823
        %v3825 = vpop.f32.mrb[0].mxu0
        %v3826 = vpop.f32.mrb[0].mxu0
        %v3827 = vadd.f32 0.0, %v3826
        %v3828 = vpop.f32.mrb[0].mxu0
        %3829 = vmatprep.mubr.bf16.mxu0 0
        %3830 = vmatmul.mubr.bf16.gmra.mrb[0].mxu0 %v3679
        %v3831 = vpop.f32.mrb[0].mxu0
        %v3832 = vadd.f32 0.0, %v3831
        %v3833 = vpop.f32.mrb[0].mxu0
        %v3834 = vpop.f32.mrb[0].mxu0
        %v3835 = vadd.f32 0.0, %v3834
        %v3836 = vpop.f32.mrb[0].mxu0
        %3837 = vmatprep.mubr.bf16.mxu0 0
        %3838 = vmatmul.mubr.bf16.gmra.mrb[0].mxu0 %v3682
        %v3839 = vpop.f32.mrb[0].mxu0
        %v3840 = vadd.f32 0.0, %v3839
        %v3841 = vpop.f32.mrb[0].mxu0
        %v3842 = vpop.f32.mrb[0].mxu0
        %v3843 = vadd.f32 0.0, %v3842
        %v3844 = vpop.f32.mrb[0].mxu0
        %3845 = vmatprep.mubr.bf16.mxu0 0
        %3846 = vmatmul.mubr.bf16.gmra.mrb[0].mxu0 %v3685
        %v3847 = vpop.f32.mrb[0].mxu0
        %v3848 = vadd.f32 0.0, %v3847
        %v3849 = vpop.f32.mrb[0].mxu0
        %v3850 = vpop.f32.mrb[0].mxu0
        %v3851 = vadd.f32 0.0, %v3850
        %v3852 = vpop.f32.mrb[0].mxu0
        %3853 = vmatprep.mubr.bf16.mxu0 0
        %3854 = vmatmul.mubr.bf16.gmra.mrb[0].mxu0 %v3688
        %v3855 = vpop.f32.mrb[0].mxu0
        %v3856 = vadd.f32 0.0, %v3855
        %v3857 = vpop.f32.mrb[0].mxu0
        %v3858 = vpop.f32.mrb[0].mxu0
        %v3859 = vadd.f32 0.0, %v3858
        %v3860 = vpop.f32.mrb[0].mxu0
        %3861 = vmatprep.mubr.bf16.mxu0 0
        %3862 = vmatmul.mubr.bf16.gmra.mrb[0].mxu0 %v3691
        %v3863 = vpop.f32.mrb[0].mxu0
        %v3864 = vadd.f32 0.0, %v3863
        %v3865 = vpop.f32.mrb[0].mxu0
        %v3866 = vpop.f32.mrb[0].mxu0
        %v3867 = vadd.f32 0.0, %v3866
        %v3868 = vpop.f32.mrb[0].mxu0
        %3869 = vdwg.mxu0
        %v3872 = vunpack.c.l.b16 %v3575
        %v3873 = vunpack.c.l.b16 %v3576
        %v3874 = vpack.c.b16 %v3873, %v3872
        %v3877 = vsel %vm2634, %v3557, 0
        %v3880 = vsel %vm2634, %v3558, 0
        %v3883 = vsel %vm2634, %v3559, 0
        %v3886 = vsel %vm2634, %v3560, 0
        %v3889 = vsel %vm2634, %v3561, 0
        %v3892 = vsel %vm2634, %v3562, 0
        %v3895 = vsel %vm2634, %v3563, 0
        %v3898 = vsel %vm2634, %v3564, 0
        %v3901 = vsel %vm2634, %v3565, 0
        %v3904 = vsel %vm2634, %v3566, 0
        %v3907 = vsel %vm2634, %v3567, 0
        %v3910 = vsel %vm2634, %v3568, 0
        %v3913 = vsel %vm2634, %v3569, 0
        %v3916 = vsel %vm2634, %v3570, 0
        %v3919 = vsel %vm2634, %v3571, 0
        %v3922 = vsel %vm2634, %v3572, 0
        %v3925 = vsel %vm2634, %v3573, 0
        %v3928 = vsel %vm2634, %v3574, 0
        %3930 = vmatprep.subr.bf16.mxu0 0
        %3931 = vmatpush1.bf16.msra.mxu0 %v3874
        %3932 = vmatprep.subr.bf16.mxu0 0
        %3933 = vmatpush1.bf16.msra.mxu0 0
        %3934 = vmatprep.subr.bf16.mxu0 0
        %3935 = vmatpush1.bf16.msra.mxu0 0
        %3936 = vmatprep.subr.bf16.mxu0 0
        %3937 = vmatpush1.bf16.msra.mxu0 0
        %3938 = vmatprep.subr.bf16.mxu0 0
        %3939 = vmatpush1.bf16.msra.mxu0 0
        %3940 = vmatprep.subr.bf16.mxu0 0
        %3941 = vmatpush1.bf16.msra.mxu0 0
        %3942 = vmatprep.subr.bf16.mxu0 0
        %3943 = vmatpush1.bf16.msra.mxu0 0
        %3944 = vmatprep.subr.bf16.mxu0 0
        %3945 = vmatpush1.bf16.msra.mxu0 0
        %3946 = vmatprep.subr.bf16.mxu0 0
        %3947 = vmatpush1.bf16.msra.mxu0 0
        %3948 = vmatprep.subr.bf16.mxu0 0
        %3949 = vmatpush1.bf16.msra.mxu0 0
        %3950 = vmatprep.subr.bf16.mxu0 0
        %3951 = vmatpush1.bf16.msra.mxu0 0
        %3952 = vmatprep.subr.bf16.mxu0 0
        %3953 = vmatpush1.bf16.msra.mxu0 0
        %3954 = vmatprep.subr.bf16.mxu0 0
        %3955 = vmatpush1.bf16.msra.mxu0 0
        %3956 = vmatprep.subr.bf16.mxu0 0
        %3957 = vmatpush1.bf16.msra.mxu0 0
        %3958 = vmatprep.subr.bf16.mxu0 0
        %3959 = vmatpush1.bf16.msra.mxu0 0
        %3960 = vmatprep.subr.bf16.mxu0 0
        %3961 = vmatpush1.bf16.msra.mxu0 0
        %3962 = vmatprep.mubr.bf16.mxu0 0
        %3963 = vmatmul.mubr.bf16.gmra.mrb[0].mxu0 %v3877
        %v3964 = vpop.f32.mrb[0].mxu0
        %v3965 = vadd.f32 %v3728, %v3964
        %v3966 = vpop.f32.mrb[0].mxu0
        %v3967 = vpop.f32.mrb[0].mxu0
        %v3968 = vadd.f32 %v3731, %v3967
        %v3969 = vpop.f32.mrb[0].mxu0
        %3970 = vmatprep.mubr.bf16.mxu0 0
        %3971 = vmatmul.mubr.bf16.gmra.mrb[0].mxu0 %v3880
        %v3972 = vpop.f32.mrb[0].mxu0
        %v3973 = vadd.f32 %v3736, %v3972
        %v3974 = vpop.f32.mrb[0].mxu0
        %v3975 = vpop.f32.mrb[0].mxu0
        %v3976 = vadd.f32 %v3739, %v3975
        %v3977 = vpop.f32.mrb[0].mxu0
        %3978 = vmatprep.mubr.bf16.mxu0 0
        %3979 = vmatmul.mubr.bf16.gmra.mrb[0].mxu0 %v3883
        %v3980 = vpop.f32.mrb[0].mxu0
        %v3981 = vadd.f32 %v3744, %v3980
        %v3982 = vpop.f32.mrb[0].mxu0
        %v3983 = vpop.f32.mrb[0].mxu0
        %v3984 = vadd.f32 %v3747, %v3983
        %v3985 = vpop.f32.mrb[0].mxu0
        %3986 = vmatprep.mubr.bf16.mxu0 0
        %3987 = vmatmul.mubr.bf16.gmra.mrb[0].mxu0 %v3886
        %v3988 = vpop.f32.mrb[0].mxu0
        %v3989 = vadd.f32 %v3752, %v3988
        %v3990 = vpop.f32.mrb[0].mxu0
        %v3991 = vpop.f32.mrb[0].mxu0
        %v3992 = vadd.f32 %v3755, %v3991
        %v3993 = vpop.f32.mrb[0].mxu0
        %3994 = vmatprep.mubr.bf16.mxu0 0
        %3995 = vmatmul.mubr.bf16.gmra.mrb[0].mxu0 %v3889
        %v3996 = vpop.f32.mrb[0].mxu0
        %v3997 = vadd.f32 %v3760, %v3996
        %v3998 = vpop.f32.mrb[0].mxu0
        %v3999 = vpop.f32.mrb[0].mxu0
        %v4000 = vadd.f32 %v3763, %v3999
        %v4001 = vpop.f32.mrb[0].mxu0
        %4002 = vmatprep.mubr.bf16.mxu0 0
        %4003 = vmatmul.mubr.bf16.gmra.mrb[0].mxu0 %v3892
        %v4004 = vpop.f32.mrb[0].mxu0
        %v4005 = vadd.f32 %v3768, %v4004
        %v4006 = vpop.f32.mrb[0].mxu0
        %v4007 = vpop.f32.mrb[0].mxu0
        %v4008 = vadd.f32 %v3771, %v4007
        %v4009 = vpop.f32.mrb[0].mxu0
        %4010 = vmatprep.mubr.bf16.mxu0 0
        %4011 = vmatmul.mubr.bf16.gmra.mrb[0].mxu0 %v3895
        %v4012 = vpop.f32.mrb[0].mxu0
        %v4013 = vadd.f32 %v3776, %v4012
        %v4014 = vpop.f32.mrb[0].mxu0
        %v4015 = vpop.f32.mrb[0].mxu0
        %v4016 = vadd.f32 %v3779, %v4015
        %v4017 = vpop.f32.mrb[0].mxu0
        %4018 = vmatprep.mubr.bf16.mxu0 0
        %4019 = vmatmul.mubr.bf16.gmra.mrb[0].mxu0 %v3898
        %v4020 = vpop.f32.mrb[0].mxu0
        %v4021 = vadd.f32 %v3784, %v4020
        %v4022 = vpop.f32.mrb[0].mxu0
        %v4023 = vpop.f32.mrb[0].mxu0
        %v4024 = vadd.f32 %v3787, %v4023
        %v4025 = vpop.f32.mrb[0].mxu0
        %4026 = vmatprep.mubr.bf16.mxu0 0
        %4027 = vmatmul.mubr.bf16.gmra.mrb[0].mxu0 %v3901
        %v4028 = vpop.f32.mrb[0].mxu0
        %v4029 = vadd.f32 %v3792, %v4028
        %v4030 = vpop.f32.mrb[0].mxu0
        %v4031 = vpop.f32.mrb[0].mxu0
        %v4032 = vadd.f32 %v3795, %v4031
        %v4033 = vpop.f32.mrb[0].mxu0
        %4034 = vmatprep.mubr.bf16.mxu0 0
        %4035 = vmatmul.mubr.bf16.gmra.mrb[0].mxu0 %v3904
        %v4036 = vpop.f32.mrb[0].mxu0
        %v4037 = vadd.f32 %v3800, %v4036
        %v4038 = vpop.f32.mrb[0].mxu0
        %v4039 = vpop.f32.mrb[0].mxu0
        %v4040 = vadd.f32 %v3803, %v4039
        %v4041 = vpop.f32.mrb[0].mxu0
        %4042 = vmatprep.mubr.bf16.mxu0 0
        %4043 = vmatmul.mubr.bf16.gmra.mrb[0].mxu0 %v3907
        %v4044 = vpop.f32.mrb[0].mxu0
        %v4045 = vadd.f32 %v3808, %v4044
        %v4046 = vpop.f32.mrb[0].mxu0
        %v4047 = vpop.f32.mrb[0].mxu0
        %v4048 = vadd.f32 %v3811, %v4047
        %v4049 = vpop.f32.mrb[0].mxu0
        %4050 = vmatprep.mubr.bf16.mxu0 0
        %4051 = vmatmul.mubr.bf16.gmra.mrb[0].mxu0 %v3910
        %v4052 = vpop.f32.mrb[0].mxu0
        %v4053 = vadd.f32 %v3816, %v4052
        %v4054 = vpop.f32.mrb[0].mxu0
        %v4055 = vpop.f32.mrb[0].mxu0
        %v4056 = vadd.f32 %v3819, %v4055
        %v4057 = vpop.f32.mrb[0].mxu0
        %4058 = vmatprep.mubr.bf16.mxu0 0
        %4059 = vmatmul.mubr.bf16.gmra.mrb[0].mxu0 %v3913
        %v4060 = vpop.f32.mrb[0].mxu0
        %v4061 = vadd.f32 %v3824, %v4060
        %v4062 = vpop.f32.mrb[0].mxu0
        %v4063 = vpop.f32.mrb[0].mxu0
        %v4064 = vadd.f32 %v3827, %v4063
        %v4065 = vpop.f32.mrb[0].mxu0
        %4066 = vmatprep.mubr.bf16.mxu0 0
        %4067 = vmatmul.mubr.bf16.gmra.mrb[0].mxu0 %v3916
        %v4068 = vpop.f32.mrb[0].mxu0
        %v4069 = vadd.f32 %v3832, %v4068
        %v4070 = vpop.f32.mrb[0].mxu0
        %v4071 = vpop.f32.mrb[0].mxu0
        %v4072 = vadd.f32 %v3835, %v4071
        %v4073 = vpop.f32.mrb[0].mxu0
        %4074 = vmatprep.mubr.bf16.mxu0 0
        %4075 = vmatmul.mubr.bf16.gmra.mrb[0].mxu0 %v3919
        %v4076 = vpop.f32.mrb[0].mxu0
        %v4077 = vadd.f32 %v3840, %v4076
        %v4078 = vpop.f32.mrb[0].mxu0
        %v4079 = vpop.f32.mrb[0].mxu0
        %v4080 = vadd.f32 %v3843, %v4079
        %v4081 = vpop.f32.mrb[0].mxu0
        %4082 = vmatprep.mubr.bf16.mxu0 0
        %4083 = vmatmul.mubr.bf16.gmra.mrb[0].mxu0 %v3922
        %v4084 = vpop.f32.mrb[0].mxu0
        %v4085 = vadd.f32 %v3848, %v4084
        %v4086 = vpop.f32.mrb[0].mxu0
        %v4087 = vpop.f32.mrb[0].mxu0
        %v4088 = vadd.f32 %v3851, %v4087
        %v4089 = vpop.f32.mrb[0].mxu0
        %4090 = vmatprep.mubr.bf16.mxu0 0
        %4091 = vmatmul.mubr.bf16.gmra.mrb[0].mxu0 %v3925
        %v4092 = vpop.f32.mrb[0].mxu0
        %v4093 = vadd.f32 %v3856, %v4092
        %v4094 = vpop.f32.mrb[0].mxu0
        %v4095 = vpop.f32.mrb[0].mxu0
        %v4096 = vadd.f32 %v3859, %v4095
        %v4097 = vpop.f32.mrb[0].mxu0
        %4098 = vmatprep.mubr.bf16.mxu0 0
        %4099 = vmatmul.mubr.bf16.gmra.mrb[0].mxu0 %v3928
        %v4100 = vpop.f32.mrb[0].mxu0
        %v4101 = vadd.f32 %v3864, %v4100
        %v4102 = vpop.f32.mrb[0].mxu0
        %v4103 = vpop.f32.mrb[0].mxu0
        %v4104 = vadd.f32 %v3867, %v4103
        %v4105 = vpop.f32.mrb[0].mxu0
        %4106 = vdwg.mxu0
        %v4107 = vld [vmem:[#allocation20] sm:$0x1]
        %v4109 = vlaneseq
        %v4110 = vshrl.u32 %v4109, 7
        %v4111 = vsub.s32 0, %v4110
        %v4112 = vrot.slane %v4107, %v4111
        %v4114 = vadd.f32 %v3965, %v4112
        %v4115 = vadd.f32 %v3968, %v4112
        %v4116 = vadd.f32 %v3973, %v4112
        %v4117 = vadd.f32 %v3976, %v4112
        %v4118 = vadd.f32 %v3981, %v4112
        %v4119 = vadd.f32 %v3984, %v4112
        %v4120 = vadd.f32 %v3989, %v4112
        %v4121 = vadd.f32 %v3992, %v4112
        %v4122 = vadd.f32 %v3997, %v4112
        %v4123 = vadd.f32 %v4000, %v4112
        %v4124 = vadd.f32 %v4005, %v4112
        %v4125 = vadd.f32 %v4008, %v4112
        %v4126 = vadd.f32 %v4013, %v4112
        %v4127 = vadd.f32 %v4016, %v4112
        %v4128 = vadd.f32 %v4021, %v4112
        %v4129 = vadd.f32 %v4024, %v4112
        %v4130 = vadd.f32 %v4029, %v4112
        %v4131 = vadd.f32 %v4032, %v4112
        %v4132 = vadd.f32 %v4037, %v4112
        %v4133 = vadd.f32 %v4040, %v4112
        %v4134 = vadd.f32 %v4045, %v4112
        %v4135 = vadd.f32 %v4048, %v4112
        %v4136 = vadd.f32 %v4053, %v4112
        %v4137 = vadd.f32 %v4056, %v4112
        %v4138 = vadd.f32 %v4061, %v4112
        %v4139 = vadd.f32 %v4064, %v4112
        %v4140 = vadd.f32 %v4069, %v4112
        %v4141 = vadd.f32 %v4072, %v4112
        %v4142 = vadd.f32 %v4077, %v4112
        %v4143 = vadd.f32 %v4080, %v4112
        %v4144 = vadd.f32 %v4085, %v4112
        %v4145 = vadd.f32 %v4088, %v4112
        %v4146 = vadd.f32 %v4093, %v4112
        %v4147 = vadd.f32 %v4096, %v4112
        %v4148 = vadd.f32 %v4101, %v4112
        %v4149 = vadd.f32 %v4104, %v4112
        %v4150 = vpack.c.bf16 %v4115, %v4114
        %v4151 = vpack.c.bf16 %v4117, %v4116
        %v4152 = vpack.c.bf16 %v4119, %v4118
        %v4153 = vpack.c.bf16 %v4121, %v4120
        %v4154 = vpack.c.bf16 %v4123, %v4122
        %v4155 = vpack.c.bf16 %v4125, %v4124
        %v4156 = vpack.c.bf16 %v4127, %v4126
        %v4157 = vpack.c.bf16 %v4129, %v4128
        %v4158 = vpack.c.bf16 %v4131, %v4130
        %v4159 = vpack.c.bf16 %v4133, %v4132
        %v4160 = vpack.c.bf16 %v4135, %v4134
        %v4161 = vpack.c.bf16 %v4137, %v4136
        %v4162 = vpack.c.bf16 %v4139, %v4138
        %v4163 = vpack.c.bf16 %v4141, %v4140
        %v4164 = vpack.c.bf16 %v4143, %v4142
        %v4165 = vpack.c.bf16 %v4145, %v4144
        %v4166 = vpack.c.bf16 %v4147, %v4146
        %v4167 = vpack.c.bf16 %v4149, %v4148
        %v4186 = vunpack.c.l.b16 %v4150
        %v4187 = vunpack.c.h.b16 %v4150
        %v4188 = vunpack.c.l.b16 %v4151
        %v4189 = vunpack.c.h.b16 %v4151
        %v4190 = vunpack.c.l.b16 %v4152
        %v4191 = vunpack.c.h.b16 %v4152
        %v4192 = vunpack.c.l.b16 %v4153
        %v4193 = vunpack.c.h.b16 %v4153
        %v4194 = vunpack.c.l.b16 %v4154
        %v4195 = vunpack.c.h.b16 %v4154
        %v4196 = vunpack.c.l.b16 %v4155
        %v4197 = vunpack.c.h.b16 %v4155
        %v4198 = vunpack.c.l.b16 %v4156
        %v4199 = vunpack.c.h.b16 %v4156
        %v4200 = vunpack.c.l.b16 %v4157
        %v4201 = vunpack.c.h.b16 %v4157
        %v4202 = vunpack.c.l.b16 %v4158
        %v4203 = vunpack.c.h.b16 %v4158
        %v4204 = vunpack.c.l.b16 %v4159
        %v4205 = vunpack.c.h.b16 %v4159
        %v4206 = vunpack.c.l.b16 %v4160
        %v4207 = vunpack.c.h.b16 %v4160
        %v4208 = vunpack.c.l.b16 %v4161
        %v4209 = vunpack.c.h.b16 %v4161
        %v4210 = vunpack.c.l.b16 %v4162
        %v4211 = vunpack.c.h.b16 %v4162
        %v4212 = vunpack.c.l.b16 %v4163
        %v4213 = vunpack.c.h.b16 %v4163
        %v4214 = vunpack.c.l.b16 %v4164
        %v4215 = vunpack.c.h.b16 %v4164
        %v4216 = vunpack.c.l.b16 %v4165
        %v4217 = vunpack.c.h.b16 %v4165
        %v4218 = vunpack.c.l.b16 %v4166
        %v4219 = vunpack.c.h.b16 %v4166
        %v4220 = vunpack.c.l.b16 %v4167
        %v4221 = vunpack.c.h.b16 %v4167
        %v4222 = vpack.c.b16 %v4186, %v4186
        %v4223 = vpack.c.b16 %v4187, %v4187
        %v4224 = vpack.c.b16 %v4188, %v4188
        %v4225 = vpack.c.b16 %v4189, %v4189
        %v4226 = vpack.c.b16 %v4190, %v4190
        %v4227 = vpack.c.b16 %v4191, %v4191
        %v4228 = vpack.c.b16 %v4192, %v4192
        %v4229 = vpack.c.b16 %v4193, %v4193
        %v4230 = vpack.c.b16 %v4194, %v4194
        %v4231 = vpack.c.b16 %v4195, %v4195
        %v4232 = vpack.c.b16 %v4196, %v4196
        %v4233 = vpack.c.b16 %v4197, %v4197
        %v4234 = vpack.c.b16 %v4198, %v4198
        %v4235 = vpack.c.b16 %v4199, %v4199
        %v4236 = vpack.c.b16 %v4200, %v4200
        %v4237 = vpack.c.b16 %v4201, %v4201
        %v4238 = vpack.c.b16 %v4202, %v4202
        %v4239 = vpack.c.b16 %v4203, %v4203
        %v4240 = vpack.c.b16 %v4204, %v4204
        %v4241 = vpack.c.b16 %v4205, %v4205
        %v4242 = vpack.c.b16 %v4206, %v4206
        %v4243 = vpack.c.b16 %v4207, %v4207
        %v4244 = vpack.c.b16 %v4208, %v4208
        %v4245 = vpack.c.b16 %v4209, %v4209
        %v4246 = vpack.c.b16 %v4210, %v4210
        %v4247 = vpack.c.b16 %v4211, %v4211
        %v4248 = vpack.c.b16 %v4212, %v4212
        %v4249 = vpack.c.b16 %v4213, %v4213
        %v4250 = vpack.c.b16 %v4214, %v4214
        %v4251 = vpack.c.b16 %v4215, %v4215
        %v4252 = vpack.c.b16 %v4216, %v4216
        %v4253 = vpack.c.b16 %v4217, %v4217
        %v4254 = vpack.c.b16 %v4218, %v4218
        %v4255 = vpack.c.b16 %v4219, %v4219
        %v4256 = vpack.c.b16 %v4220, %v4220
        %v4257 = vpack.c.b16 %v4221, %v4221
        %vm4294 = vcmask 257024
        %4295 = vst.msk [vmem:[%s539] sm:$0xf] %vm4294, %v4222
        %4296 = vst.msk [vmem:[%s539 + $0x4] sm:$0xf] %vm4294, %v4223
        %4297 = vst.msk [vmem:[%s539 + $0x8] sm:$0xf] %vm4294, %v4224
        %4298 = vst.msk [vmem:[%s539 + $0xc] sm:$0xf] %vm4294, %v4225
        %4299 = vst.msk [vmem:[%s539 + $0x10] sm:$0xf] %vm4294, %v4226
        %4300 = vst.msk [vmem:[%s539 + $0x14] sm:$0xf] %vm4294, %v4227
        %4301 = vst.msk [vmem:[%s539 + $0x18] sm:$0xf] %vm4294, %v4228
        %4302 = vst.msk [vmem:[%s539 + $0x1c] sm:$0xf] %vm4294, %v4229
        %4303 = vst.msk [vmem:[%s539 + $0x20] sm:$0xf] %vm4294, %v4230
        %4304 = vst.msk [vmem:[%s539 + $0x24] sm:$0xf] %vm4294, %v4231
        %4305 = vst.msk [vmem:[%s539 + $0x28] sm:$0xf] %vm4294, %v4232
        %4306 = vst.msk [vmem:[%s539 + $0x2c] sm:$0xf] %vm4294, %v4233
        %4307 = vst.msk [vmem:[%s539 + $0x30] sm:$0xf] %vm4294, %v4234
        %4308 = vst.msk [vmem:[%s539 + $0x34] sm:$0xf] %vm4294, %v4235
        %4309 = vst.msk [vmem:[%s539 + $0x38] sm:$0xf] %vm4294, %v4236
        %4310 = vst.msk [vmem:[%s539 + $0x3c] sm:$0xf] %vm4294, %v4237
        %4311 = vst.msk [vmem:[%s539 + $0x40] sm:$0xf] %vm4294, %v4238
        %4312 = vst.msk [vmem:[%s539 + $0x44] sm:$0xf] %vm4294, %v4239
        %4313 = vst.msk [vmem:[%s539 + $0x48] sm:$0xf] %vm4294, %v4240
        %4314 = vst.msk [vmem:[%s539 + $0x4c] sm:$0xf] %vm4294, %v4241
        %4315 = vst.msk [vmem:[%s539 + $0x50] sm:$0xf] %vm4294, %v4242
        %4316 = vst.msk [vmem:[%s539 + $0x54] sm:$0xf] %vm4294, %v4243
        %4317 = vst.msk [vmem:[%s539 + $0x58] sm:$0xf] %vm4294, %v4244
        %4318 = vst.msk [vmem:[%s539 + $0x5c] sm:$0xf] %vm4294, %v4245
        %4319 = vst.msk [vmem:[%s539 + $0x60] sm:$0xf] %vm4294, %v4246
        %4320 = vst.msk [vmem:[%s539 + $0x64] sm:$0xf] %vm4294, %v4247
        %4321 = vst.msk [vmem:[%s539 + $0x68] sm:$0xf] %vm4294, %v4248
        %4322 = vst.msk [vmem:[%s539 + $0x6c] sm:$0xf] %vm4294, %v4249
        %4323 = vst.msk [vmem:[%s539 + $0x70] sm:$0xf] %vm4294, %v4250
        %4324 = vst.msk [vmem:[%s539 + $0x74] sm:$0xf] %vm4294, %v4251
        %4325 = vst.msk [vmem:[%s539 + $0x78] sm:$0xf] %vm4294, %v4252
        %4326 = vst.msk [vmem:[%s539 + $0x7c] sm:$0xf] %vm4294, %v4253
        %4327 = vst.msk [vmem:[%s539 + $0x80] sm:$0xf] %vm4294, %v4254
        %4328 = vst.msk [vmem:[%s539 + $0x84] sm:$0xf] %vm4294, %v4255
        %4329 = vst.msk [vmem:[%s539 + $0x88] sm:$0xf] %vm4294, %v4256
        %4330 = vst.msk [vmem:[%s539 + $0x8c] sm:$0xf] %vm4294, %v4257
        %s4331 = sand.u32 %s277, 1
        %s4332 = scalar_lea.sflag [#allocation5], %s4331
        %s4333 = sand.u32 %s277, 1
        %s4334 = smul.addr %s4333, 144
        %s4335 = scalar_lea.vmem [#allocation21], %s4334
        // Predicated region
        $region109: #{csp_residual_block.1} parent=63 // pred_check
          %p4336 = pneg %p287
        $region110: #{csp_residual_block.1} parent=63 // pred_check_branch
          %4338 = sbr.rel (%p4336) target = $region112
        $region111: #{csp_residual_block.1} parent=63 // pred_region
          %s4340 = ssub.s32 2304, 2304
          %4341 = vsyncadd %s4332, %s4340
          %s4342 = smul.addr %s33, 36
          %s4343 = smul.addr %s4342, 64
          %s4344 = scalar_lea.hbm %s11, %s4343
          %s4345 = sshll.u32 %s4335, 4
          %s4346 = int_to_ptr.vmem [resolvable:$true] %s4345
          %4351 = dma.vmem_to_hbm [thread:$0]  %s4346, 2304, %s4344, %s4332, 64, 64, 4
        $region112: #{csp_residual_block.1} parent=63 // pred_fallthru
          _
      $region64: #{csp_residual_block.1} parent=5 // pred_fallthru
        _
      %p4352 = scmp.le.s32.totalorder 2, %s28
      // Predicated region
      $region113: #{csp_residual_block.1} parent=5 // pred_check
        %p4353 = pneg %p4352
      $region114: #{csp_residual_block.1} parent=5 // pred_check_branch
        %4355 = sbr.rel (%p4353) target = $region116
      $region115: #{csp_residual_block.1} parent=5 // pred_region
        %s4356 = ssub.s32 %s28, 2
        // Predicated region
        $region117: #{csp_residual_block.1} parent=115 // pred_check
          %p4357 = pneg %p293
        $region118: #{csp_residual_block.1} parent=115 // pred_check_branch
          %4359 = sbr.rel (%p4357) target = $region120
        $region119: #{csp_residual_block.1} parent=115 // pred_region
          %s4360 = sand.u32 %s278, 1
          %s4361 = scalar_lea.sflag [#allocation5], %s4360
          %s4362 = sand.u32 %s278, 1
          %s4363 = smul.addr %s4362, 144
          %s4364 = scalar_lea.vmem [#allocation21], %s4363
          %4365 = dma.done %s4361, 2304
        $region120: #{csp_residual_block.1} parent=115 // pred_fallthru
          _
      $region116: #{csp_residual_block.1} parent=5 // pred_fallthru
        _
    $region6: #{csp_residual_block.1} parent=1 // loop_footer
      %s32 = sadd.s32 1, %s28
    $region7: #{csp_residual_block.1} parent=1 // loop_footer_branch
      %27 = sbr.rel target = $region3
    $region8: #{csp_residual_block.1} parent=1 // loop_exit
      _
    %4366 = vsyncpa [#allocation4], 1
    %s4367 = scalar_lea.sflag [#allocation4], 1
    %4368 = vsyncpa %s4367, 1
    %4369 = vsyncpa [#allocation7], 1
    %4370 = vsyncpa [#allocation10], 1
    %4371 = vsyncpa [#allocation13], 1
    %4372 = vsyncpa [#allocation16], 1
    %4373 = vsyncpa [#allocation19], 1
    %4374 = vsyncpa [#allocation5], 1
    %s4375 = scalar_lea.sflag [#allocation5], 1
    %4376 = vsyncpa %s4375, 1

</llo_original>
